<compile_context>
chip_gen: v7x
topology: tpu7x:2x2x1
jax: 0.10.0
libtpu: 0.0.40
codegen_flags: <defaults>
</compile_context>

<pallas_src>
import functools

import jax
import jax.numpy as jnp
from jax.experimental import pallas as pl
from jax.experimental.pallas import tpu as pltpu


# --------------------------------------------------------------------------
# Fused kernel: all LSTM layers + Linear(H->2H) -> ReLU -> Linear(2H->Op).
# Ref layout (positional):
#   [x2d, (wih_t, whh_t, bias) * num_layers, w1_t, b1, w2_t, b2, out]
# --------------------------------------------------------------------------
def make_net_kernel(num_layers, T, Bp, H):

    def kernel(*refs):
        x_ref = refs[0]
        pos = 1
        layers = []
        for _ in range(num_layers):
            layers.append((refs[pos], refs[pos + 1], refs[pos + 2]))
            pos += 3
        w1_ref, b1_ref, w2_ref, b2_ref, o_ref = refs[pos:pos + 5]

        # Lane mask, built ONCE and reused by every cell update (JAX does not
        # CSE broadcasts).  PyTorch gate order is (i, f, g, o); the 'g' block
        # (lanes [2H, 3H)) uses tanh, the rest sigmoid.
        lane = jax.lax.broadcasted_iota(jnp.int32, (Bp, 4 * H), 1)
        is_g = jnp.logical_and(lane >= 2 * H, lane < 3 * H)

        def lstm_cell(gates, c):
            # sigmoid(x) = 0.5 * (1 + tanh(x / 2)) -> ONE wide tanh pass over
            # the whole (Bp, 4H) gates vreg instead of tanh + sigmoid; the
            # pre-scale and affine correction of the non-g lanes are cheap
            # VPU selects off the EUP slot.
            pre = jnp.where(is_g, gates, 0.5 * gates)
            y = jnp.tanh(pre)
            act = jnp.where(is_g, y, 0.5 * y + 0.5)
            # TODO(synk): with H a multiple of 128 these per-gate slices are
            # vreg-aligned; at H=32 they are small lane extracts.
            i_g = act[:, 0 * H:1 * H]
            f_g = act[:, 1 * H:2 * H]
            g_g = act[:, 2 * H:3 * H]
            o_g = act[:, 3 * H:4 * H]
            c_new = f_g * c + i_g * g_g
            h_new = o_g * jnp.tanh(c_new)
            return h_new, c_new

        # Weights loaded into VMEM-resident values once.
        wih = [layers[l][0][...] for l in range(num_layers)]   # (Din, 4H)
        whh = [layers[l][1][...] for l in range(num_layers)]   # (H, 4H)
        bias = [layers[l][2][...] for l in range(num_layers)]  # (1, 4H)

        # Layer 0: input projection hoisted out of the recurrence — one
        # (T*Bp, I) x (I, 4H) MXU matmul over ALL timesteps.
        gx0 = jnp.dot(x_ref[...], wih[0],
                      preferred_element_type=jnp.float32) + bias[0]

        h = [jnp.zeros((Bp, H), jnp.float32) for _ in range(num_layers)]
        c = [jnp.zeros((Bp, H), jnp.float32) for _ in range(num_layers)]

        # Wavefront: layer l at time t depends only on layer l-1 at the SAME
        # t (per-step projection for l > 0) and on its own state at t-1, so
        # the dependent chain is T + num_layers - 1 cell updates, not
        # T * num_layers.  Statement order inside this single unrolled block
        # is irrelevant — the scheduler overlaps the independent matmul /
        # tanh work across layers.
        # TODO(synk): at larger H, hold whh in the MXU weight registers across
        # the loop via pltpu.matmul_push_rhs/matmul_acc_lhs (marginal at
        # H=32, so plain jnp.dot is used here).
        # TODO(synk): for large T, switch this static unroll to
        # lax.fori_loop(..., unroll=k) with a VMEM scratch to bound live
        # ranges.
        for t in range(T):
            g0 = gx0[t * Bp:(t + 1) * Bp, :] + jnp.dot(
                h[0], whh[0], preferred_element_type=jnp.float32)
            h[0], c[0] = lstm_cell(g0, c[0])
            for l in range(1, num_layers):
                gl = (jnp.dot(h[l - 1], wih[l],
                              preferred_element_type=jnp.float32)
                      + jnp.dot(h[l], whh[l],
                                preferred_element_type=jnp.float32)
                      + bias[l])
                h[l], c[l] = lstm_cell(gl, c[l])

        # Head on the last timestep only (identical to head-then-[:, -1, :]).
        z = jnp.dot(h[num_layers - 1], w1_ref[...],
                    preferred_element_type=jnp.float32) + b1_ref[...]
        z = jnp.maximum(z, 0.0)
        o_ref[...] = jnp.dot(z, w2_ref[...],
                             preferred_element_type=jnp.float32) + b2_ref[...]

    return kernel


# --------------------------------------------------------------------------
# One-time layout plumbing (NOT per forward): transpose weights to (in, out),
# fold the two LSTM biases, and zero-pad the head output to 128 lanes so the
# kernel's final store is lane-dense.
# --------------------------------------------------------------------------
def prepare_params(params, lane=128):
    lstm = []
    for (w_ih, w_hh, b_ih, b_hh) in params["lstm"]:
        lstm.append((jnp.transpose(w_ih).astype(jnp.float32),          # (Din, 4H)
                     jnp.transpose(w_hh).astype(jnp.float32),          # (H, 4H)
                     (b_ih + b_hh).reshape(1, -1).astype(jnp.float32)))
    w2 = jnp.transpose(params["w2"]).astype(jnp.float32)               # (2H, O)
    b2 = params["b2"].reshape(1, -1).astype(jnp.float32)               # (1, O)
    O = w2.shape[1]
    Op = ((O + lane - 1) // lane) * lane
    return {
        "lstm": tuple(lstm),
        "w1": jnp.transpose(params["w1"]).astype(jnp.float32),         # (H, 2H)
        "b1": params["b1"].reshape(1, -1).astype(jnp.float32),
        "w2": jnp.pad(w2, ((0, 0), (0, Op - O))),                      # (2H, Op)
        "b2": jnp.pad(b2, ((0, 0), (0, Op - O))),                      # (1, Op)
    }


# --------------------------------------------------------------------------
# Full forward (mirrors Net.forward) — one pallas_call total.
# --------------------------------------------------------------------------
@functools.partial(jax.jit, static_argnames=("out_size",))
def net_forward(x_bti, prep, *, out_size):
    B, T, I = x_bti.shape
    H = prep["lstm"][0][1].shape[0]        # whh_t is (H, 4H)
    Op = prep["w2"].shape[1]
    num_layers = len(prep["lstm"])
    Bp = ((B + 7) // 8) * 8                # pad batch to a full sublane tile

    # Time-major flatten + batch pad so each timestep is an aligned (Bp, 4H)
    # row block inside the kernel.  Pure layout plumbing, fused into this jit.
    x = jnp.transpose(x_bti.astype(jnp.float32), (1, 0, 2))   # (T, B, I)
    x = jnp.pad(x, ((0, 0), (0, Bp - B), (0, 0)))             # (T, Bp, I)
    x2d = x.reshape(T * Bp, I)

    args = [x2d]
    for lw in prep["lstm"]:
        args.extend(lw)
    args.extend([prep["w1"], prep["b1"], prep["w2"], prep["b2"]])

    kernel = make_net_kernel(num_layers=num_layers, T=T, Bp=Bp, H=H)
    vmem_spec = pl.BlockSpec(memory_space=pltpu.MemorySpace.VMEM)
    out = pl.pallas_call(
        kernel,
        out_shape=jax.ShapeDtypeStruct((Bp, Op), jnp.float32),
        in_specs=[vmem_spec] * len(args),
        out_specs=vmem_spec,
        compiler_params=pltpu.CompilerParams(
            vmem_limit_bytes=64 * 1024 * 1024),
    )(*args)
    # TODO(synk): on v7x at non-toy B, give the call a batch grid axis with
    # dimension_semantics=("parallel",) so both TensorCores are used.
    return out[:B, :out_size]


# --------------------------------------------------------------------------
# Pure-JAX reference (for correctness checking)
# --------------------------------------------------------------------------
def net_forward_ref(x_bti, params, H):
    x = jnp.transpose(x_bti.astype(jnp.float32), (1, 0, 2))
    h = x
    for (w_ih, w_hh, b_ih, b_hh) in params["lstm"]:
        T, B, _ = h.shape

        def step(carry, x_t):
            hp, cp = carry
            gates = x_t @ w_ih.T + hp @ w_hh.T + b_ih + b_hh
            i = jax.nn.sigmoid(gates[:, :H])
            f = jax.nn.sigmoid(gates[:, H:2 * H])
            g = jnp.tanh(gates[:, 2 * H:3 * H])
            o = jax.nn.sigmoid(gates[:, 3 * H:4 * H])
            c = f * cp + i * g
            hn = o * jnp.tanh(c)
            return (hn, c), hn

        (_, _), ys = jax.lax.scan(
            step, (jnp.zeros((B, H)), jnp.zeros((B, H))), h)
        h = ys
    h_last = h[-1]
    z = jnp.maximum(h_last @ params["w1"].T + params["b1"], 0.0)
    return z @ params["w2"].T + params["b2"]


# --------------------------------------------------------------------------
# Deterministic parameter init (PyTorch-style uniform ranges)
# --------------------------------------------------------------------------
def init_params(key, input_size, hidden_size, num_layers, output_size):
    H = hidden_size
    k_lstm = 1.0 / jnp.sqrt(H)
    keys = jax.random.split(key, num_layers * 4 + 4)
    ki = iter(range(len(keys)))

    lstm = []
    for layer in range(num_layers):
        in_dim = input_size if layer == 0 else H
        w_ih = jax.random.uniform(keys[next(ki)], (4 * H, in_dim),
                                  minval=-k_lstm, maxval=k_lstm)
        w_hh = jax.random.uniform(keys[next(ki)], (4 * H, H),
                                  minval=-k_lstm, maxval=k_lstm)
        b_ih = jax.random.uniform(keys[next(ki)], (4 * H,),
                                  minval=-k_lstm, maxval=k_lstm)
        b_hh = jax.random.uniform(keys[next(ki)], (4 * H,),
                                  minval=-k_lstm, maxval=k_lstm)
        lstm.append((w_ih, w_hh, b_ih, b_hh))

    k1 = 1.0 / jnp.sqrt(H)
    w1 = jax.random.uniform(keys[next(ki)], (2 * H, H), minval=-k1, maxval=k1)
    b1 = jax.random.uniform(keys[next(ki)], (2 * H,), minval=-k1, maxval=k1)
    k2 = 1.0 / jnp.sqrt(2 * H)
    w2 = jax.random.uniform(keys[next(ki)], (output_size, 2 * H),
                            minval=-k2, maxval=k2)
    b2 = jax.random.uniform(keys[next(ki)], (output_size,),
                            minval=-k2, maxval=k2)
    return {"lstm": lstm, "w1": w1, "b1": b1, "w2": w2, "b2": b2}


if __name__ == "__main__":
    batch_size = 2
    seq_length = 8
    input_size = 4
    hidden_size = 32
    num_layers = 2
    output_size = 4

    key = jax.random.PRNGKey(0)
    k_x, k_p = jax.random.split(key)
    x = jax.random.normal(k_x, (batch_size, seq_length, input_size),
                          dtype=jnp.float32)
    params = init_params(k_p, input_size, hidden_size, num_layers, output_size)
    prep = prepare_params(params)          # layout plumbing: once, not per call

    out = net_forward(x, prep, out_size=output_size)
    out = jax.block_until_ready(out)

    ref = net_forward_ref(x, params, hidden_size)
    assert out.shape == (batch_size, output_size), out.shape
    assert jnp.allclose(out, ref, atol=1e-4, rtol=1e-4), (out, ref)

    print("KERNEL_OK")
</pallas_src>

<mosaic_0001>
module attributes {stable_mosaic.version = 11 : i64} {
  func.func @kernel(%arg0: memref<64x4xf32, #tpu.memory_space<vmem>>, %arg1: memref<4x128xf32, #tpu.memory_space<vmem>>, %arg2: memref<32x128xf32, #tpu.memory_space<vmem>>, %arg3: memref<1x128xf32, #tpu.memory_space<vmem>>, %arg4: memref<32x128xf32, #tpu.memory_space<vmem>>, %arg5: memref<32x128xf32, #tpu.memory_space<vmem>>, %arg6: memref<1x128xf32, #tpu.memory_space<vmem>>, %arg7: memref<32x64xf32, #tpu.memory_space<vmem>>, %arg8: memref<1x64xf32, #tpu.memory_space<vmem>>, %arg9: memref<64x128xf32, #tpu.memory_space<vmem>>, %arg10: memref<1x128xf32, #tpu.memory_space<vmem>>, %arg11: memref<8x128xf32, #tpu.memory_space<vmem>>) attributes {dimension_semantics = [], scalar_prefetch = 0 : i64, scratch_operands = 0 : i64, tpu.core_type = #tpu.core_type<tc>} {
    %0 = tpu.iota {dimensions = array<i32: 1>} : vector<8x128xi32>
    %c64_i32 = arith.constant 64 : i32
    %1 = vector.broadcast %c64_i32 : i32 to vector<8x128xi32>
    %2 = arith.cmpi sge, %0, %1 : vector<8x128xi32>
    %c96_i32 = arith.constant 96 : i32
    %3 = vector.broadcast %c96_i32 : i32 to vector<8x128xi32>
    %4 = arith.cmpi slt, %0, %3 : vector<8x128xi32>
    %5 = arith.andi %2, %4 : vector<8x128xi1>
    %c0 = arith.constant 0 : index
    %c0_0 = arith.constant 0 : index
    %6 = vector.load %arg1[%c0, %c0_0] : memref<4x128xf32, #tpu.memory_space<vmem>>, vector<4x128xf32>
    %c0_1 = arith.constant 0 : index
    %c0_2 = arith.constant 0 : index
    %7 = vector.load %arg4[%c0_1, %c0_2] : memref<32x128xf32, #tpu.memory_space<vmem>>, vector<32x128xf32>
    %c0_3 = arith.constant 0 : index
    %c0_4 = arith.constant 0 : index
    %8 = vector.load %arg2[%c0_3, %c0_4] : memref<32x128xf32, #tpu.memory_space<vmem>>, vector<32x128xf32>
    %c0_5 = arith.constant 0 : index
    %c0_6 = arith.constant 0 : index
    %9 = vector.load %arg5[%c0_5, %c0_6] : memref<32x128xf32, #tpu.memory_space<vmem>>, vector<32x128xf32>
    %c0_7 = arith.constant 0 : index
    %c0_8 = arith.constant 0 : index
    %10 = vector.load %arg3[%c0_7, %c0_8] : memref<1x128xf32, #tpu.memory_space<vmem>>, vector<1x128xf32>
    %c0_9 = arith.constant 0 : index
    %c0_10 = arith.constant 0 : index
    %11 = vector.load %arg6[%c0_9, %c0_10] : memref<1x128xf32, #tpu.memory_space<vmem>>, vector<1x128xf32>
    %c0_11 = arith.constant 0 : index
    %c0_12 = arith.constant 0 : index
    %12 = vector.load %arg0[%c0_11, %c0_12] : memref<64x4xf32, #tpu.memory_space<vmem>>, vector<64x4xf32>
    %cst = arith.constant dense<0.000000e+00> : vector<64x128xf32>
    %13 = tpu.matmul %12, %6, %cst {dimension_numbers = #tpu.dot_dimension_numbers<[1], [0], [0], [1], [0, 0, 1, 1], [], []>} : vector<64x4xf32>, vector<4x128xf32>, vector<64x128xf32> -> vector<64x128xf32>
    %14 = vector.broadcast %10 : vector<1x128xf32> to vector<64x128xf32>
    %15 = arith.addf %13, %14 : vector<64x128xf32>
    %cst_13 = arith.constant 0.000000e+00 : f32
    %16 = vector.broadcast %cst_13 : f32 to vector<8x32xf32>
    %cst_14 = arith.constant 0.000000e+00 : f32
    %17 = vector.broadcast %cst_14 : f32 to vector<8x32xf32>
    %cst_15 = arith.constant 0.000000e+00 : f32
    %18 = vector.broadcast %cst_15 : f32 to vector<8x32xf32>
    %cst_16 = arith.constant 0.000000e+00 : f32
    %19 = vector.broadcast %cst_16 : f32 to vector<8x32xf32>
    %20 = vector.extract_strided_slice %15 {offsets = [0, 0], sizes = [8, 128], strides = [1, 1]} : vector<64x128xf32> to vector<8x128xf32>
    %cst_17 = arith.constant dense<0.000000e+00> : vector<8x128xf32>
    %21 = tpu.matmul %16, %8, %cst_17 {dimension_numbers = #tpu.dot_dimension_numbers<[1], [0], [0], [1], [0, 0, 1, 1], [], []>} : vector<8x32xf32>, vector<32x128xf32>, vector<8x128xf32> -> vector<8x128xf32>
    %22 = arith.addf %20, %21 : vector<8x128xf32>
    %cst_18 = arith.constant 5.000000e-01 : f32
    %23 = vector.broadcast %cst_18 : f32 to vector<8x128xf32>
    %24 = arith.mulf %23, %22 : vector<8x128xf32>
    %25 = arith.select %5, %22, %24 : vector<8x128xi1>, vector<8x128xf32>
    %26 = math.tanh %25 : vector<8x128xf32>
    %cst_19 = arith.constant 5.000000e-01 : f32
    %27 = vector.broadcast %cst_19 : f32 to vector<8x128xf32>
    %28 = arith.mulf %27, %26 : vector<8x128xf32>
    %cst_20 = arith.constant 5.000000e-01 : f32
    %29 = vector.broadcast %cst_20 : f32 to vector<8x128xf32>
    %30 = arith.addf %28, %29 : vector<8x128xf32>
    %31 = arith.select %5, %26, %30 : vector<8x128xi1>, vector<8x128xf32>
    %32 = vector.extract_strided_slice %31 {offsets = [0, 0], sizes = [8, 32], strides = [1, 1]} : vector<8x128xf32> to vector<8x32xf32>
    %33 = vector.extract_strided_slice %31 {offsets = [0, 32], sizes = [8, 32], strides = [1, 1]} : vector<8x128xf32> to vector<8x32xf32>
    %34 = vector.extract_strided_slice %31 {offsets = [0, 64], sizes = [8, 32], strides = [1, 1]} : vector<8x128xf32> to vector<8x32xf32>
    %35 = vector.extract_strided_slice %31 {offsets = [0, 96], sizes = [8, 32], strides = [1, 1]} : vector<8x128xf32> to vector<8x32xf32>
    %36 = arith.mulf %33, %18 : vector<8x32xf32>
    %37 = arith.mulf %32, %34 : vector<8x32xf32>
    %38 = arith.addf %36, %37 : vector<8x32xf32>
    %39 = math.tanh %38 : vector<8x32xf32>
    %40 = arith.mulf %35, %39 : vector<8x32xf32>
    %cst_21 = arith.constant dense<0.000000e+00> : vector<8x128xf32>
    %41 = tpu.matmul %40, %7, %cst_21 {dimension_numbers = #tpu.dot_dimension_numbers<[1], [0], [0], [1], [0, 0, 1, 1], [], []>} : vector<8x32xf32>, vector<32x128xf32>, vector<8x128xf32> -> vector<8x128xf32>
    %cst_22 = arith.constant dense<0.000000e+00> : vector<8x128xf32>
    %42 = tpu.matmul %17, %9, %cst_22 {dimension_numbers = #tpu.dot_dimension_numbers<[1], [0], [0], [1], [0, 0, 1, 1], [], []>} : vector<8x32xf32>, vector<32x128xf32>, vector<8x128xf32> -> vector<8x128xf32>
    %43 = arith.addf %41, %42 : vector<8x128xf32>
    %44 = vector.broadcast %11 : vector<1x128xf32> to vector<8x128xf32>
    %45 = arith.addf %43, %44 : vector<8x128xf32>
    %cst_23 = arith.constant 5.000000e-01 : f32
    %46 = vector.broadcast %cst_23 : f32 to vector<8x128xf32>
    %47 = arith.mulf %46, %45 : vector<8x128xf32>
    %48 = arith.select %5, %45, %47 : vector<8x128xi1>, vector<8x128xf32>
    %49 = math.tanh %48 : vector<8x128xf32>
    %cst_24 = arith.constant 5.000000e-01 : f32
    %50 = vector.broadcast %cst_24 : f32 to vector<8x128xf32>
    %51 = arith.mulf %50, %49 : vector<8x128xf32>
    %cst_25 = arith.constant 5.000000e-01 : f32
    %52 = vector.broadcast %cst_25 : f32 to vector<8x128xf32>
    %53 = arith.addf %51, %52 : vector<8x128xf32>
    %54 = arith.select %5, %49, %53 : vector<8x128xi1>, vector<8x128xf32>
    %55 = vector.extract_strided_slice %54 {offsets = [0, 0], sizes = [8, 32], strides = [1, 1]} : vector<8x128xf32> to vector<8x32xf32>
    %56 = vector.extract_strided_slice %54 {offsets = [0, 32], sizes = [8, 32], strides = [1, 1]} : vector<8x128xf32> to vector<8x32xf32>
    %57 = vector.extract_strided_slice %54 {offsets = [0, 64], sizes = [8, 32], strides = [1, 1]} : vector<8x128xf32> to vector<8x32xf32>
    %58 = vector.extract_strided_slice %54 {offsets = [0, 96], sizes = [8, 32], strides = [1, 1]} : vector<8x128xf32> to vector<8x32xf32>
    %59 = arith.mulf %56, %19 : vector<8x32xf32>
    %60 = arith.mulf %55, %57 : vector<8x32xf32>
    %61 = arith.addf %59, %60 : vector<8x32xf32>
    %62 = math.tanh %61 : vector<8x32xf32>
    %63 = arith.mulf %58, %62 : vector<8x32xf32>
    %64 = vector.extract_strided_slice %15 {offsets = [8, 0], sizes = [8, 128], strides = [1, 1]} : vector<64x128xf32> to vector<8x128xf32>
    %cst_26 = arith.constant dense<0.000000e+00> : vector<8x128xf32>
    %65 = tpu.matmul %40, %8, %cst_26 {dimension_numbers = #tpu.dot_dimension_numbers<[1], [0], [0], [1], [0, 0, 1, 1], [], []>} : vector<8x32xf32>, vector<32x128xf32>, vector<8x128xf32> -> vector<8x128xf32>
    %66 = arith.addf %64, %65 : vector<8x128xf32>
    %cst_27 = arith.constant 5.000000e-01 : f32
    %67 = vector.broadcast %cst_27 : f32 to vector<8x128xf32>
    %68 = arith.mulf %67, %66 : vector<8x128xf32>
    %69 = arith.select %5, %66, %68 : vector<8x128xi1>, vector<8x128xf32>
    %70 = math.tanh %69 : vector<8x128xf32>
    %cst_28 = arith.constant 5.000000e-01 : f32
    %71 = vector.broadcast %cst_28 : f32 to vector<8x128xf32>
    %72 = arith.mulf %71, %70 : vector<8x128xf32>
    %cst_29 = arith.constant 5.000000e-01 : f32
    %73 = vector.broadcast %cst_29 : f32 to vector<8x128xf32>
    %74 = arith.addf %72, %73 : vector<8x128xf32>
    %75 = arith.select %5, %70, %74 : vector<8x128xi1>, vector<8x128xf32>
    %76 = vector.extract_strided_slice %75 {offsets = [0, 0], sizes = [8, 32], strides = [1, 1]} : vector<8x128xf32> to vector<8x32xf32>
    %77 = vector.extract_strided_slice %75 {offsets = [0, 32], sizes = [8, 32], strides = [1, 1]} : vector<8x128xf32> to vector<8x32xf32>
    %78 = vector.extract_strided_slice %75 {offsets = [0, 64], sizes = [8, 32], strides = [1, 1]} : vector<8x128xf32> to vector<8x32xf32>
    %79 = vector.extract_strided_slice %75 {offsets = [0, 96], sizes = [8, 32], strides = [1, 1]} : vector<8x128xf32> to vector<8x32xf32>
    %80 = arith.mulf %77, %38 : vector<8x32xf32>
    %81 = arith.mulf %76, %78 : vector<8x32xf32>
    %82 = arith.addf %80, %81 : vector<8x32xf32>
    %83 = math.tanh %82 : vector<8x32xf32>
    %84 = arith.mulf %79, %83 : vector<8x32xf32>
    %cst_30 = arith.constant dense<0.000000e+00> : vector<8x128xf32>
    %85 = tpu.matmul %84, %7, %cst_30 {dimension_numbers = #tpu.dot_dimension_numbers<[1], [0], [0], [1], [0, 0, 1, 1], [], []>} : vector<8x32xf32>, vector<32x128xf32>, vector<8x128xf32> -> vector<8x128xf32>
    %cst_31 = arith.constant dense<0.000000e+00> : vector<8x128xf32>
    %86 = tpu.matmul %63, %9, %cst_31 {dimension_numbers = #tpu.dot_dimension_numbers<[1], [0], [0], [1], [0, 0, 1, 1], [], []>} : vector<8x32xf32>, vector<32x128xf32>, vector<8x128xf32> -> vector<8x128xf32>
    %87 = arith.addf %85, %86 : vector<8x128xf32>
    %88 = vector.broadcast %11 : vector<1x128xf32> to vector<8x128xf32>
    %89 = arith.addf %87, %88 : vector<8x128xf32>
    %cst_32 = arith.constant 5.000000e-01 : f32
    %90 = vector.broadcast %cst_32 : f32 to vector<8x128xf32>
    %91 = arith.mulf %90, %89 : vector<8x128xf32>
    %92 = arith.select %5, %89, %91 : vector<8x128xi1>, vector<8x128xf32>
    %93 = math.tanh %92 : vector<8x128xf32>
    %cst_33 = arith.constant 5.000000e-01 : f32
    %94 = vector.broadcast %cst_33 : f32 to vector<8x128xf32>
    %95 = arith.mulf %94, %93 : vector<8x128xf32>
    %cst_34 = arith.constant 5.000000e-01 : f32
    %96 = vector.broadcast %cst_34 : f32 to vector<8x128xf32>
    %97 = arith.addf %95, %96 : vector<8x128xf32>
    %98 = arith.select %5, %93, %97 : vector<8x128xi1>, vector<8x128xf32>
    %99 = vector.extract_strided_slice %98 {offsets = [0, 0], sizes = [8, 32], strides = [1, 1]} : vector<8x128xf32> to vector<8x32xf32>
    %100 = vector.extract_strided_slice %98 {offsets = [0, 32], sizes = [8, 32], strides = [1, 1]} : vector<8x128xf32> to vector<8x32xf32>
    %101 = vector.extract_strided_slice %98 {offsets = [0, 64], sizes = [8, 32], strides = [1, 1]} : vector<8x128xf32> to vector<8x32xf32>
    %102 = vector.extract_strided_slice %98 {offsets = [0, 96], sizes = [8, 32], strides = [1, 1]} : vector<8x128xf32> to vector<8x32xf32>
    %103 = arith.mulf %100, %61 : vector<8x32xf32>
    %104 = arith.mulf %99, %101 : vector<8x32xf32>
    %105 = arith.addf %103, %104 : vector<8x32xf32>
    %106 = math.tanh %105 : vector<8x32xf32>
    %107 = arith.mulf %102, %106 : vector<8x32xf32>
    %108 = vector.extract_strided_slice %15 {offsets = [16, 0], sizes = [8, 128], strides = [1, 1]} : vector<64x128xf32> to vector<8x128xf32>
    %cst_35 = arith.constant dense<0.000000e+00> : vector<8x128xf32>
    %109 = tpu.matmul %84, %8, %cst_35 {dimension_numbers = #tpu.dot_dimension_numbers<[1], [0], [0], [1], [0, 0, 1, 1], [], []>} : vector<8x32xf32>, vector<32x128xf32>, vector<8x128xf32> -> vector<8x128xf32>
    %110 = arith.addf %108, %109 : vector<8x128xf32>
    %cst_36 = arith.constant 5.000000e-01 : f32
    %111 = vector.broadcast %cst_36 : f32 to vector<8x128xf32>
    %112 = arith.mulf %111, %110 : vector<8x128xf32>
    %113 = arith.select %5, %110, %112 : vector<8x128xi1>, vector<8x128xf32>
    %114 = math.tanh %113 : vector<8x128xf32>
    %cst_37 = arith.constant 5.000000e-01 : f32
    %115 = vector.broadcast %cst_37 : f32 to vector<8x128xf32>
    %116 = arith.mulf %115, %114 : vector<8x128xf32>
    %cst_38 = arith.constant 5.000000e-01 : f32
    %117 = vector.broadcast %cst_38 : f32 to vector<8x128xf32>
    %118 = arith.addf %116, %117 : vector<8x128xf32>
    %119 = arith.select %5, %114, %118 : vector<8x128xi1>, vector<8x128xf32>
    %120 = vector.extract_strided_slice %119 {offsets = [0, 0], sizes = [8, 32], strides = [1, 1]} : vector<8x128xf32> to vector<8x32xf32>
    %121 = vector.extract_strided_slice %119 {offsets = [0, 32], sizes = [8, 32], strides = [1, 1]} : vector<8x128xf32> to vector<8x32xf32>
    %122 = vector.extract_strided_slice %119 {offsets = [0, 64], sizes = [8, 32], strides = [1, 1]} : vector<8x128xf32> to vector<8x32xf32>
    %123 = vector.extract_strided_slice %119 {offsets = [0, 96], sizes = [8, 32], strides = [1, 1]} : vector<8x128xf32> to vector<8x32xf32>
    %124 = arith.mulf %121, %82 : vector<8x32xf32>
    %125 = arith.mulf %120, %122 : vector<8x32xf32>
    %126 = arith.addf %124, %125 : vector<8x32xf32>
    %127 = math.tanh %126 : vector<8x32xf32>
    %128 = arith.mulf %123, %127 : vector<8x32xf32>
    %cst_39 = arith.constant dense<0.000000e+00> : vector<8x128xf32>
    %129 = tpu.matmul %128, %7, %cst_39 {dimension_numbers = #tpu.dot_dimension_numbers<[1], [0], [0], [1], [0, 0, 1, 1], [], []>} : vector<8x32xf32>, vector<32x128xf32>, vector<8x128xf32> -> vector<8x128xf32>
    %cst_40 = arith.constant dense<0.000000e+00> : vector<8x128xf32>
    %130 = tpu.matmul %107, %9, %cst_40 {dimension_numbers = #tpu.dot_dimension_numbers<[1], [0], [0], [1], [0, 0, 1, 1], [], []>} : vector<8x32xf32>, vector<32x128xf32>, vector<8x128xf32> -> vector<8x128xf32>
    %131 = arith.addf %129, %130 : vector<8x128xf32>
    %132 = vector.broadcast %11 : vector<1x128xf32> to vector<8x128xf32>
    %133 = arith.addf %131, %132 : vector<8x128xf32>
    %cst_41 = arith.constant 5.000000e-01 : f32
    %134 = vector.broadcast %cst_41 : f32 to vector<8x128xf32>
    %135 = arith.mulf %134, %133 : vector<8x128xf32>
    %136 = arith.select %5, %133, %135 : vector<8x128xi1>, vector<8x128xf32>
    %137 = math.tanh %136 : vector<8x128xf32>
    %cst_42 = arith.constant 5.000000e-01 : f32
    %138 = vector.broadcast %cst_42 : f32 to vector<8x128xf32>
    %139 = arith.mulf %138, %137 : vector<8x128xf32>
    %cst_43 = arith.constant 5.000000e-01 : f32
    %140 = vector.broadcast %cst_43 : f32 to vector<8x128xf32>
    %141 = arith.addf %139, %140 : vector<8x128xf32>
    %142 = arith.select %5, %137, %141 : vector<8x128xi1>, vector<8x128xf32>
    %143 = vector.extract_strided_slice %142 {offsets = [0, 0], sizes = [8, 32], strides = [1, 1]} : vector<8x128xf32> to vector<8x32xf32>
    %144 = vector.extract_strided_slice %142 {offsets = [0, 32], sizes = [8, 32], strides = [1, 1]} : vector<8x128xf32> to vector<8x32xf32>
    %145 = vector.extract_strided_slice %142 {offsets = [0, 64], sizes = [8, 32], strides = [1, 1]} : vector<8x128xf32> to vector<8x32xf32>
    %146 = vector.extract_strided_slice %142 {offsets = [0, 96], sizes = [8, 32], strides = [1, 1]} : vector<8x128xf32> to vector<8x32xf32>
    %147 = arith.mulf %144, %105 : vector<8x32xf32>
    %148 = arith.mulf %143, %145 : vector<8x32xf32>
    %149 = arith.addf %147, %148 : vector<8x32xf32>
    %150 = math.tanh %149 : vector<8x32xf32>
    %151 = arith.mulf %146, %150 : vector<8x32xf32>
    %152 = vector.extract_strided_slice %15 {offsets = [24, 0], sizes = [8, 128], strides = [1, 1]} : vector<64x128xf32> to vector<8x128xf32>
    %cst_44 = arith.constant dense<0.000000e+00> : vector<8x128xf32>
    %153 = tpu.matmul %128, %8, %cst_44 {dimension_numbers = #tpu.dot_dimension_numbers<[1], [0], [0], [1], [0, 0, 1, 1], [], []>} : vector<8x32xf32>, vector<32x128xf32>, vector<8x128xf32> -> vector<8x128xf32>
    %154 = arith.addf %152, %153 : vector<8x128xf32>
    %cst_45 = arith.constant 5.000000e-01 : f32
    %155 = vector.broadcast %cst_45 : f32 to vector<8x128xf32>
    %156 = arith.mulf %155, %154 : vector<8x128xf32>
    %157 = arith.select %5, %154, %156 : vector<8x128xi1>, vector<8x128xf32>
    %158 = math.tanh %157 : vector<8x128xf32>
    %cst_46 = arith.constant 5.000000e-01 : f32
    %159 = vector.broadcast %cst_46 : f32 to vector<8x128xf32>
    %160 = arith.mulf %159, %158 : vector<8x128xf32>
    %cst_47 = arith.constant 5.000000e-01 : f32
    %161 = vector.broadcast %cst_47 : f32 to vector<8x128xf32>
    %162 = arith.addf %160, %161 : vector<8x128xf32>
    %163 = arith.select %5, %158, %162 : vector<8x128xi1>, vector<8x128xf32>
    %164 = vector.extract_strided_slice %163 {offsets = [0, 0], sizes = [8, 32], strides = [1, 1]} : vector<8x128xf32> to vector<8x32xf32>
    %165 = vector.extract_strided_slice %163 {offsets = [0, 32], sizes = [8, 32], strides = [1, 1]} : vector<8x128xf32> to vector<8x32xf32>
    %166 = vector.extract_strided_slice %163 {offsets = [0, 64], sizes = [8, 32], strides = [1, 1]} : vector<8x128xf32> to vector<8x32xf32>
    %167 = vector.extract_strided_slice %163 {offsets = [0, 96], sizes = [8, 32], strides = [1, 1]} : vector<8x128xf32> to vector<8x32xf32>
    %168 = arith.mulf %165, %126 : vector<8x32xf32>
    %169 = arith.mulf %164, %166 : vector<8x32xf32>
    %170 = arith.addf %168, %169 : vector<8x32xf32>
    %171 = math.tanh %170 : vector<8x32xf32>
    %172 = arith.mulf %167, %171 : vector<8x32xf32>
    %cst_48 = arith.constant dense<0.000000e+00> : vector<8x128xf32>
    %173 = tpu.matmul %172, %7, %cst_48 {dimension_numbers = #tpu.dot_dimension_numbers<[1], [0], [0], [1], [0, 0, 1, 1], [], []>} : vector<8x32xf32>, vector<32x128xf32>, vector<8x128xf32> -> vector<8x128xf32>
    %cst_49 = arith.constant dense<0.000000e+00> : vector<8x128xf32>
    %174 = tpu.matmul %151, %9, %cst_49 {dimension_numbers = #tpu.dot_dimension_numbers<[1], [0], [0], [1], [0, 0, 1, 1], [], []>} : vector<8x32xf32>, vector<32x128xf32>, vector<8x128xf32> -> vector<8x128xf32>
    %175 = arith.addf %173, %174 : vector<8x128xf32>
    %176 = vector.broadcast %11 : vector<1x128xf32> to vector<8x128xf32>
    %177 = arith.addf %175, %176 : vector<8x128xf32>
    %cst_50 = arith.constant 5.000000e-01 : f32
    %178 = vector.broadcast %cst_50 : f32 to vector<8x128xf32>
    %179 = arith.mulf %178, %177 : vector<8x128xf32>
    %180 = arith.select %5, %177, %179 : vector<8x128xi1>, vector<8x128xf32>
    %181 = math.tanh %180 : vector<8x128xf32>
    %cst_51 = arith.constant 5.000000e-01 : f32
    %182 = vector.broadcast %cst_51 : f32 to vector<8x128xf32>
    %183 = arith.mulf %182, %181 : vector<8x128xf32>
    %cst_52 = arith.constant 5.000000e-01 : f32
    %184 = vector.broadcast %cst_52 : f32 to vector<8x128xf32>
    %185 = arith.addf %183, %184 : vector<8x128xf32>
    %186 = arith.select %5, %181, %185 : vector<8x128xi1>, vector<8x128xf32>
    %187 = vector.extract_strided_slice %186 {offsets = [0, 0], sizes = [8, 32], strides = [1, 1]} : vector<8x128xf32> to vector<8x32xf32>
    %188 = vector.extract_strided_slice %186 {offsets = [0, 32], sizes = [8, 32], strides = [1, 1]} : vector<8x128xf32> to vector<8x32xf32>
    %189 = vector.extract_strided_slice %186 {offsets = [0, 64], sizes = [8, 32], strides = [1, 1]} : vector<8x128xf32> to vector<8x32xf32>
    %190 = vector.extract_strided_slice %186 {offsets = [0, 96], sizes = [8, 32], strides = [1, 1]} : vector<8x128xf32> to vector<8x32xf32>
    %191 = arith.mulf %188, %149 : vector<8x32xf32>
    %192 = arith.mulf %187, %189 : vector<8x32xf32>
    %193 = arith.addf %191, %192 : vector<8x32xf32>
    %194 = math.tanh %193 : vector<8x32xf32>
    %195 = arith.mulf %190, %194 : vector<8x32xf32>
    %196 = vector.extract_strided_slice %15 {offsets = [32, 0], sizes = [8, 128], strides = [1, 1]} : vector<64x128xf32> to vector<8x128xf32>
    %cst_53 = arith.constant dense<0.000000e+00> : vector<8x128xf32>
    %197 = tpu.matmul %172, %8, %cst_53 {dimension_numbers = #tpu.dot_dimension_numbers<[1], [0], [0], [1], [0, 0, 1, 1], [], []>} : vector<8x32xf32>, vector<32x128xf32>, vector<8x128xf32> -> vector<8x128xf32>
    %198 = arith.addf %196, %197 : vector<8x128xf32>
    %cst_54 = arith.constant 5.000000e-01 : f32
    %199 = vector.broadcast %cst_54 : f32 to vector<8x128xf32>
    %200 = arith.mulf %199, %198 : vector<8x128xf32>
    %201 = arith.select %5, %198, %200 : vector<8x128xi1>, vector<8x128xf32>
    %202 = math.tanh %201 : vector<8x128xf32>
    %cst_55 = arith.constant 5.000000e-01 : f32
    %203 = vector.broadcast %cst_55 : f32 to vector<8x128xf32>
    %204 = arith.mulf %203, %202 : vector<8x128xf32>
    %cst_56 = arith.constant 5.000000e-01 : f32
    %205 = vector.broadcast %cst_56 : f32 to vector<8x128xf32>
    %206 = arith.addf %204, %205 : vector<8x128xf32>
    %207 = arith.select %5, %202, %206 : vector<8x128xi1>, vector<8x128xf32>
    %208 = vector.extract_strided_slice %207 {offsets = [0, 0], sizes = [8, 32], strides = [1, 1]} : vector<8x128xf32> to vector<8x32xf32>
    %209 = vector.extract_strided_slice %207 {offsets = [0, 32], sizes = [8, 32], strides = [1, 1]} : vector<8x128xf32> to vector<8x32xf32>
    %210 = vector.extract_strided_slice %207 {offsets = [0, 64], sizes = [8, 32], strides = [1, 1]} : vector<8x128xf32> to vector<8x32xf32>
    %211 = vector.extract_strided_slice %207 {offsets = [0, 96], sizes = [8, 32], strides = [1, 1]} : vector<8x128xf32> to vector<8x32xf32>
    %212 = arith.mulf %209, %170 : vector<8x32xf32>
    %213 = arith.mulf %208, %210 : vector<8x32xf32>
    %214 = arith.addf %212, %213 : vector<8x32xf32>
    %215 = math.tanh %214 : vector<8x32xf32>
    %216 = arith.mulf %211, %215 : vector<8x32xf32>
    %cst_57 = arith.constant dense<0.000000e+00> : vector<8x128xf32>
    %217 = tpu.matmul %216, %7, %cst_57 {dimension_numbers = #tpu.dot_dimension_numbers<[1], [0], [0], [1], [0, 0, 1, 1], [], []>} : vector<8x32xf32>, vector<32x128xf32>, vector<8x128xf32> -> vector<8x128xf32>
    %cst_58 = arith.constant dense<0.000000e+00> : vector<8x128xf32>
    %218 = tpu.matmul %195, %9, %cst_58 {dimension_numbers = #tpu.dot_dimension_numbers<[1], [0], [0], [1], [0, 0, 1, 1], [], []>} : vector<8x32xf32>, vector<32x128xf32>, vector<8x128xf32> -> vector<8x128xf32>
    %219 = arith.addf %217, %218 : vector<8x128xf32>
    %220 = vector.broadcast %11 : vector<1x128xf32> to vector<8x128xf32>
    %221 = arith.addf %219, %220 : vector<8x128xf32>
    %cst_59 = arith.constant 5.000000e-01 : f32
    %222 = vector.broadcast %cst_59 : f32 to vector<8x128xf32>
    %223 = arith.mulf %222, %221 : vector<8x128xf32>
    %224 = arith.select %5, %221, %223 : vector<8x128xi1>, vector<8x128xf32>
    %225 = math.tanh %224 : vector<8x128xf32>
    %cst_60 = arith.constant 5.000000e-01 : f32
    %226 = vector.broadcast %cst_60 : f32 to vector<8x128xf32>
    %227 = arith.mulf %226, %225 : vector<8x128xf32>
    %cst_61 = arith.constant 5.000000e-01 : f32
    %228 = vector.broadcast %cst_61 : f32 to vector<8x128xf32>
    %229 = arith.addf %227, %228 : vector<8x128xf32>
    %230 = arith.select %5, %225, %229 : vector<8x128xi1>, vector<8x128xf32>
    %231 = vector.extract_strided_slice %230 {offsets = [0, 0], sizes = [8, 32], strides = [1, 1]} : vector<8x128xf32> to vector<8x32xf32>
    %232 = vector.extract_strided_slice %230 {offsets = [0, 32], sizes = [8, 32], strides = [1, 1]} : vector<8x128xf32> to vector<8x32xf32>
    %233 = vector.extract_strided_slice %230 {offsets = [0, 64], sizes = [8, 32], strides = [1, 1]} : vector<8x128xf32> to vector<8x32xf32>
    %234 = vector.extract_strided_slice %230 {offsets = [0, 96], sizes = [8, 32], strides = [1, 1]} : vector<8x128xf32> to vector<8x32xf32>
    %235 = arith.mulf %232, %193 : vector<8x32xf32>
    %236 = arith.mulf %231, %233 : vector<8x32xf32>
    %237 = arith.addf %235, %236 : vector<8x32xf32>
    %238 = math.tanh %237 : vector<8x32xf32>
    %239 = arith.mulf %234, %238 : vector<8x32xf32>
    %240 = vector.extract_strided_slice %15 {offsets = [40, 0], sizes = [8, 128], strides = [1, 1]} : vector<64x128xf32> to vector<8x128xf32>
    %cst_62 = arith.constant dense<0.000000e+00> : vector<8x128xf32>
    %241 = tpu.matmul %216, %8, %cst_62 {dimension_numbers = #tpu.dot_dimension_numbers<[1], [0], [0], [1], [0, 0, 1, 1], [], []>} : vector<8x32xf32>, vector<32x128xf32>, vector<8x128xf32> -> vector<8x128xf32>
    %242 = arith.addf %240, %241 : vector<8x128xf32>
    %cst_63 = arith.constant 5.000000e-01 : f32
    %243 = vector.broadcast %cst_63 : f32 to vector<8x128xf32>
    %244 = arith.mulf %243, %242 : vector<8x128xf32>
    %245 = arith.select %5, %242, %244 : vector<8x128xi1>, vector<8x128xf32>
    %246 = math.tanh %245 : vector<8x128xf32>
    %cst_64 = arith.constant 5.000000e-01 : f32
    %247 = vector.broadcast %cst_64 : f32 to vector<8x128xf32>
    %248 = arith.mulf %247, %246 : vector<8x128xf32>
    %cst_65 = arith.constant 5.000000e-01 : f32
    %249 = vector.broadcast %cst_65 : f32 to vector<8x128xf32>
    %250 = arith.addf %248, %249 : vector<8x128xf32>
    %251 = arith.select %5, %246, %250 : vector<8x128xi1>, vector<8x128xf32>
    %252 = vector.extract_strided_slice %251 {offsets = [0, 0], sizes = [8, 32], strides = [1, 1]} : vector<8x128xf32> to vector<8x32xf32>
    %253 = vector.extract_strided_slice %251 {offsets = [0, 32], sizes = [8, 32], strides = [1, 1]} : vector<8x128xf32> to vector<8x32xf32>
    %254 = vector.extract_strided_slice %251 {offsets = [0, 64], sizes = [8, 32], strides = [1, 1]} : vector<8x128xf32> to vector<8x32xf32>
    %255 = vector.extract_strided_slice %251 {offsets = [0, 96], sizes = [8, 32], strides = [1, 1]} : vector<8x128xf32> to vector<8x32xf32>
    %256 = arith.mulf %253, %214 : vector<8x32xf32>
    %257 = arith.mulf %252, %254 : vector<8x32xf32>
    %258 = arith.addf %256, %257 : vector<8x32xf32>
    %259 = math.tanh %258 : vector<8x32xf32>
    %260 = arith.mulf %255, %259 : vector<8x32xf32>
    %cst_66 = arith.constant dense<0.000000e+00> : vector<8x128xf32>
    %261 = tpu.matmul %260, %7, %cst_66 {dimension_numbers = #tpu.dot_dimension_numbers<[1], [0], [0], [1], [0, 0, 1, 1], [], []>} : vector<8x32xf32>, vector<32x128xf32>, vector<8x128xf32> -> vector<8x128xf32>
    %cst_67 = arith.constant dense<0.000000e+00> : vector<8x128xf32>
    %262 = tpu.matmul %239, %9, %cst_67 {dimension_numbers = #tpu.dot_dimension_numbers<[1], [0], [0], [1], [0, 0, 1, 1], [], []>} : vector<8x32xf32>, vector<32x128xf32>, vector<8x128xf32> -> vector<8x128xf32>
    %263 = arith.addf %261, %262 : vector<8x128xf32>
    %264 = vector.broadcast %11 : vector<1x128xf32> to vector<8x128xf32>
    %265 = arith.addf %263, %264 : vector<8x128xf32>
    %cst_68 = arith.constant 5.000000e-01 : f32
    %266 = vector.broadcast %cst_68 : f32 to vector<8x128xf32>
    %267 = arith.mulf %266, %265 : vector<8x128xf32>
    %268 = arith.select %5, %265, %267 : vector<8x128xi1>, vector<8x128xf32>
    %269 = math.tanh %268 : vector<8x128xf32>
    %cst_69 = arith.constant 5.000000e-01 : f32
    %270 = vector.broadcast %cst_69 : f32 to vector<8x128xf32>
    %271 = arith.mulf %270, %269 : vector<8x128xf32>
    %cst_70 = arith.constant 5.000000e-01 : f32
    %272 = vector.broadcast %cst_70 : f32 to vector<8x128xf32>
    %273 = arith.addf %271, %272 : vector<8x128xf32>
    %274 = arith.select %5, %269, %273 : vector<8x128xi1>, vector<8x128xf32>
    %275 = vector.extract_strided_slice %274 {offsets = [0, 0], sizes = [8, 32], strides = [1, 1]} : vector<8x128xf32> to vector<8x32xf32>
    %276 = vector.extract_strided_slice %274 {offsets = [0, 32], sizes = [8, 32], strides = [1, 1]} : vector<8x128xf32> to vector<8x32xf32>
    %277 = vector.extract_strided_slice %274 {offsets = [0, 64], sizes = [8, 32], strides = [1, 1]} : vector<8x128xf32> to vector<8x32xf32>
    %278 = vector.extract_strided_slice %274 {offsets = [0, 96], sizes = [8, 32], strides = [1, 1]} : vector<8x128xf32> to vector<8x32xf32>
    %279 = arith.mulf %276, %237 : vector<8x32xf32>
    %280 = arith.mulf %275, %277 : vector<8x32xf32>
    %281 = arith.addf %279, %280 : vector<8x32xf32>
    %282 = math.tanh %281 : vector<8x32xf32>
    %283 = arith.mulf %278, %282 : vector<8x32xf32>
    %284 = vector.extract_strided_slice %15 {offsets = [48, 0], sizes = [8, 128], strides = [1, 1]} : vector<64x128xf32> to vector<8x128xf32>
    %cst_71 = arith.constant dense<0.000000e+00> : vector<8x128xf32>
    %285 = tpu.matmul %260, %8, %cst_71 {dimension_numbers = #tpu.dot_dimension_numbers<[1], [0], [0], [1], [0, 0, 1, 1], [], []>} : vector<8x32xf32>, vector<32x128xf32>, vector<8x128xf32> -> vector<8x128xf32>
    %286 = arith.addf %284, %285 : vector<8x128xf32>
    %cst_72 = arith.constant 5.000000e-01 : f32
    %287 = vector.broadcast %cst_72 : f32 to vector<8x128xf32>
    %288 = arith.mulf %287, %286 : vector<8x128xf32>
    %289 = arith.select %5, %286, %288 : vector<8x128xi1>, vector<8x128xf32>
    %290 = math.tanh %289 : vector<8x128xf32>
    %cst_73 = arith.constant 5.000000e-01 : f32
    %291 = vector.broadcast %cst_73 : f32 to vector<8x128xf32>
    %292 = arith.mulf %291, %290 : vector<8x128xf32>
    %cst_74 = arith.constant 5.000000e-01 : f32
    %293 = vector.broadcast %cst_74 : f32 to vector<8x128xf32>
    %294 = arith.addf %292, %293 : vector<8x128xf32>
    %295 = arith.select %5, %290, %294 : vector<8x128xi1>, vector<8x128xf32>
    %296 = vector.extract_strided_slice %295 {offsets = [0, 0], sizes = [8, 32], strides = [1, 1]} : vector<8x128xf32> to vector<8x32xf32>
    %297 = vector.extract_strided_slice %295 {offsets = [0, 32], sizes = [8, 32], strides = [1, 1]} : vector<8x128xf32> to vector<8x32xf32>
    %298 = vector.extract_strided_slice %295 {offsets = [0, 64], sizes = [8, 32], strides = [1, 1]} : vector<8x128xf32> to vector<8x32xf32>
    %299 = vector.extract_strided_slice %295 {offsets = [0, 96], sizes = [8, 32], strides = [1, 1]} : vector<8x128xf32> to vector<8x32xf32>
    %300 = arith.mulf %297, %258 : vector<8x32xf32>
    %301 = arith.mulf %296, %298 : vector<8x32xf32>
    %302 = arith.addf %300, %301 : vector<8x32xf32>
    %303 = math.tanh %302 : vector<8x32xf32>
    %304 = arith.mulf %299, %303 : vector<8x32xf32>
    %cst_75 = arith.constant dense<0.000000e+00> : vector<8x128xf32>
    %305 = tpu.matmul %304, %7, %cst_75 {dimension_numbers = #tpu.dot_dimension_numbers<[1], [0], [0], [1], [0, 0, 1, 1], [], []>} : vector<8x32xf32>, vector<32x128xf32>, vector<8x128xf32> -> vector<8x128xf32>
    %cst_76 = arith.constant dense<0.000000e+00> : vector<8x128xf32>
    %306 = tpu.matmul %283, %9, %cst_76 {dimension_numbers = #tpu.dot_dimension_numbers<[1], [0], [0], [1], [0, 0, 1, 1], [], []>} : vector<8x32xf32>, vector<32x128xf32>, vector<8x128xf32> -> vector<8x128xf32>
    %307 = arith.addf %305, %306 : vector<8x128xf32>
    %308 = vector.broadcast %11 : vector<1x128xf32> to vector<8x128xf32>
    %309 = arith.addf %307, %308 : vector<8x128xf32>
    %cst_77 = arith.constant 5.000000e-01 : f32
    %310 = vector.broadcast %cst_77 : f32 to vector<8x128xf32>
    %311 = arith.mulf %310, %309 : vector<8x128xf32>
    %312 = arith.select %5, %309, %311 : vector<8x128xi1>, vector<8x128xf32>
    %313 = math.tanh %312 : vector<8x128xf32>
    %cst_78 = arith.constant 5.000000e-01 : f32
    %314 = vector.broadcast %cst_78 : f32 to vector<8x128xf32>
    %315 = arith.mulf %314, %313 : vector<8x128xf32>
    %cst_79 = arith.constant 5.000000e-01 : f32
    %316 = vector.broadcast %cst_79 : f32 to vector<8x128xf32>
    %317 = arith.addf %315, %316 : vector<8x128xf32>
    %318 = arith.select %5, %313, %317 : vector<8x128xi1>, vector<8x128xf32>
    %319 = vector.extract_strided_slice %318 {offsets = [0, 0], sizes = [8, 32], strides = [1, 1]} : vector<8x128xf32> to vector<8x32xf32>
    %320 = vector.extract_strided_slice %318 {offsets = [0, 32], sizes = [8, 32], strides = [1, 1]} : vector<8x128xf32> to vector<8x32xf32>
    %321 = vector.extract_strided_slice %318 {offsets = [0, 64], sizes = [8, 32], strides = [1, 1]} : vector<8x128xf32> to vector<8x32xf32>
    %322 = vector.extract_strided_slice %318 {offsets = [0, 96], sizes = [8, 32], strides = [1, 1]} : vector<8x128xf32> to vector<8x32xf32>
    %323 = arith.mulf %320, %281 : vector<8x32xf32>
    %324 = arith.mulf %319, %321 : vector<8x32xf32>
    %325 = arith.addf %323, %324 : vector<8x32xf32>
    %326 = math.tanh %325 : vector<8x32xf32>
    %327 = arith.mulf %322, %326 : vector<8x32xf32>
    %328 = vector.extract_strided_slice %15 {offsets = [56, 0], sizes = [8, 128], strides = [1, 1]} : vector<64x128xf32> to vector<8x128xf32>
    %cst_80 = arith.constant dense<0.000000e+00> : vector<8x128xf32>
    %329 = tpu.matmul %304, %8, %cst_80 {dimension_numbers = #tpu.dot_dimension_numbers<[1], [0], [0], [1], [0, 0, 1, 1], [], []>} : vector<8x32xf32>, vector<32x128xf32>, vector<8x128xf32> -> vector<8x128xf32>
    %330 = arith.addf %328, %329 : vector<8x128xf32>
    %cst_81 = arith.constant 5.000000e-01 : f32
    %331 = vector.broadcast %cst_81 : f32 to vector<8x128xf32>
    %332 = arith.mulf %331, %330 : vector<8x128xf32>
    %333 = arith.select %5, %330, %332 : vector<8x128xi1>, vector<8x128xf32>
    %334 = math.tanh %333 : vector<8x128xf32>
    %cst_82 = arith.constant 5.000000e-01 : f32
    %335 = vector.broadcast %cst_82 : f32 to vector<8x128xf32>
    %336 = arith.mulf %335, %334 : vector<8x128xf32>
    %cst_83 = arith.constant 5.000000e-01 : f32
    %337 = vector.broadcast %cst_83 : f32 to vector<8x128xf32>
    %338 = arith.addf %336, %337 : vector<8x128xf32>
    %339 = arith.select %5, %334, %338 : vector<8x128xi1>, vector<8x128xf32>
    %340 = vector.extract_strided_slice %339 {offsets = [0, 0], sizes = [8, 32], strides = [1, 1]} : vector<8x128xf32> to vector<8x32xf32>
    %341 = vector.extract_strided_slice %339 {offsets = [0, 32], sizes = [8, 32], strides = [1, 1]} : vector<8x128xf32> to vector<8x32xf32>
    %342 = vector.extract_strided_slice %339 {offsets = [0, 64], sizes = [8, 32], strides = [1, 1]} : vector<8x128xf32> to vector<8x32xf32>
    %343 = vector.extract_strided_slice %339 {offsets = [0, 96], sizes = [8, 32], strides = [1, 1]} : vector<8x128xf32> to vector<8x32xf32>
    %344 = arith.mulf %341, %302 : vector<8x32xf32>
    %345 = arith.mulf %340, %342 : vector<8x32xf32>
    %346 = arith.addf %344, %345 : vector<8x32xf32>
    %347 = math.tanh %346 : vector<8x32xf32>
    %348 = arith.mulf %343, %347 : vector<8x32xf32>
    %cst_84 = arith.constant dense<0.000000e+00> : vector<8x128xf32>
    %349 = tpu.matmul %348, %7, %cst_84 {dimension_numbers = #tpu.dot_dimension_numbers<[1], [0], [0], [1], [0, 0, 1, 1], [], []>} : vector<8x32xf32>, vector<32x128xf32>, vector<8x128xf32> -> vector<8x128xf32>
    %cst_85 = arith.constant dense<0.000000e+00> : vector<8x128xf32>
    %350 = tpu.matmul %327, %9, %cst_85 {dimension_numbers = #tpu.dot_dimension_numbers<[1], [0], [0], [1], [0, 0, 1, 1], [], []>} : vector<8x32xf32>, vector<32x128xf32>, vector<8x128xf32> -> vector<8x128xf32>
    %351 = arith.addf %349, %350 : vector<8x128xf32>
    %352 = vector.broadcast %11 : vector<1x128xf32> to vector<8x128xf32>
    %353 = arith.addf %351, %352 : vector<8x128xf32>
    %cst_86 = arith.constant 5.000000e-01 : f32
    %354 = vector.broadcast %cst_86 : f32 to vector<8x128xf32>
    %355 = arith.mulf %354, %353 : vector<8x128xf32>
    %356 = arith.select %5, %353, %355 : vector<8x128xi1>, vector<8x128xf32>
    %357 = math.tanh %356 : vector<8x128xf32>
    %cst_87 = arith.constant 5.000000e-01 : f32
    %358 = vector.broadcast %cst_87 : f32 to vector<8x128xf32>
    %359 = arith.mulf %358, %357 : vector<8x128xf32>
    %cst_88 = arith.constant 5.000000e-01 : f32
    %360 = vector.broadcast %cst_88 : f32 to vector<8x128xf32>
    %361 = arith.addf %359, %360 : vector<8x128xf32>
    %362 = arith.select %5, %357, %361 : vector<8x128xi1>, vector<8x128xf32>
    %363 = vector.extract_strided_slice %362 {offsets = [0, 0], sizes = [8, 32], strides = [1, 1]} : vector<8x128xf32> to vector<8x32xf32>
    %364 = vector.extract_strided_slice %362 {offsets = [0, 32], sizes = [8, 32], strides = [1, 1]} : vector<8x128xf32> to vector<8x32xf32>
    %365 = vector.extract_strided_slice %362 {offsets = [0, 64], sizes = [8, 32], strides = [1, 1]} : vector<8x128xf32> to vector<8x32xf32>
    %366 = vector.extract_strided_slice %362 {offsets = [0, 96], sizes = [8, 32], strides = [1, 1]} : vector<8x128xf32> to vector<8x32xf32>
    %367 = arith.mulf %364, %325 : vector<8x32xf32>
    %368 = arith.mulf %363, %365 : vector<8x32xf32>
    %369 = arith.addf %367, %368 : vector<8x32xf32>
    %370 = math.tanh %369 : vector<8x32xf32>
    %371 = arith.mulf %366, %370 : vector<8x32xf32>
    %c0_89 = arith.constant 0 : index
    %c0_90 = arith.constant 0 : index
    %372 = vector.load %arg7[%c0_89, %c0_90] : memref<32x64xf32, #tpu.memory_space<vmem>>, vector<32x64xf32>
    %cst_91 = arith.constant dense<0.000000e+00> : vector<8x64xf32>
    %373 = tpu.matmul %371, %372, %cst_91 {dimension_numbers = #tpu.dot_dimension_numbers<[1], [0], [0], [1], [0, 0, 1, 1], [], []>} : vector<8x32xf32>, vector<32x64xf32>, vector<8x64xf32> -> vector<8x64xf32>
    %c0_92 = arith.constant 0 : index
    %c0_93 = arith.constant 0 : index
    %374 = vector.load %arg8[%c0_92, %c0_93] : memref<1x64xf32, #tpu.memory_space<vmem>>, vector<1x64xf32>
    %375 = vector.broadcast %374 : vector<1x64xf32> to vector<8x64xf32>
    %376 = arith.addf %373, %375 : vector<8x64xf32>
    %cst_94 = arith.constant 0.000000e+00 : f32
    %377 = vector.broadcast %cst_94 : f32 to vector<8x64xf32>
    %378 = arith.maximumf %376, %377 : vector<8x64xf32>
    %c0_95 = arith.constant 0 : index
    %c0_96 = arith.constant 0 : index
    %379 = vector.load %arg9[%c0_95, %c0_96] : memref<64x128xf32, #tpu.memory_space<vmem>>, vector<64x128xf32>
    %cst_97 = arith.constant dense<0.000000e+00> : vector<8x128xf32>
    %380 = tpu.matmul %378, %379, %cst_97 {dimension_numbers = #tpu.dot_dimension_numbers<[1], [0], [0], [1], [0, 0, 1, 1], [], []>} : vector<8x64xf32>, vector<64x128xf32>, vector<8x128xf32> -> vector<8x128xf32>
    %c0_98 = arith.constant 0 : index
    %c0_99 = arith.constant 0 : index
    %381 = vector.load %arg10[%c0_98, %c0_99] : memref<1x128xf32, #tpu.memory_space<vmem>>, vector<1x128xf32>
    %382 = vector.broadcast %381 : vector<1x128xf32> to vector<8x128xf32>
    %383 = arith.addf %380, %382 : vector<8x128xf32>
    %c0_100 = arith.constant 0 : index
    %c0_101 = arith.constant 0 : index
    %384 = vector.load %arg11[%c0_100, %c0_101] : memref<8x128xf32, #tpu.memory_space<vmem>>, vector<8x128xf32>
    tpu.vector_store %arg11[%c0_100, %c0_101], %383 {strides = array<i32>} : memref<8x128xf32, #tpu.memory_space<vmem>>, vector<8x128xf32>,
    return
  }
}

</mosaic_0001>

<llo_original>
// kernel: net_forward.1
$region0: #{net_forward.1}
  #allocation0 [shape = 'u32[]', space=smem, size = 0x4, offset = 0x4, fixed_abs, tag = 'smem constant byte address 0x4 - core index']
  #allocation1 [shape = 'u32[144,128]{1,0:T(1,128)}', space=vmem, size = 0x12000, scoped, tag = 'internal scratch']
  %s0 = inlined_call_operand.hbm [shape: f32[64,4], index: 0, kind: input, shape index: {}]
  %s1 = inlined_call_operand.hbm [shape: f32[4,128], index: 1, kind: input, shape index: {}]
  %s2 = inlined_call_operand.hbm [shape: f32[32,128], index: 2, kind: input, shape index: {}]
  %s3 = inlined_call_operand.hbm [shape: f32[1,128], index: 3, kind: input, shape index: {}]
  %s4 = inlined_call_operand.hbm [shape: f32[32,128], index: 4, kind: input, shape index: {}]
  %s5 = inlined_call_operand.hbm [shape: f32[32,128], index: 5, kind: input, shape index: {}]
  %s6 = inlined_call_operand.hbm [shape: f32[1,128], index: 6, kind: input, shape index: {}]
  %s7 = inlined_call_operand.hbm [shape: f32[32,64], index: 7, kind: input, shape index: {}]
  %s8 = inlined_call_operand.hbm [shape: f32[1,64], index: 8, kind: input, shape index: {}]
  %s9 = inlined_call_operand.hbm [shape: f32[64,128], index: 9, kind: input, shape index: {}]
  %s10 = inlined_call_operand.hbm [shape: f32[1,128], index: 10, kind: input, shape index: {}]
  %s11 = inlined_call_operand.hbm [shape: f32[8,128], index: 11, kind: output, shape index: {}]
  %s12 = sld [smem:[#allocation0]]
  $region98: #{net_forward.1} parent=0
    _
  %s14 = ssub.s32 1, %s12
  %s15 = scalar_select 0, %s14, %s12
  $region1: #{net_forward.1} parent=0
    #allocation2 [shape = 'u8[32768]{0}', space=vmem, size = 0x8000, scoped, tag = 'input window, operand 0, single buffered']
    #allocation3 [shape = 's32[1]{0}', space=sflag, size = 0x4, scoped, tag = 'scoped memory for net_forward.1']
    #allocation4 [shape = 's32[1]{0}', space=sflag, size = 0x4, scoped, tag = 'scoped memory for net_forward.1']
    #allocation5 [shape = 'u8[2048]{0}', space=vmem, size = 0x800, scoped, tag = 'input window, operand 1, single buffered']
    #allocation6 [shape = 's32[1]{0}', space=sflag, size = 0x4, scoped, tag = 'scoped memory for net_forward.1']
    #allocation7 [shape = 'u8[16384]{0}', space=vmem, size = 0x4000, scoped, tag = 'input window, operand 2, single buffered']
    #allocation8 [shape = 'u8[512]{0}', space=vmem, size = 0x400, scoped, tag = 'input window, operand 3, single buffered']
    #allocation9 [shape = 's32[1]{0}', space=sflag, size = 0x4, scoped, tag = 'scoped memory for net_forward.1']
    #allocation10 [shape = 'u8[16384]{0}', space=vmem, size = 0x4000, scoped, tag = 'input window, operand 4, single buffered']
    #allocation11 [shape = 'u8[16384]{0}', space=vmem, size = 0x4000, scoped, tag = 'input window, operand 5, single buffered']
    #allocation12 [shape = 's32[1]{0}', space=sflag, size = 0x4, scoped, tag = 'scoped memory for net_forward.1']
    #allocation13 [shape = 'u8[512]{0}', space=vmem, size = 0x400, scoped, tag = 'input window, operand 6, single buffered']
    #allocation14 [shape = 'u8[16384]{0}', space=vmem, size = 0x4000, scoped, tag = 'input window, operand 7, single buffered']
    #allocation15 [shape = 's32[1]{0}', space=sflag, size = 0x4, scoped, tag = 'scoped memory for net_forward.1']
    #allocation16 [shape = 'u8[512]{0}', space=vmem, size = 0x400, scoped, tag = 'input window, operand 8, single buffered']
    #allocation17 [shape = 'u8[32768]{0}', space=vmem, size = 0x8000, scoped, tag = 'input window, operand 9, single buffered']
    #allocation18 [shape = 's32[1]{0}', space=sflag, size = 0x4, scoped, tag = 'scoped memory for net_forward.1']
    #allocation19 [shape = 'u8[512]{0}', space=vmem, size = 0x400, scoped, tag = 'input window, operand 10, single buffered']
    #allocation20 [shape = 'u8[4096]{0}', space=vmem, size = 0x1000, scoped, tag = 'output window, operand 0, single buffered']
    %16 = vsyncpa [#allocation3], 0
    %17 = vsyncpa [#allocation6], 0
    %18 = vsyncpa [#allocation9], 0
    %19 = vsyncpa [#allocation12], 0
    %20 = vsyncpa [#allocation15], 0
    %21 = vsyncpa [#allocation18], 0
    %22 = vsyncpa [#allocation4], 0
    // Predicated region
    $region2: #{net_forward.1} parent=1 // pred_check
      _
    $region3: #{net_forward.1} parent=1 // pred_check_branch
      %24 = sbr.rel (0) target = $region5
    $region4: #{net_forward.1} parent=1 // pred_region
      %s26 = ssub.s32 1024, 1024
      %27 = vsyncadd [#allocation3], %s26
      %s28 = sshll.u32 [#allocation2], 4
      %s29 = int_to_ptr.vmem [resolvable:$true] %s28
      %34 = dma.hbm_to_vmem [thread:$0]  %s0, 1024, %s29, [#allocation3], 128, 128, 8
    $region5: #{net_forward.1} parent=1 // pred_fallthru
      _
    // Predicated region
    $region6: #{net_forward.1} parent=1 // pred_check
      _
    $region7: #{net_forward.1} parent=1 // pred_check_branch
      %36 = sbr.rel (0) target = $region9
    $region8: #{net_forward.1} parent=1 // pred_region
      %s38 = ssub.s32 64, 64
      %39 = vsyncadd [#allocation6], %s38
      %s41 = sshll.u32 [#allocation5], 4
      %s42 = int_to_ptr.vmem [resolvable:$true] %s41
      %44 = dma.hbm_to_vmem [thread:$0]  %s1, 64, %s42, [#allocation6]
    $region9: #{net_forward.1} parent=1 // pred_fallthru
      _
    // Predicated region
    $region10: #{net_forward.1} parent=1 // pred_check
      _
    $region11: #{net_forward.1} parent=1 // pred_check_branch
      %46 = sbr.rel (0) target = $region13
    $region12: #{net_forward.1} parent=1 // pred_region
      %s48 = ssub.s32 512, 512
      %49 = vsyncadd [#allocation6], %s48
      %s50 = sshll.u32 [#allocation7], 4
      %s51 = int_to_ptr.vmem [resolvable:$true] %s50
      %56 = dma.hbm_to_vmem [thread:$0]  %s2, 512, %s51, [#allocation6], 128, 128, 8
    $region13: #{net_forward.1} parent=1 // pred_fallthru
      _
    // Predicated region
    $region14: #{net_forward.1} parent=1 // pred_check
      _
    $region15: #{net_forward.1} parent=1 // pred_check_branch
      %58 = sbr.rel (0) target = $region17
    $region16: #{net_forward.1} parent=1 // pred_region
      %s60 = ssub.s32 16, 16
      %61 = vsyncadd [#allocation9], %s60
      %s63 = sshll.u32 [#allocation8], 4
      %s64 = int_to_ptr.vmem [resolvable:$true] %s63
      %66 = dma.hbm_to_vmem [thread:$0]  %s3, 16, %s64, [#allocation9]
    $region17: #{net_forward.1} parent=1 // pred_fallthru
      _
    // Predicated region
    $region18: #{net_forward.1} parent=1 // pred_check
      _
    $region19: #{net_forward.1} parent=1 // pred_check_branch
      %68 = sbr.rel (0) target = $region21
    $region20: #{net_forward.1} parent=1 // pred_region
      %s70 = ssub.s32 512, 512
      %71 = vsyncadd [#allocation9], %s70
      %s72 = sshll.u32 [#allocation10], 4
      %s73 = int_to_ptr.vmem [resolvable:$true] %s72
      %78 = dma.hbm_to_vmem [thread:$0]  %s4, 512, %s73, [#allocation9], 128, 128, 8
    $region21: #{net_forward.1} parent=1 // pred_fallthru
      _
    // Predicated region
    $region22: #{net_forward.1} parent=1 // pred_check
      _
    $region23: #{net_forward.1} parent=1 // pred_check_branch
      %80 = sbr.rel (0) target = $region25
    $region24: #{net_forward.1} parent=1 // pred_region
      %s82 = ssub.s32 512, 512
      %83 = vsyncadd [#allocation12], %s82
      %s84 = sshll.u32 [#allocation11], 4
      %s85 = int_to_ptr.vmem [resolvable:$true] %s84
      %90 = dma.hbm_to_vmem [thread:$0]  %s5, 512, %s85, [#allocation12], 128, 128, 8
    $region25: #{net_forward.1} parent=1 // pred_fallthru
      _
    // Predicated region
    $region26: #{net_forward.1} parent=1 // pred_check
      _
    $region27: #{net_forward.1} parent=1 // pred_check_branch
      %92 = sbr.rel (0) target = $region29
    $region28: #{net_forward.1} parent=1 // pred_region
      %s94 = ssub.s32 16, 16
      %95 = vsyncadd [#allocation12], %s94
      %s97 = sshll.u32 [#allocation13], 4
      %s98 = int_to_ptr.vmem [resolvable:$true] %s97
      %100 = dma.hbm_to_vmem [thread:$0]  %s6, 16, %s98, [#allocation12]
    $region29: #{net_forward.1} parent=1 // pred_fallthru
      _
    // Predicated region
    $region30: #{net_forward.1} parent=1 // pred_check
      _
    $region31: #{net_forward.1} parent=1 // pred_check_branch
      %102 = sbr.rel (0) target = $region33
    $region32: #{net_forward.1} parent=1 // pred_region
      %s104 = ssub.s32 512, 512
      %105 = vsyncadd [#allocation15], %s104
      %s106 = sshll.u32 [#allocation14], 4
      %s107 = int_to_ptr.vmem [resolvable:$true] %s106
      %112 = dma.hbm_to_vmem [thread:$0]  %s7, 512, %s107, [#allocation15], 128, 128, 8
    $region33: #{net_forward.1} parent=1 // pred_fallthru
      _
    // Predicated region
    $region34: #{net_forward.1} parent=1 // pred_check
      _
    $region35: #{net_forward.1} parent=1 // pred_check_branch
      %114 = sbr.rel (0) target = $region37
    $region36: #{net_forward.1} parent=1 // pred_region
      %s116 = ssub.s32 16, 16
      %117 = vsyncadd [#allocation15], %s116
      %s119 = sshll.u32 [#allocation16], 4
      %s120 = int_to_ptr.vmem [resolvable:$true] %s119
      %122 = dma.hbm_to_vmem [thread:$0]  %s8, 16, %s120, [#allocation15]
    $region37: #{net_forward.1} parent=1 // pred_fallthru
      _
    // Predicated region
    $region38: #{net_forward.1} parent=1 // pred_check
      _
    $region39: #{net_forward.1} parent=1 // pred_check_branch
      %124 = sbr.rel (0) target = $region41
    $region40: #{net_forward.1} parent=1 // pred_region
      %s126 = ssub.s32 1024, 1024
      %127 = vsyncadd [#allocation18], %s126
      %s128 = sshll.u32 [#allocation17], 4
      %s129 = int_to_ptr.vmem [resolvable:$true] %s128
      %134 = dma.hbm_to_vmem [thread:$0]  %s9, 1024, %s129, [#allocation18], 128, 128, 8
    $region41: #{net_forward.1} parent=1 // pred_fallthru
      _
    // Predicated region
    $region42: #{net_forward.1} parent=1 // pred_check
      _
    $region43: #{net_forward.1} parent=1 // pred_check_branch
      %136 = sbr.rel (0) target = $region45
    $region44: #{net_forward.1} parent=1 // pred_region
      %s138 = ssub.s32 16, 16
      %139 = vsyncadd [#allocation18], %s138
      %s141 = sshll.u32 [#allocation19], 4
      %s142 = int_to_ptr.vmem [resolvable:$true] %s141
      %144 = dma.hbm_to_vmem [thread:$0]  %s10, 16, %s142, [#allocation18]
    $region45: #{net_forward.1} parent=1 // pred_fallthru
      _
    // Predicated region
    $region46: #{net_forward.1} parent=1 // pred_check
      _
    $region47: #{net_forward.1} parent=1 // pred_check_branch
      %146 = sbr.rel (0) target = $region49
    $region48: #{net_forward.1} parent=1 // pred_region
      %147 = dma.done [#allocation3], 1024
    $region49: #{net_forward.1} parent=1 // pred_fallthru
      _
    // Predicated region
    $region50: #{net_forward.1} parent=1 // pred_check
      _
    $region51: #{net_forward.1} parent=1 // pred_check_branch
      %149 = sbr.rel (0) target = $region53
    $region52: #{net_forward.1} parent=1 // pred_region
      %150 = dma.done [#allocation6], 64
    $region53: #{net_forward.1} parent=1 // pred_fallthru
      _
    // Predicated region
    $region54: #{net_forward.1} parent=1 // pred_check
      _
    $region55: #{net_forward.1} parent=1 // pred_check_branch
      %152 = sbr.rel (0) target = $region57
    $region56: #{net_forward.1} parent=1 // pred_region
      %153 = dma.done [#allocation6], 512
    $region57: #{net_forward.1} parent=1 // pred_fallthru
      _
    // Predicated region
    $region58: #{net_forward.1} parent=1 // pred_check
      _
    $region59: #{net_forward.1} parent=1 // pred_check_branch
      %155 = sbr.rel (0) target = $region61
    $region60: #{net_forward.1} parent=1 // pred_region
      %156 = dma.done [#allocation9], 16
    $region61: #{net_forward.1} parent=1 // pred_fallthru
      _
    // Predicated region
    $region62: #{net_forward.1} parent=1 // pred_check
      _
    $region63: #{net_forward.1} parent=1 // pred_check_branch
      %158 = sbr.rel (0) target = $region65
    $region64: #{net_forward.1} parent=1 // pred_region
      %159 = dma.done [#allocation9], 512
    $region65: #{net_forward.1} parent=1 // pred_fallthru
      _
    // Predicated region
    $region66: #{net_forward.1} parent=1 // pred_check
      _
    $region67: #{net_forward.1} parent=1 // pred_check_branch
      %161 = sbr.rel (0) target = $region69
    $region68: #{net_forward.1} parent=1 // pred_region
      %162 = dma.done [#allocation12], 512
    $region69: #{net_forward.1} parent=1 // pred_fallthru
      _
    // Predicated region
    $region70: #{net_forward.1} parent=1 // pred_check
      _
    $region71: #{net_forward.1} parent=1 // pred_check_branch
      %164 = sbr.rel (0) target = $region73
    $region72: #{net_forward.1} parent=1 // pred_region
      %165 = dma.done [#allocation12], 16
    $region73: #{net_forward.1} parent=1 // pred_fallthru
      _
    // Predicated region
    $region74: #{net_forward.1} parent=1 // pred_check
      _
    $region75: #{net_forward.1} parent=1 // pred_check_branch
      %167 = sbr.rel (0) target = $region77
    $region76: #{net_forward.1} parent=1 // pred_region
      %168 = dma.done [#allocation15], 512
    $region77: #{net_forward.1} parent=1 // pred_fallthru
      _
    // Predicated region
    $region78: #{net_forward.1} parent=1 // pred_check
      _
    $region79: #{net_forward.1} parent=1 // pred_check_branch
      %170 = sbr.rel (0) target = $region81
    $region80: #{net_forward.1} parent=1 // pred_region
      %171 = dma.done [#allocation15], 16
    $region81: #{net_forward.1} parent=1 // pred_fallthru
      _
    // Predicated region
    $region82: #{net_forward.1} parent=1 // pred_check
      _
    $region83: #{net_forward.1} parent=1 // pred_check_branch
      %173 = sbr.rel (0) target = $region85
    $region84: #{net_forward.1} parent=1 // pred_region
      %174 = dma.done [#allocation18], 1024
    $region85: #{net_forward.1} parent=1 // pred_fallthru
      _
    // Predicated region
    $region86: #{net_forward.1} parent=1 // pred_check
      _
    $region87: #{net_forward.1} parent=1 // pred_check_branch
      %176 = sbr.rel (0) target = $region89
    $region88: #{net_forward.1} parent=1 // pred_region
      %177 = dma.done [#allocation18], 16
    $region89: #{net_forward.1} parent=1 // pred_fallthru
      _
    %v178 = vlaneseq
    %v179 = vand.u32 %v178, 127
    %vm180 = vcmp.ge.s32.totalorder %v179, 64
    %vm181 = vcmp.lt.s32.totalorder %v179, 96
    %vm182 = vmand %vm180, %vm181
    %v183 = vld [vmem:[#allocation5] sm:$0xf]
    %v184 = vld [vmem:[#allocation10] sm:$0xff]
    %v185 = vld [vmem:[#allocation10 + $0x8] sm:$0xff]
    %v186 = vld [vmem:[#allocation10 + $0x10] sm:$0xff]
    %v187 = vld [vmem:[#allocation10 + $0x18] sm:$0xff]
    %v188 = vld [vmem:[#allocation7] sm:$0xff]
    %v189 = vld [vmem:[#allocation7 + $0x8] sm:$0xff]
    %v190 = vld [vmem:[#allocation7 + $0x10] sm:$0xff]
    %v191 = vld [vmem:[#allocation7 + $0x18] sm:$0xff]
    %v192 = vld [vmem:[#allocation11] sm:$0xff]
    %v193 = vld [vmem:[#allocation11 + $0x8] sm:$0xff]
    %v194 = vld [vmem:[#allocation11 + $0x10] sm:$0xff]
    %v195 = vld [vmem:[#allocation11 + $0x18] sm:$0xff]
    %v196 = vld [vmem:[#allocation8] sm:$0x1]
    %v197 = vld [vmem:[#allocation13] sm:$0x1]
    %v198 = vld [vmem:[#allocation2] sm:$0xff]
    %v199 = vld [vmem:[#allocation2 + $0x8] sm:$0xff]
    %v200 = vld [vmem:[#allocation2 + $0x10] sm:$0xff]
    %v201 = vld [vmem:[#allocation2 + $0x18] sm:$0xff]
    %v202 = vld [vmem:[#allocation2 + $0x20] sm:$0xff]
    %v203 = vld [vmem:[#allocation2 + $0x28] sm:$0xff]
    %v204 = vld [vmem:[#allocation2 + $0x30] sm:$0xff]
    %v205 = vld [vmem:[#allocation2 + $0x38] sm:$0xff]
    %v207 = vlaneseq
    %v208 = vshrl.u32 %v207, 7
    %v209 = vsub.s32 0, %v208
    %v210 = vrot.slane %v196, %v209
    %vm212 = vcmask 31744
    %v214 = vsel %vm212, %v198, 0
    %v217 = vsel %vm212, %v199, 0
    %v220 = vsel %vm212, %v200, 0
    %v223 = vsel %vm212, %v201, 0
    %v226 = vsel %vm212, %v202, 0
    %v229 = vsel %vm212, %v203, 0
    %v232 = vsel %vm212, %v204, 0
    %v235 = vsel %vm212, %v205, 0
    %vm237 = vcmask 1043456
    %v239 = vsel %vm237, %v183, 0
    %241 = vmatprep.subr.mxu0 0.0
    %242 = vmatpush1.msra.mxu0 %v239
    %243 = vmatprep.subr.mxu0 0.0
    %244 = vmatpush1.msra.mxu0 0.0
    %245 = vmatprep.subr.mxu0 0.0
    %246 = vmatpush1.msra.mxu0 0.0
    %247 = vmatprep.subr.mxu0 0.0
    %248 = vmatpush1.msra.mxu0 0.0
    %249 = vmatprep.subr.mxu0 0.0
    %250 = vmatpush1.msra.mxu0 0.0
    %251 = vmatprep.subr.mxu0 0.0
    %252 = vmatpush1.msra.mxu0 0.0
    %253 = vmatprep.subr.mxu0 0.0
    %254 = vmatpush1.msra.mxu0 0.0
    %255 = vmatprep.subr.mxu0 0.0
    %256 = vmatpush1.msra.mxu0 0.0
    %257 = vmatprep.subr.mxu0 0.0
    %258 = vmatpush1.msra.mxu0 0.0
    %259 = vmatprep.subr.mxu0 0.0
    %260 = vmatpush1.msra.mxu0 0.0
    %261 = vmatprep.subr.mxu0 0.0
    %262 = vmatpush1.msra.mxu0 0.0
    %263 = vmatprep.subr.mxu0 0.0
    %264 = vmatpush1.msra.mxu0 0.0
    %265 = vmatprep.subr.mxu0 0.0
    %266 = vmatpush1.msra.mxu0 0.0
    %267 = vmatprep.subr.mxu0 0.0
    %268 = vmatpush1.msra.mxu0 0.0
    %269 = vmatprep.subr.mxu0 0.0
    %270 = vmatpush1.msra.mxu0 0.0
    %271 = vmatprep.subr.mxu0 0.0
    %272 = vmatpush1.msra.mxu0 0.0
    %273 = vmatprep.subr.mxu0 0.0
    %274 = vmatpush1.msra.mxu0 0.0
    %275 = vmatprep.subr.mxu0 0.0
    %276 = vmatpush1.msra.mxu0 0.0
    %277 = vmatprep.subr.mxu0 0.0
    %278 = vmatpush1.msra.mxu0 0.0
    %279 = vmatprep.subr.mxu0 0.0
    %280 = vmatpush1.msra.mxu0 0.0
    %281 = vmatprep.subr.mxu0 0.0
    %282 = vmatpush1.msra.mxu0 0.0
    %283 = vmatprep.subr.mxu0 0.0
    %284 = vmatpush1.msra.mxu0 0.0
    %285 = vmatprep.subr.mxu0 0.0
    %286 = vmatpush1.msra.mxu0 0.0
    %287 = vmatprep.subr.mxu0 0.0
    %288 = vmatpush1.msra.mxu0 0.0
    %289 = vmatprep.subr.mxu0 0.0
    %290 = vmatpush1.msra.mxu0 0.0
    %291 = vmatprep.subr.mxu0 0.0
    %292 = vmatpush1.msra.mxu0 0.0
    %293 = vmatprep.subr.mxu0 0.0
    %294 = vmatpush1.msra.mxu0 0.0
    %295 = vmatprep.subr.mxu0 0.0
    %296 = vmatpush1.msra.mxu0 0.0
    %297 = vmatprep.subr.mxu0 0.0
    %298 = vmatpush1.msra.mxu0 0.0
    %299 = vmatprep.subr.mxu0 0.0
    %300 = vmatpush1.msra.mxu0 0.0
    %301 = vmatprep.subr.mxu0 0.0
    %302 = vmatpush1.msra.mxu0 0.0
    %303 = vmatprep.subr.mxu0 0.0
    %304 = vmatpush1.msra.mxu0 0.0
    %305 = vmatprep.mubr.f32.mxu0 0.0
    %306 = vmatmul.mubr.f32.gmra.mrb[0].mxu0 %v214
    %v307 = vpop.f32.mrb[0].mxu0
    %v308 = vadd.f32 %v210, %v307
    %v309 = vpop.f32.mrb[0].mxu0
    %310 = vmatprep.mubr.f32.mxu0 0.0
    %311 = vmatmul.mubr.f32.gmra.mrb[0].mxu0 %v217
    %v312 = vpop.f32.mrb[0].mxu0
    %v313 = vadd.f32 %v210, %v312
    %v314 = vpop.f32.mrb[0].mxu0
    %315 = vmatprep.mubr.f32.mxu0 0.0
    %316 = vmatmul.mubr.f32.gmra.mrb[0].mxu0 %v220
    %v317 = vpop.f32.mrb[0].mxu0
    %v318 = vadd.f32 %v210, %v317
    %v319 = vpop.f32.mrb[0].mxu0
    %320 = vmatprep.mubr.f32.mxu0 0.0
    %321 = vmatmul.mubr.f32.gmra.mrb[0].mxu0 %v223
    %v322 = vpop.f32.mrb[0].mxu0
    %v323 = vadd.f32 %v210, %v322
    %v324 = vpop.f32.mrb[0].mxu0
    %325 = vmatprep.mubr.f32.mxu0 0.0
    %326 = vmatmul.mubr.f32.gmra.mrb[0].mxu0 %v226
    %v327 = vpop.f32.mrb[0].mxu0
    %v328 = vadd.f32 %v210, %v327
    %v329 = vpop.f32.mrb[0].mxu0
    %330 = vmatprep.mubr.f32.mxu0 0.0
    %331 = vmatmul.mubr.f32.gmra.mrb[0].mxu0 %v229
    %v332 = vpop.f32.mrb[0].mxu0
    %v333 = vadd.f32 %v210, %v332
    %v334 = vpop.f32.mrb[0].mxu0
    %335 = vmatprep.mubr.f32.mxu0 0.0
    %336 = vmatmul.mubr.f32.gmra.mrb[0].mxu0 %v232
    %v337 = vpop.f32.mrb[0].mxu0
    %v338 = vadd.f32 %v210, %v337
    %v339 = vpop.f32.mrb[0].mxu0
    %340 = vmatprep.mubr.f32.mxu0 0.0
    %341 = vmatmul.mubr.f32.gmra.mrb[0].mxu0 %v235
    %v342 = vpop.f32.mrb[0].mxu0
    %v343 = vadd.f32 %v210, %v342
    %v344 = vpop.f32.mrb[0].mxu0
    %345 = vdwg.mxu0
    %vm346 = vcmask 261120
    %v348 = vsel %vm346, 0.0, 0
    %350 = vmatprep.subr.mxu0 0.0
    %351 = vmatpush1.msra.mxu0 %v188
    %352 = vmatprep.subr.mxu0 0.0
    %353 = vmatpush1.msra.mxu0 %v189
    %354 = vmatprep.subr.mxu0 0.0
    %355 = vmatpush1.msra.mxu0 %v190
    %356 = vmatprep.subr.mxu0 0.0
    %357 = vmatpush1.msra.mxu0 %v191
    %358 = vmatprep.subr.mxu0 0.0
    %359 = vmatpush1.msra.mxu0 0.0
    %360 = vmatprep.subr.mxu0 0.0
    %361 = vmatpush1.msra.mxu0 0.0
    %362 = vmatprep.subr.mxu0 0.0
    %363 = vmatpush1.msra.mxu0 0.0
    %364 = vmatprep.subr.mxu0 0.0
    %365 = vmatpush1.msra.mxu0 0.0
    %366 = vmatprep.subr.mxu0 0.0
    %367 = vmatpush1.msra.mxu0 0.0
    %368 = vmatprep.subr.mxu0 0.0
    %369 = vmatpush1.msra.mxu0 0.0
    %370 = vmatprep.subr.mxu0 0.0
    %371 = vmatpush1.msra.mxu0 0.0
    %372 = vmatprep.subr.mxu0 0.0
    %373 = vmatpush1.msra.mxu0 0.0
    %374 = vmatprep.subr.mxu0 0.0
    %375 = vmatpush1.msra.mxu0 0.0
    %376 = vmatprep.subr.mxu0 0.0
    %377 = vmatpush1.msra.mxu0 0.0
    %378 = vmatprep.subr.mxu0 0.0
    %379 = vmatpush1.msra.mxu0 0.0
    %380 = vmatprep.subr.mxu0 0.0
    %381 = vmatpush1.msra.mxu0 0.0
    %382 = vmatprep.subr.mxu0 0.0
    %383 = vmatpush1.msra.mxu0 0.0
    %384 = vmatprep.subr.mxu0 0.0
    %385 = vmatpush1.msra.mxu0 0.0
    %386 = vmatprep.subr.mxu0 0.0
    %387 = vmatpush1.msra.mxu0 0.0
    %388 = vmatprep.subr.mxu0 0.0
    %389 = vmatpush1.msra.mxu0 0.0
    %390 = vmatprep.subr.mxu0 0.0
    %391 = vmatpush1.msra.mxu0 0.0
    %392 = vmatprep.subr.mxu0 0.0
    %393 = vmatpush1.msra.mxu0 0.0
    %394 = vmatprep.subr.mxu0 0.0
    %395 = vmatpush1.msra.mxu0 0.0
    %396 = vmatprep.subr.mxu0 0.0
    %397 = vmatpush1.msra.mxu0 0.0
    %398 = vmatprep.subr.mxu0 0.0
    %399 = vmatpush1.msra.mxu0 0.0
    %400 = vmatprep.subr.mxu0 0.0
    %401 = vmatpush1.msra.mxu0 0.0
    %402 = vmatprep.subr.mxu0 0.0
    %403 = vmatpush1.msra.mxu0 0.0
    %404 = vmatprep.subr.mxu0 0.0
    %405 = vmatpush1.msra.mxu0 0.0
    %406 = vmatprep.subr.mxu0 0.0
    %407 = vmatpush1.msra.mxu0 0.0
    %408 = vmatprep.subr.mxu0 0.0
    %409 = vmatpush1.msra.mxu0 0.0
    %410 = vmatprep.subr.mxu0 0.0
    %411 = vmatpush1.msra.mxu0 0.0
    %412 = vmatprep.subr.mxu0 0.0
    %413 = vmatpush1.msra.mxu0 0.0
    %414 = vmatprep.mubr.f32.mxu0 0.0
    %415 = vmatmul.mubr.f32.gmra.mrb[0].mxu0 %v348
    %v416 = vpop.f32.mrb[0].mxu0
    %v417 = vadd.f32 0.0, %v416
    %v418 = vpop.f32.mrb[0].mxu0
    %419 = vdwg.mxu0
    %v420 = vadd.f32 %v308, %v417
    %v421 = vmul.f32 %v420, 0.5
    %v422 = vsel %vm182, %v420, %v421
    %v423 = vtanh.pop %v422
    %v424 = vmul.f32 %v423, 0.5
    %v425 = vadd.f32 %v424, 0.5
    %v426 = vsel %vm182, %v423, %v425
    %v427 = vmul.f32 %v426, 0.0
    %429 = vrot.lane.b32.xlu0 %v426, 64
    %v430 = vpop.permute.xlu0 %429
    %v432 = vmul.f32 %v426, %v430
    %434 = vrot.lane.b32.xlu0 %v432, 32
    %v435 = vpop.permute.xlu0 %434
    %v437 = vadd.f32 %v427, %v435
    %v438 = vtanh.pop %v437
    %440 = vrot.lane.b32.xlu0 %v438, 64
    %v441 = vpop.permute.xlu0 %440
    %v443 = vmul.f32 %v426, %v441
    %444 = vmatprep.subr.mxu0 0.0
    %445 = vmatpush1.msra.mxu0 %v192
    %446 = vmatprep.subr.mxu0 0.0
    %447 = vmatpush1.msra.mxu0 %v193
    %448 = vmatprep.subr.mxu0 0.0
    %449 = vmatpush1.msra.mxu0 %v194
    %450 = vmatprep.subr.mxu0 0.0
    %451 = vmatpush1.msra.mxu0 %v195
    %452 = vmatprep.subr.mxu0 0.0
    %453 = vmatpush1.msra.mxu0 0.0
    %454 = vmatprep.subr.mxu0 0.0
    %455 = vmatpush1.msra.mxu0 0.0
    %456 = vmatprep.subr.mxu0 0.0
    %457 = vmatpush1.msra.mxu0 0.0
    %458 = vmatprep.subr.mxu0 0.0
    %459 = vmatpush1.msra.mxu0 0.0
    %460 = vmatprep.subr.mxu0 0.0
    %461 = vmatpush1.msra.mxu0 0.0
    %462 = vmatprep.subr.mxu0 0.0
    %463 = vmatpush1.msra.mxu0 0.0
    %464 = vmatprep.subr.mxu0 0.0
    %465 = vmatpush1.msra.mxu0 0.0
    %466 = vmatprep.subr.mxu0 0.0
    %467 = vmatpush1.msra.mxu0 0.0
    %468 = vmatprep.subr.mxu0 0.0
    %469 = vmatpush1.msra.mxu0 0.0
    %470 = vmatprep.subr.mxu0 0.0
    %471 = vmatpush1.msra.mxu0 0.0
    %472 = vmatprep.subr.mxu0 0.0
    %473 = vmatpush1.msra.mxu0 0.0
    %474 = vmatprep.subr.mxu0 0.0
    %475 = vmatpush1.msra.mxu0 0.0
    %476 = vmatprep.subr.mxu0 0.0
    %477 = vmatpush1.msra.mxu0 0.0
    %478 = vmatprep.subr.mxu0 0.0
    %479 = vmatpush1.msra.mxu0 0.0
    %480 = vmatprep.subr.mxu0 0.0
    %481 = vmatpush1.msra.mxu0 0.0
    %482 = vmatprep.subr.mxu0 0.0
    %483 = vmatpush1.msra.mxu0 0.0
    %484 = vmatprep.subr.mxu0 0.0
    %485 = vmatpush1.msra.mxu0 0.0
    %486 = vmatprep.subr.mxu0 0.0
    %487 = vmatpush1.msra.mxu0 0.0
    %488 = vmatprep.subr.mxu0 0.0
    %489 = vmatpush1.msra.mxu0 0.0
    %490 = vmatprep.subr.mxu0 0.0
    %491 = vmatpush1.msra.mxu0 0.0
    %492 = vmatprep.subr.mxu0 0.0
    %493 = vmatpush1.msra.mxu0 0.0
    %494 = vmatprep.subr.mxu0 0.0
    %495 = vmatpush1.msra.mxu0 0.0
    %496 = vmatprep.subr.mxu0 0.0
    %497 = vmatpush1.msra.mxu0 0.0
    %498 = vmatprep.subr.mxu0 0.0
    %499 = vmatpush1.msra.mxu0 0.0
    %500 = vmatprep.subr.mxu0 0.0
    %501 = vmatpush1.msra.mxu0 0.0
    %502 = vmatprep.subr.mxu0 0.0
    %503 = vmatpush1.msra.mxu0 0.0
    %504 = vmatprep.subr.mxu0 0.0
    %505 = vmatpush1.msra.mxu0 0.0
    %506 = vmatprep.subr.mxu0 0.0
    %507 = vmatpush1.msra.mxu0 0.0
    %508 = vmatprep.mubr.f32.mxu0 0.0
    %509 = vmatmul.mubr.f32.gmra.mrb[0].mxu0 %v348
    %v510 = vpop.f32.mrb[0].mxu0
    %v511 = vadd.f32 0.0, %v510
    %v512 = vpop.f32.mrb[0].mxu0
    %513 = vdwg.mxu0
    %515 = vrot.lane.b32.xlu0 %v443, 32
    %v516 = vpop.permute.xlu0 %515
    %v517 = vsel %vm346, %v516, 0
    %519 = vmatprep.subr.mxu0 0.0
    %520 = vmatpush1.msra.mxu0 %v184
    %521 = vmatprep.subr.mxu0 0.0
    %522 = vmatpush1.msra.mxu0 %v185
    %523 = vmatprep.subr.mxu0 0.0
    %524 = vmatpush1.msra.mxu0 %v186
    %525 = vmatprep.subr.mxu0 0.0
    %526 = vmatpush1.msra.mxu0 %v187
    %527 = vmatprep.subr.mxu0 0.0
    %528 = vmatpush1.msra.mxu0 0.0
    %529 = vmatprep.subr.mxu0 0.0
    %530 = vmatpush1.msra.mxu0 0.0
    %531 = vmatprep.subr.mxu0 0.0
    %532 = vmatpush1.msra.mxu0 0.0
    %533 = vmatprep.subr.mxu0 0.0
    %534 = vmatpush1.msra.mxu0 0.0
    %535 = vmatprep.subr.mxu0 0.0
    %536 = vmatpush1.msra.mxu0 0.0
    %537 = vmatprep.subr.mxu0 0.0
    %538 = vmatpush1.msra.mxu0 0.0
    %539 = vmatprep.subr.mxu0 0.0
    %540 = vmatpush1.msra.mxu0 0.0
    %541 = vmatprep.subr.mxu0 0.0
    %542 = vmatpush1.msra.mxu0 0.0
    %543 = vmatprep.subr.mxu0 0.0
    %544 = vmatpush1.msra.mxu0 0.0
    %545 = vmatprep.subr.mxu0 0.0
    %546 = vmatpush1.msra.mxu0 0.0
    %547 = vmatprep.subr.mxu0 0.0
    %548 = vmatpush1.msra.mxu0 0.0
    %549 = vmatprep.subr.mxu0 0.0
    %550 = vmatpush1.msra.mxu0 0.0
    %551 = vmatprep.subr.mxu0 0.0
    %552 = vmatpush1.msra.mxu0 0.0
    %553 = vmatprep.subr.mxu0 0.0
    %554 = vmatpush1.msra.mxu0 0.0
    %555 = vmatprep.subr.mxu0 0.0
    %556 = vmatpush1.msra.mxu0 0.0
    %557 = vmatprep.subr.mxu0 0.0
    %558 = vmatpush1.msra.mxu0 0.0
    %559 = vmatprep.subr.mxu0 0.0
    %560 = vmatpush1.msra.mxu0 0.0
    %561 = vmatprep.subr.mxu0 0.0
    %562 = vmatpush1.msra.mxu0 0.0
    %563 = vmatprep.subr.mxu0 0.0
    %564 = vmatpush1.msra.mxu0 0.0
    %565 = vmatprep.subr.mxu0 0.0
    %566 = vmatpush1.msra.mxu0 0.0
    %567 = vmatprep.subr.mxu0 0.0
    %568 = vmatpush1.msra.mxu0 0.0
    %569 = vmatprep.subr.mxu0 0.0
    %570 = vmatpush1.msra.mxu0 0.0
    %571 = vmatprep.subr.mxu0 0.0
    %572 = vmatpush1.msra.mxu0 0.0
    %573 = vmatprep.subr.mxu0 0.0
    %574 = vmatpush1.msra.mxu0 0.0
    %575 = vmatprep.subr.mxu0 0.0
    %576 = vmatpush1.msra.mxu0 0.0
    %577 = vmatprep.subr.mxu0 0.0
    %578 = vmatpush1.msra.mxu0 0.0
    %579 = vmatprep.subr.mxu0 0.0
    %580 = vmatpush1.msra.mxu0 0.0
    %581 = vmatprep.subr.mxu0 0.0
    %582 = vmatpush1.msra.mxu0 0.0
    %583 = vmatprep.mubr.f32.mxu0 0.0
    %584 = vmatmul.mubr.f32.gmra.mrb[0].mxu0 %v517
    %v585 = vpop.f32.mrb[0].mxu0
    %v586 = vadd.f32 %v511, %v585
    %v587 = vpop.f32.mrb[0].mxu0
    %588 = vdwg.mxu0
    %v590 = vlaneseq
    %v591 = vshrl.u32 %v590, 7
    %v592 = vsub.s32 0, %v591
    %v593 = vrot.slane %v197, %v592
    %v595 = vadd.f32 %v586, %v593
    %v596 = vmul.f32 %v595, 0.5
    %v597 = vsel %vm182, %v595, %v596
    %v598 = vtanh.pop %v597
    %v599 = vmul.f32 %v598, 0.5
    %v600 = vadd.f32 %v599, 0.5
    %v601 = vsel %vm182, %v598, %v600
    %v602 = vmul.f32 %v601, 0.0
    %604 = vrot.lane.b32.xlu0 %v601, 64
    %v605 = vpop.permute.xlu0 %604
    %v607 = vmul.f32 %v601, %v605
    %609 = vrot.lane.b32.xlu0 %v607, 32
    %v610 = vpop.permute.xlu0 %609
    %v612 = vadd.f32 %v602, %v610
    %v613 = vtanh.pop %v612
    %615 = vrot.lane.b32.xlu0 %v613, 64
    %v616 = vpop.permute.xlu0 %615
    %v618 = vmul.f32 %v601, %v616
    %619 = vmatprep.subr.mxu0 0.0
    %620 = vmatpush1.msra.mxu0 %v188
    %621 = vmatprep.subr.mxu0 0.0
    %622 = vmatpush1.msra.mxu0 %v189
    %623 = vmatprep.subr.mxu0 0.0
    %624 = vmatpush1.msra.mxu0 %v190
    %625 = vmatprep.subr.mxu0 0.0
    %626 = vmatpush1.msra.mxu0 %v191
    %627 = vmatprep.subr.mxu0 0.0
    %628 = vmatpush1.msra.mxu0 0.0
    %629 = vmatprep.subr.mxu0 0.0
    %630 = vmatpush1.msra.mxu0 0.0
    %631 = vmatprep.subr.mxu0 0.0
    %632 = vmatpush1.msra.mxu0 0.0
    %633 = vmatprep.subr.mxu0 0.0
    %634 = vmatpush1.msra.mxu0 0.0
    %635 = vmatprep.subr.mxu0 0.0
    %636 = vmatpush1.msra.mxu0 0.0
    %637 = vmatprep.subr.mxu0 0.0
    %638 = vmatpush1.msra.mxu0 0.0
    %639 = vmatprep.subr.mxu0 0.0
    %640 = vmatpush1.msra.mxu0 0.0
    %641 = vmatprep.subr.mxu0 0.0
    %642 = vmatpush1.msra.mxu0 0.0
    %643 = vmatprep.subr.mxu0 0.0
    %644 = vmatpush1.msra.mxu0 0.0
    %645 = vmatprep.subr.mxu0 0.0
    %646 = vmatpush1.msra.mxu0 0.0
    %647 = vmatprep.subr.mxu0 0.0
    %648 = vmatpush1.msra.mxu0 0.0
    %649 = vmatprep.subr.mxu0 0.0
    %650 = vmatpush1.msra.mxu0 0.0
    %651 = vmatprep.subr.mxu0 0.0
    %652 = vmatpush1.msra.mxu0 0.0
    %653 = vmatprep.subr.mxu0 0.0
    %654 = vmatpush1.msra.mxu0 0.0
    %655 = vmatprep.subr.mxu0 0.0
    %656 = vmatpush1.msra.mxu0 0.0
    %657 = vmatprep.subr.mxu0 0.0
    %658 = vmatpush1.msra.mxu0 0.0
    %659 = vmatprep.subr.mxu0 0.0
    %660 = vmatpush1.msra.mxu0 0.0
    %661 = vmatprep.subr.mxu0 0.0
    %662 = vmatpush1.msra.mxu0 0.0
    %663 = vmatprep.subr.mxu0 0.0
    %664 = vmatpush1.msra.mxu0 0.0
    %665 = vmatprep.subr.mxu0 0.0
    %666 = vmatpush1.msra.mxu0 0.0
    %667 = vmatprep.subr.mxu0 0.0
    %668 = vmatpush1.msra.mxu0 0.0
    %669 = vmatprep.subr.mxu0 0.0
    %670 = vmatpush1.msra.mxu0 0.0
    %671 = vmatprep.subr.mxu0 0.0
    %672 = vmatpush1.msra.mxu0 0.0
    %673 = vmatprep.subr.mxu0 0.0
    %674 = vmatpush1.msra.mxu0 0.0
    %675 = vmatprep.subr.mxu0 0.0
    %676 = vmatpush1.msra.mxu0 0.0
    %677 = vmatprep.subr.mxu0 0.0
    %678 = vmatpush1.msra.mxu0 0.0
    %679 = vmatprep.subr.mxu0 0.0
    %680 = vmatpush1.msra.mxu0 0.0
    %681 = vmatprep.subr.mxu0 0.0
    %682 = vmatpush1.msra.mxu0 0.0
    %683 = vmatprep.mubr.f32.mxu0 0.0
    %684 = vmatmul.mubr.f32.gmra.mrb[0].mxu0 %v517
    %v685 = vpop.f32.mrb[0].mxu0
    %v686 = vadd.f32 0.0, %v685
    %v687 = vpop.f32.mrb[0].mxu0
    %688 = vdwg.mxu0
    %v689 = vadd.f32 %v313, %v686
    %v690 = vmul.f32 %v689, 0.5
    %v691 = vsel %vm182, %v689, %v690
    %v692 = vtanh.pop %v691
    %v693 = vmul.f32 %v692, 0.5
    %v694 = vadd.f32 %v693, 0.5
    %v695 = vsel %vm182, %v692, %v694
    %v696 = vmul.f32 %v695, %v437
    %698 = vrot.lane.b32.xlu0 %v695, 64
    %v699 = vpop.permute.xlu0 %698
    %v701 = vmul.f32 %v695, %v699
    %703 = vrot.lane.b32.xlu0 %v701, 32
    %v704 = vpop.permute.xlu0 %703
    %v706 = vadd.f32 %v696, %v704
    %v707 = vtanh.pop %v706
    %709 = vrot.lane.b32.xlu0 %v707, 64
    %v710 = vpop.permute.xlu0 %709
    %v712 = vmul.f32 %v695, %v710
    %714 = vrot.lane.b32.xlu0 %v618, 32
    %v715 = vpop.permute.xlu0 %714
    %v716 = vsel %vm346, %v715, 0
    %718 = vmatprep.subr.mxu0 0.0
    %719 = vmatpush1.msra.mxu0 %v192
    %720 = vmatprep.subr.mxu0 0.0
    %721 = vmatpush1.msra.mxu0 %v193
    %722 = vmatprep.subr.mxu0 0.0
    %723 = vmatpush1.msra.mxu0 %v194
    %724 = vmatprep.subr.mxu0 0.0
    %725 = vmatpush1.msra.mxu0 %v195
    %726 = vmatprep.subr.mxu0 0.0
    %727 = vmatpush1.msra.mxu0 0.0
    %728 = vmatprep.subr.mxu0 0.0
    %729 = vmatpush1.msra.mxu0 0.0
    %730 = vmatprep.subr.mxu0 0.0
    %731 = vmatpush1.msra.mxu0 0.0
    %732 = vmatprep.subr.mxu0 0.0
    %733 = vmatpush1.msra.mxu0 0.0
    %734 = vmatprep.subr.mxu0 0.0
    %735 = vmatpush1.msra.mxu0 0.0
    %736 = vmatprep.subr.mxu0 0.0
    %737 = vmatpush1.msra.mxu0 0.0
    %738 = vmatprep.subr.mxu0 0.0
    %739 = vmatpush1.msra.mxu0 0.0
    %740 = vmatprep.subr.mxu0 0.0
    %741 = vmatpush1.msra.mxu0 0.0
    %742 = vmatprep.subr.mxu0 0.0
    %743 = vmatpush1.msra.mxu0 0.0
    %744 = vmatprep.subr.mxu0 0.0
    %745 = vmatpush1.msra.mxu0 0.0
    %746 = vmatprep.subr.mxu0 0.0
    %747 = vmatpush1.msra.mxu0 0.0
    %748 = vmatprep.subr.mxu0 0.0
    %749 = vmatpush1.msra.mxu0 0.0
    %750 = vmatprep.subr.mxu0 0.0
    %751 = vmatpush1.msra.mxu0 0.0
    %752 = vmatprep.subr.mxu0 0.0
    %753 = vmatpush1.msra.mxu0 0.0
    %754 = vmatprep.subr.mxu0 0.0
    %755 = vmatpush1.msra.mxu0 0.0
    %756 = vmatprep.subr.mxu0 0.0
    %757 = vmatpush1.msra.mxu0 0.0
    %758 = vmatprep.subr.mxu0 0.0
    %759 = vmatpush1.msra.mxu0 0.0
    %760 = vmatprep.subr.mxu0 0.0
    %761 = vmatpush1.msra.mxu0 0.0
    %762 = vmatprep.subr.mxu0 0.0
    %763 = vmatpush1.msra.mxu0 0.0
    %764 = vmatprep.subr.mxu0 0.0
    %765 = vmatpush1.msra.mxu0 0.0
    %766 = vmatprep.subr.mxu0 0.0
    %767 = vmatpush1.msra.mxu0 0.0
    %768 = vmatprep.subr.mxu0 0.0
    %769 = vmatpush1.msra.mxu0 0.0
    %770 = vmatprep.subr.mxu0 0.0
    %771 = vmatpush1.msra.mxu0 0.0
    %772 = vmatprep.subr.mxu0 0.0
    %773 = vmatpush1.msra.mxu0 0.0
    %774 = vmatprep.subr.mxu0 0.0
    %775 = vmatpush1.msra.mxu0 0.0
    %776 = vmatprep.subr.mxu0 0.0
    %777 = vmatpush1.msra.mxu0 0.0
    %778 = vmatprep.subr.mxu0 0.0
    %779 = vmatpush1.msra.mxu0 0.0
    %780 = vmatprep.subr.mxu0 0.0
    %781 = vmatpush1.msra.mxu0 0.0
    %782 = vmatprep.mubr.f32.mxu0 0.0
    %783 = vmatmul.mubr.f32.gmra.mrb[0].mxu0 %v716
    %v784 = vpop.f32.mrb[0].mxu0
    %v785 = vadd.f32 0.0, %v784
    %v786 = vpop.f32.mrb[0].mxu0
    %787 = vdwg.mxu0
    %789 = vrot.lane.b32.xlu0 %v712, 32
    %v790 = vpop.permute.xlu0 %789
    %v791 = vsel %vm346, %v790, 0
    %793 = vmatprep.subr.mxu0 0.0
    %794 = vmatpush1.msra.mxu0 %v184
    %795 = vmatprep.subr.mxu0 0.0
    %796 = vmatpush1.msra.mxu0 %v185
    %797 = vmatprep.subr.mxu0 0.0
    %798 = vmatpush1.msra.mxu0 %v186
    %799 = vmatprep.subr.mxu0 0.0
    %800 = vmatpush1.msra.mxu0 %v187
    %801 = vmatprep.subr.mxu0 0.0
    %802 = vmatpush1.msra.mxu0 0.0
    %803 = vmatprep.subr.mxu0 0.0
    %804 = vmatpush1.msra.mxu0 0.0
    %805 = vmatprep.subr.mxu0 0.0
    %806 = vmatpush1.msra.mxu0 0.0
    %807 = vmatprep.subr.mxu0 0.0
    %808 = vmatpush1.msra.mxu0 0.0
    %809 = vmatprep.subr.mxu0 0.0
    %810 = vmatpush1.msra.mxu0 0.0
    %811 = vmatprep.subr.mxu0 0.0
    %812 = vmatpush1.msra.mxu0 0.0
    %813 = vmatprep.subr.mxu0 0.0
    %814 = vmatpush1.msra.mxu0 0.0
    %815 = vmatprep.subr.mxu0 0.0
    %816 = vmatpush1.msra.mxu0 0.0
    %817 = vmatprep.subr.mxu0 0.0
    %818 = vmatpush1.msra.mxu0 0.0
    %819 = vmatprep.subr.mxu0 0.0
    %820 = vmatpush1.msra.mxu0 0.0
    %821 = vmatprep.subr.mxu0 0.0
    %822 = vmatpush1.msra.mxu0 0.0
    %823 = vmatprep.subr.mxu0 0.0
    %824 = vmatpush1.msra.mxu0 0.0
    %825 = vmatprep.subr.mxu0 0.0
    %826 = vmatpush1.msra.mxu0 0.0
    %827 = vmatprep.subr.mxu0 0.0
    %828 = vmatpush1.msra.mxu0 0.0
    %829 = vmatprep.subr.mxu0 0.0
    %830 = vmatpush1.msra.mxu0 0.0
    %831 = vmatprep.subr.mxu0 0.0
    %832 = vmatpush1.msra.mxu0 0.0
    %833 = vmatprep.subr.mxu0 0.0
    %834 = vmatpush1.msra.mxu0 0.0
    %835 = vmatprep.subr.mxu0 0.0
    %836 = vmatpush1.msra.mxu0 0.0
    %837 = vmatprep.subr.mxu0 0.0
    %838 = vmatpush1.msra.mxu0 0.0
    %839 = vmatprep.subr.mxu0 0.0
    %840 = vmatpush1.msra.mxu0 0.0
    %841 = vmatprep.subr.mxu0 0.0
    %842 = vmatpush1.msra.mxu0 0.0
    %843 = vmatprep.subr.mxu0 0.0
    %844 = vmatpush1.msra.mxu0 0.0
    %845 = vmatprep.subr.mxu0 0.0
    %846 = vmatpush1.msra.mxu0 0.0
    %847 = vmatprep.subr.mxu0 0.0
    %848 = vmatpush1.msra.mxu0 0.0
    %849 = vmatprep.subr.mxu0 0.0
    %850 = vmatpush1.msra.mxu0 0.0
    %851 = vmatprep.subr.mxu0 0.0
    %852 = vmatpush1.msra.mxu0 0.0
    %853 = vmatprep.subr.mxu0 0.0
    %854 = vmatpush1.msra.mxu0 0.0
    %855 = vmatprep.subr.mxu0 0.0
    %856 = vmatpush1.msra.mxu0 0.0
    %857 = vmatprep.mubr.f32.mxu0 0.0
    %858 = vmatmul.mubr.f32.gmra.mrb[0].mxu0 %v791
    %v859 = vpop.f32.mrb[0].mxu0
    %v860 = vadd.f32 %v785, %v859
    %v861 = vpop.f32.mrb[0].mxu0
    %862 = vdwg.mxu0
    %v863 = vadd.f32 %v860, %v593
    %v864 = vmul.f32 %v863, 0.5
    %v865 = vsel %vm182, %v863, %v864
    %v866 = vtanh.pop %v865
    %v867 = vmul.f32 %v866, 0.5
    %v868 = vadd.f32 %v867, 0.5
    %v869 = vsel %vm182, %v866, %v868
    %v870 = vmul.f32 %v869, %v612
    %872 = vrot.lane.b32.xlu0 %v869, 64
    %v873 = vpop.permute.xlu0 %872
    %v875 = vmul.f32 %v869, %v873
    %877 = vrot.lane.b32.xlu0 %v875, 32
    %v878 = vpop.permute.xlu0 %877
    %v880 = vadd.f32 %v870, %v878
    %v881 = vtanh.pop %v880
    %883 = vrot.lane.b32.xlu0 %v881, 64
    %v884 = vpop.permute.xlu0 %883
    %v886 = vmul.f32 %v869, %v884
    %887 = vmatprep.subr.mxu0 0.0
    %888 = vmatpush1.msra.mxu0 %v188
    %889 = vmatprep.subr.mxu0 0.0
    %890 = vmatpush1.msra.mxu0 %v189
    %891 = vmatprep.subr.mxu0 0.0
    %892 = vmatpush1.msra.mxu0 %v190
    %893 = vmatprep.subr.mxu0 0.0
    %894 = vmatpush1.msra.mxu0 %v191
    %895 = vmatprep.subr.mxu0 0.0
    %896 = vmatpush1.msra.mxu0 0.0
    %897 = vmatprep.subr.mxu0 0.0
    %898 = vmatpush1.msra.mxu0 0.0
    %899 = vmatprep.subr.mxu0 0.0
    %900 = vmatpush1.msra.mxu0 0.0
    %901 = vmatprep.subr.mxu0 0.0
    %902 = vmatpush1.msra.mxu0 0.0
    %903 = vmatprep.subr.mxu0 0.0
    %904 = vmatpush1.msra.mxu0 0.0
    %905 = vmatprep.subr.mxu0 0.0
    %906 = vmatpush1.msra.mxu0 0.0
    %907 = vmatprep.subr.mxu0 0.0
    %908 = vmatpush1.msra.mxu0 0.0
    %909 = vmatprep.subr.mxu0 0.0
    %910 = vmatpush1.msra.mxu0 0.0
    %911 = vmatprep.subr.mxu0 0.0
    %912 = vmatpush1.msra.mxu0 0.0
    %913 = vmatprep.subr.mxu0 0.0
    %914 = vmatpush1.msra.mxu0 0.0
    %915 = vmatprep.subr.mxu0 0.0
    %916 = vmatpush1.msra.mxu0 0.0
    %917 = vmatprep.subr.mxu0 0.0
    %918 = vmatpush1.msra.mxu0 0.0
    %919 = vmatprep.subr.mxu0 0.0
    %920 = vmatpush1.msra.mxu0 0.0
    %921 = vmatprep.subr.mxu0 0.0
    %922 = vmatpush1.msra.mxu0 0.0
    %923 = vmatprep.subr.mxu0 0.0
    %924 = vmatpush1.msra.mxu0 0.0
    %925 = vmatprep.subr.mxu0 0.0
    %926 = vmatpush1.msra.mxu0 0.0
    %927 = vmatprep.subr.mxu0 0.0
    %928 = vmatpush1.msra.mxu0 0.0
    %929 = vmatprep.subr.mxu0 0.0
    %930 = vmatpush1.msra.mxu0 0.0
    %931 = vmatprep.subr.mxu0 0.0
    %932 = vmatpush1.msra.mxu0 0.0
    %933 = vmatprep.subr.mxu0 0.0
    %934 = vmatpush1.msra.mxu0 0.0
    %935 = vmatprep.subr.mxu0 0.0
    %936 = vmatpush1.msra.mxu0 0.0
    %937 = vmatprep.subr.mxu0 0.0
    %938 = vmatpush1.msra.mxu0 0.0
    %939 = vmatprep.subr.mxu0 0.0
    %940 = vmatpush1.msra.mxu0 0.0
    %941 = vmatprep.subr.mxu0 0.0
    %942 = vmatpush1.msra.mxu0 0.0
    %943 = vmatprep.subr.mxu0 0.0
    %944 = vmatpush1.msra.mxu0 0.0
    %945 = vmatprep.subr.mxu0 0.0
    %946 = vmatpush1.msra.mxu0 0.0
    %947 = vmatprep.subr.mxu0 0.0
    %948 = vmatpush1.msra.mxu0 0.0
    %949 = vmatprep.subr.mxu0 0.0
    %950 = vmatpush1.msra.mxu0 0.0
    %951 = vmatprep.mubr.f32.mxu0 0.0
    %952 = vmatmul.mubr.f32.gmra.mrb[0].mxu0 %v791
    %v953 = vpop.f32.mrb[0].mxu0
    %v954 = vadd.f32 0.0, %v953
    %v955 = vpop.f32.mrb[0].mxu0
    %956 = vdwg.mxu0
    %v957 = vadd.f32 %v318, %v954
    %v958 = vmul.f32 %v957, 0.5
    %v959 = vsel %vm182, %v957, %v958
    %v960 = vtanh.pop %v959
    %v961 = vmul.f32 %v960, 0.5
    %v962 = vadd.f32 %v961, 0.5
    %v963 = vsel %vm182, %v960, %v962
    %v964 = vmul.f32 %v963, %v706
    %966 = vrot.lane.b32.xlu0 %v963, 64
    %v967 = vpop.permute.xlu0 %966
    %v969 = vmul.f32 %v963, %v967
    %971 = vrot.lane.b32.xlu0 %v969, 32
    %v972 = vpop.permute.xlu0 %971
    %v974 = vadd.f32 %v964, %v972
    %v975 = vtanh.pop %v974
    %977 = vrot.lane.b32.xlu0 %v975, 64
    %v978 = vpop.permute.xlu0 %977
    %v980 = vmul.f32 %v963, %v978
    %982 = vrot.lane.b32.xlu0 %v886, 32
    %v983 = vpop.permute.xlu0 %982
    %v984 = vsel %vm346, %v983, 0
    %986 = vmatprep.subr.mxu0 0.0
    %987 = vmatpush1.msra.mxu0 %v192
    %988 = vmatprep.subr.mxu0 0.0
    %989 = vmatpush1.msra.mxu0 %v193
    %990 = vmatprep.subr.mxu0 0.0
    %991 = vmatpush1.msra.mxu0 %v194
    %992 = vmatprep.subr.mxu0 0.0
    %993 = vmatpush1.msra.mxu0 %v195
    %994 = vmatprep.subr.mxu0 0.0
    %995 = vmatpush1.msra.mxu0 0.0
    %996 = vmatprep.subr.mxu0 0.0
    %997 = vmatpush1.msra.mxu0 0.0
    %998 = vmatprep.subr.mxu0 0.0
    %999 = vmatpush1.msra.mxu0 0.0
    %1000 = vmatprep.subr.mxu0 0.0
    %1001 = vmatpush1.msra.mxu0 0.0
    %1002 = vmatprep.subr.mxu0 0.0
    %1003 = vmatpush1.msra.mxu0 0.0
    %1004 = vmatprep.subr.mxu0 0.0
    %1005 = vmatpush1.msra.mxu0 0.0
    %1006 = vmatprep.subr.mxu0 0.0
    %1007 = vmatpush1.msra.mxu0 0.0
    %1008 = vmatprep.subr.mxu0 0.0
    %1009 = vmatpush1.msra.mxu0 0.0
    %1010 = vmatprep.subr.mxu0 0.0
    %1011 = vmatpush1.msra.mxu0 0.0
    %1012 = vmatprep.subr.mxu0 0.0
    %1013 = vmatpush1.msra.mxu0 0.0
    %1014 = vmatprep.subr.mxu0 0.0
    %1015 = vmatpush1.msra.mxu0 0.0
    %1016 = vmatprep.subr.mxu0 0.0
    %1017 = vmatpush1.msra.mxu0 0.0
    %1018 = vmatprep.subr.mxu0 0.0
    %1019 = vmatpush1.msra.mxu0 0.0
    %1020 = vmatprep.subr.mxu0 0.0
    %1021 = vmatpush1.msra.mxu0 0.0
    %1022 = vmatprep.subr.mxu0 0.0
    %1023 = vmatpush1.msra.mxu0 0.0
    %1024 = vmatprep.subr.mxu0 0.0
    %1025 = vmatpush1.msra.mxu0 0.0
    %1026 = vmatprep.subr.mxu0 0.0
    %1027 = vmatpush1.msra.mxu0 0.0
    %1028 = vmatprep.subr.mxu0 0.0
    %1029 = vmatpush1.msra.mxu0 0.0
    %1030 = vmatprep.subr.mxu0 0.0
    %1031 = vmatpush1.msra.mxu0 0.0
    %1032 = vmatprep.subr.mxu0 0.0
    %1033 = vmatpush1.msra.mxu0 0.0
    %1034 = vmatprep.subr.mxu0 0.0
    %1035 = vmatpush1.msra.mxu0 0.0
    %1036 = vmatprep.subr.mxu0 0.0
    %1037 = vmatpush1.msra.mxu0 0.0
    %1038 = vmatprep.subr.mxu0 0.0
    %1039 = vmatpush1.msra.mxu0 0.0
    %1040 = vmatprep.subr.mxu0 0.0
    %1041 = vmatpush1.msra.mxu0 0.0
    %1042 = vmatprep.subr.mxu0 0.0
    %1043 = vmatpush1.msra.mxu0 0.0
    %1044 = vmatprep.subr.mxu0 0.0
    %1045 = vmatpush1.msra.mxu0 0.0
    %1046 = vmatprep.subr.mxu0 0.0
    %1047 = vmatpush1.msra.mxu0 0.0
    %1048 = vmatprep.subr.mxu0 0.0
    %1049 = vmatpush1.msra.mxu0 0.0
    %1050 = vmatprep.mubr.f32.mxu0 0.0
    %1051 = vmatmul.mubr.f32.gmra.mrb[0].mxu0 %v984
    %v1052 = vpop.f32.mrb[0].mxu0
    %v1053 = vadd.f32 0.0, %v1052
    %v1054 = vpop.f32.mrb[0].mxu0
    %1055 = vdwg.mxu0
    %1057 = vrot.lane.b32.xlu0 %v980, 32
    %v1058 = vpop.permute.xlu0 %1057
    %v1059 = vsel %vm346, %v1058, 0
    %1061 = vmatprep.subr.mxu0 0.0
    %1062 = vmatpush1.msra.mxu0 %v184
    %1063 = vmatprep.subr.mxu0 0.0
    %1064 = vmatpush1.msra.mxu0 %v185
    %1065 = vmatprep.subr.mxu0 0.0
    %1066 = vmatpush1.msra.mxu0 %v186
    %1067 = vmatprep.subr.mxu0 0.0
    %1068 = vmatpush1.msra.mxu0 %v187
    %1069 = vmatprep.subr.mxu0 0.0
    %1070 = vmatpush1.msra.mxu0 0.0
    %1071 = vmatprep.subr.mxu0 0.0
    %1072 = vmatpush1.msra.mxu0 0.0
    %1073 = vmatprep.subr.mxu0 0.0
    %1074 = vmatpush1.msra.mxu0 0.0
    %1075 = vmatprep.subr.mxu0 0.0
    %1076 = vmatpush1.msra.mxu0 0.0
    %1077 = vmatprep.subr.mxu0 0.0
    %1078 = vmatpush1.msra.mxu0 0.0
    %1079 = vmatprep.subr.mxu0 0.0
    %1080 = vmatpush1.msra.mxu0 0.0
    %1081 = vmatprep.subr.mxu0 0.0
    %1082 = vmatpush1.msra.mxu0 0.0
    %1083 = vmatprep.subr.mxu0 0.0
    %1084 = vmatpush1.msra.mxu0 0.0
    %1085 = vmatprep.subr.mxu0 0.0
    %1086 = vmatpush1.msra.mxu0 0.0
    %1087 = vmatprep.subr.mxu0 0.0
    %1088 = vmatpush1.msra.mxu0 0.0
    %1089 = vmatprep.subr.mxu0 0.0
    %1090 = vmatpush1.msra.mxu0 0.0
    %1091 = vmatprep.subr.mxu0 0.0
    %1092 = vmatpush1.msra.mxu0 0.0
    %1093 = vmatprep.subr.mxu0 0.0
    %1094 = vmatpush1.msra.mxu0 0.0
    %1095 = vmatprep.subr.mxu0 0.0
    %1096 = vmatpush1.msra.mxu0 0.0
    %1097 = vmatprep.subr.mxu0 0.0
    %1098 = vmatpush1.msra.mxu0 0.0
    %1099 = vmatprep.subr.mxu0 0.0
    %1100 = vmatpush1.msra.mxu0 0.0
    %1101 = vmatprep.subr.mxu0 0.0
    %1102 = vmatpush1.msra.mxu0 0.0
    %1103 = vmatprep.subr.mxu0 0.0
    %1104 = vmatpush1.msra.mxu0 0.0
    %1105 = vmatprep.subr.mxu0 0.0
    %1106 = vmatpush1.msra.mxu0 0.0
    %1107 = vmatprep.subr.mxu0 0.0
    %1108 = vmatpush1.msra.mxu0 0.0
    %1109 = vmatprep.subr.mxu0 0.0
    %1110 = vmatpush1.msra.mxu0 0.0
    %1111 = vmatprep.subr.mxu0 0.0
    %1112 = vmatpush1.msra.mxu0 0.0
    %1113 = vmatprep.subr.mxu0 0.0
    %1114 = vmatpush1.msra.mxu0 0.0
    %1115 = vmatprep.subr.mxu0 0.0
    %1116 = vmatpush1.msra.mxu0 0.0
    %1117 = vmatprep.subr.mxu0 0.0
    %1118 = vmatpush1.msra.mxu0 0.0
    %1119 = vmatprep.subr.mxu0 0.0
    %1120 = vmatpush1.msra.mxu0 0.0
    %1121 = vmatprep.subr.mxu0 0.0
    %1122 = vmatpush1.msra.mxu0 0.0
    %1123 = vmatprep.subr.mxu0 0.0
    %1124 = vmatpush1.msra.mxu0 0.0
    %1125 = vmatprep.mubr.f32.mxu0 0.0
    %1126 = vmatmul.mubr.f32.gmra.mrb[0].mxu0 %v1059
    %v1127 = vpop.f32.mrb[0].mxu0
    %v1128 = vadd.f32 %v1053, %v1127
    %v1129 = vpop.f32.mrb[0].mxu0
    %1130 = vdwg.mxu0
    %v1131 = vadd.f32 %v1128, %v593
    %v1132 = vmul.f32 %v1131, 0.5
    %v1133 = vsel %vm182, %v1131, %v1132
    %v1134 = vtanh.pop %v1133
    %v1135 = vmul.f32 %v1134, 0.5
    %v1136 = vadd.f32 %v1135, 0.5
    %v1137 = vsel %vm182, %v1134, %v1136
    %v1138 = vmul.f32 %v1137, %v880
    %1140 = vrot.lane.b32.xlu0 %v1137, 64
    %v1141 = vpop.permute.xlu0 %1140
    %v1143 = vmul.f32 %v1137, %v1141
    %1145 = vrot.lane.b32.xlu0 %v1143, 32
    %v1146 = vpop.permute.xlu0 %1145
    %v1148 = vadd.f32 %v1138, %v1146
    %v1149 = vtanh.pop %v1148
    %1151 = vrot.lane.b32.xlu0 %v1149, 64
    %v1152 = vpop.permute.xlu0 %1151
    %v1154 = vmul.f32 %v1137, %v1152
    %1155 = vmatprep.subr.mxu0 0.0
    %1156 = vmatpush1.msra.mxu0 %v188
    %1157 = vmatprep.subr.mxu0 0.0
    %1158 = vmatpush1.msra.mxu0 %v189
    %1159 = vmatprep.subr.mxu0 0.0
    %1160 = vmatpush1.msra.mxu0 %v190
    %1161 = vmatprep.subr.mxu0 0.0
    %1162 = vmatpush1.msra.mxu0 %v191
    %1163 = vmatprep.subr.mxu0 0.0
    %1164 = vmatpush1.msra.mxu0 0.0
    %1165 = vmatprep.subr.mxu0 0.0
    %1166 = vmatpush1.msra.mxu0 0.0
    %1167 = vmatprep.subr.mxu0 0.0
    %1168 = vmatpush1.msra.mxu0 0.0
    %1169 = vmatprep.subr.mxu0 0.0
    %1170 = vmatpush1.msra.mxu0 0.0
    %1171 = vmatprep.subr.mxu0 0.0
    %1172 = vmatpush1.msra.mxu0 0.0
    %1173 = vmatprep.subr.mxu0 0.0
    %1174 = vmatpush1.msra.mxu0 0.0
    %1175 = vmatprep.subr.mxu0 0.0
    %1176 = vmatpush1.msra.mxu0 0.0
    %1177 = vmatprep.subr.mxu0 0.0
    %1178 = vmatpush1.msra.mxu0 0.0
    %1179 = vmatprep.subr.mxu0 0.0
    %1180 = vmatpush1.msra.mxu0 0.0
    %1181 = vmatprep.subr.mxu0 0.0
    %1182 = vmatpush1.msra.mxu0 0.0
    %1183 = vmatprep.subr.mxu0 0.0
    %1184 = vmatpush1.msra.mxu0 0.0
    %1185 = vmatprep.subr.mxu0 0.0
    %1186 = vmatpush1.msra.mxu0 0.0
    %1187 = vmatprep.subr.mxu0 0.0
    %1188 = vmatpush1.msra.mxu0 0.0
    %1189 = vmatprep.subr.mxu0 0.0
    %1190 = vmatpush1.msra.mxu0 0.0
    %1191 = vmatprep.subr.mxu0 0.0
    %1192 = vmatpush1.msra.mxu0 0.0
    %1193 = vmatprep.subr.mxu0 0.0
    %1194 = vmatpush1.msra.mxu0 0.0
    %1195 = vmatprep.subr.mxu0 0.0
    %1196 = vmatpush1.msra.mxu0 0.0
    %1197 = vmatprep.subr.mxu0 0.0
    %1198 = vmatpush1.msra.mxu0 0.0
    %1199 = vmatprep.subr.mxu0 0.0
    %1200 = vmatpush1.msra.mxu0 0.0
    %1201 = vmatprep.subr.mxu0 0.0
    %1202 = vmatpush1.msra.mxu0 0.0
    %1203 = vmatprep.subr.mxu0 0.0
    %1204 = vmatpush1.msra.mxu0 0.0
    %1205 = vmatprep.subr.mxu0 0.0
    %1206 = vmatpush1.msra.mxu0 0.0
    %1207 = vmatprep.subr.mxu0 0.0
    %1208 = vmatpush1.msra.mxu0 0.0
    %1209 = vmatprep.subr.mxu0 0.0
    %1210 = vmatpush1.msra.mxu0 0.0
    %1211 = vmatprep.subr.mxu0 0.0
    %1212 = vmatpush1.msra.mxu0 0.0
    %1213 = vmatprep.subr.mxu0 0.0
    %1214 = vmatpush1.msra.mxu0 0.0
    %1215 = vmatprep.subr.mxu0 0.0
    %1216 = vmatpush1.msra.mxu0 0.0
    %1217 = vmatprep.subr.mxu0 0.0
    %1218 = vmatpush1.msra.mxu0 0.0
    %1219 = vmatprep.mubr.f32.mxu0 0.0
    %1220 = vmatmul.mubr.f32.gmra.mrb[0].mxu0 %v1059
    %v1221 = vpop.f32.mrb[0].mxu0
    %v1222 = vadd.f32 0.0, %v1221
    %v1223 = vpop.f32.mrb[0].mxu0
    %1224 = vdwg.mxu0
    %v1225 = vadd.f32 %v323, %v1222
    %v1226 = vmul.f32 %v1225, 0.5
    %v1227 = vsel %vm182, %v1225, %v1226
    %v1228 = vtanh.pop %v1227
    %v1229 = vmul.f32 %v1228, 0.5
    %v1230 = vadd.f32 %v1229, 0.5
    %v1231 = vsel %vm182, %v1228, %v1230
    %v1232 = vmul.f32 %v1231, %v974
    %1234 = vrot.lane.b32.xlu0 %v1231, 64
    %v1235 = vpop.permute.xlu0 %1234
    %v1237 = vmul.f32 %v1231, %v1235
    %1239 = vrot.lane.b32.xlu0 %v1237, 32
    %v1240 = vpop.permute.xlu0 %1239
    %v1242 = vadd.f32 %v1232, %v1240
    %v1243 = vtanh.pop %v1242
    %1245 = vrot.lane.b32.xlu0 %v1243, 64
    %v1246 = vpop.permute.xlu0 %1245
    %v1248 = vmul.f32 %v1231, %v1246
    %1250 = vrot.lane.b32.xlu0 %v1154, 32
    %v1251 = vpop.permute.xlu0 %1250
    %v1252 = vsel %vm346, %v1251, 0
    %1254 = vmatprep.subr.mxu0 0.0
    %1255 = vmatpush1.msra.mxu0 %v192
    %1256 = vmatprep.subr.mxu0 0.0
    %1257 = vmatpush1.msra.mxu0 %v193
    %1258 = vmatprep.subr.mxu0 0.0
    %1259 = vmatpush1.msra.mxu0 %v194
    %1260 = vmatprep.subr.mxu0 0.0
    %1261 = vmatpush1.msra.mxu0 %v195
    %1262 = vmatprep.subr.mxu0 0.0
    %1263 = vmatpush1.msra.mxu0 0.0
    %1264 = vmatprep.subr.mxu0 0.0
    %1265 = vmatpush1.msra.mxu0 0.0
    %1266 = vmatprep.subr.mxu0 0.0
    %1267 = vmatpush1.msra.mxu0 0.0
    %1268 = vmatprep.subr.mxu0 0.0
    %1269 = vmatpush1.msra.mxu0 0.0
    %1270 = vmatprep.subr.mxu0 0.0
    %1271 = vmatpush1.msra.mxu0 0.0
    %1272 = vmatprep.subr.mxu0 0.0
    %1273 = vmatpush1.msra.mxu0 0.0
    %1274 = vmatprep.subr.mxu0 0.0
    %1275 = vmatpush1.msra.mxu0 0.0
    %1276 = vmatprep.subr.mxu0 0.0
    %1277 = vmatpush1.msra.mxu0 0.0
    %1278 = vmatprep.subr.mxu0 0.0
    %1279 = vmatpush1.msra.mxu0 0.0
    %1280 = vmatprep.subr.mxu0 0.0
    %1281 = vmatpush1.msra.mxu0 0.0
    %1282 = vmatprep.subr.mxu0 0.0
    %1283 = vmatpush1.msra.mxu0 0.0
    %1284 = vmatprep.subr.mxu0 0.0
    %1285 = vmatpush1.msra.mxu0 0.0
    %1286 = vmatprep.subr.mxu0 0.0
    %1287 = vmatpush1.msra.mxu0 0.0
    %1288 = vmatprep.subr.mxu0 0.0
    %1289 = vmatpush1.msra.mxu0 0.0
    %1290 = vmatprep.subr.mxu0 0.0
    %1291 = vmatpush1.msra.mxu0 0.0
    %1292 = vmatprep.subr.mxu0 0.0
    %1293 = vmatpush1.msra.mxu0 0.0
    %1294 = vmatprep.subr.mxu0 0.0
    %1295 = vmatpush1.msra.mxu0 0.0
    %1296 = vmatprep.subr.mxu0 0.0
    %1297 = vmatpush1.msra.mxu0 0.0
    %1298 = vmatprep.subr.mxu0 0.0
    %1299 = vmatpush1.msra.mxu0 0.0
    %1300 = vmatprep.subr.mxu0 0.0
    %1301 = vmatpush1.msra.mxu0 0.0
    %1302 = vmatprep.subr.mxu0 0.0
    %1303 = vmatpush1.msra.mxu0 0.0
    %1304 = vmatprep.subr.mxu0 0.0
    %1305 = vmatpush1.msra.mxu0 0.0
    %1306 = vmatprep.subr.mxu0 0.0
    %1307 = vmatpush1.msra.mxu0 0.0
    %1308 = vmatprep.subr.mxu0 0.0
    %1309 = vmatpush1.msra.mxu0 0.0
    %1310 = vmatprep.subr.mxu0 0.0
    %1311 = vmatpush1.msra.mxu0 0.0
    %1312 = vmatprep.subr.mxu0 0.0
    %1313 = vmatpush1.msra.mxu0 0.0
    %1314 = vmatprep.subr.mxu0 0.0
    %1315 = vmatpush1.msra.mxu0 0.0
    %1316 = vmatprep.subr.mxu0 0.0
    %1317 = vmatpush1.msra.mxu0 0.0
    %1318 = vmatprep.mubr.f32.mxu0 0.0
    %1319 = vmatmul.mubr.f32.gmra.mrb[0].mxu0 %v1252
    %v1320 = vpop.f32.mrb[0].mxu0
    %v1321 = vadd.f32 0.0, %v1320
    %v1322 = vpop.f32.mrb[0].mxu0
    %1323 = vdwg.mxu0
    %1325 = vrot.lane.b32.xlu0 %v1248, 32
    %v1326 = vpop.permute.xlu0 %1325
    %v1327 = vsel %vm346, %v1326, 0
    %1329 = vmatprep.subr.mxu0 0.0
    %1330 = vmatpush1.msra.mxu0 %v184
    %1331 = vmatprep.subr.mxu0 0.0
    %1332 = vmatpush1.msra.mxu0 %v185
    %1333 = vmatprep.subr.mxu0 0.0
    %1334 = vmatpush1.msra.mxu0 %v186
    %1335 = vmatprep.subr.mxu0 0.0
    %1336 = vmatpush1.msra.mxu0 %v187
    %1337 = vmatprep.subr.mxu0 0.0
    %1338 = vmatpush1.msra.mxu0 0.0
    %1339 = vmatprep.subr.mxu0 0.0
    %1340 = vmatpush1.msra.mxu0 0.0
    %1341 = vmatprep.subr.mxu0 0.0
    %1342 = vmatpush1.msra.mxu0 0.0
    %1343 = vmatprep.subr.mxu0 0.0
    %1344 = vmatpush1.msra.mxu0 0.0
    %1345 = vmatprep.subr.mxu0 0.0
    %1346 = vmatpush1.msra.mxu0 0.0
    %1347 = vmatprep.subr.mxu0 0.0
    %1348 = vmatpush1.msra.mxu0 0.0
    %1349 = vmatprep.subr.mxu0 0.0
    %1350 = vmatpush1.msra.mxu0 0.0
    %1351 = vmatprep.subr.mxu0 0.0
    %1352 = vmatpush1.msra.mxu0 0.0
    %1353 = vmatprep.subr.mxu0 0.0
    %1354 = vmatpush1.msra.mxu0 0.0
    %1355 = vmatprep.subr.mxu0 0.0
    %1356 = vmatpush1.msra.mxu0 0.0
    %1357 = vmatprep.subr.mxu0 0.0
    %1358 = vmatpush1.msra.mxu0 0.0
    %1359 = vmatprep.subr.mxu0 0.0
    %1360 = vmatpush1.msra.mxu0 0.0
    %1361 = vmatprep.subr.mxu0 0.0
    %1362 = vmatpush1.msra.mxu0 0.0
    %1363 = vmatprep.subr.mxu0 0.0
    %1364 = vmatpush1.msra.mxu0 0.0
    %1365 = vmatprep.subr.mxu0 0.0
    %1366 = vmatpush1.msra.mxu0 0.0
    %1367 = vmatprep.subr.mxu0 0.0
    %1368 = vmatpush1.msra.mxu0 0.0
    %1369 = vmatprep.subr.mxu0 0.0
    %1370 = vmatpush1.msra.mxu0 0.0
    %1371 = vmatprep.subr.mxu0 0.0
    %1372 = vmatpush1.msra.mxu0 0.0
    %1373 = vmatprep.subr.mxu0 0.0
    %1374 = vmatpush1.msra.mxu0 0.0
    %1375 = vmatprep.subr.mxu0 0.0
    %1376 = vmatpush1.msra.mxu0 0.0
    %1377 = vmatprep.subr.mxu0 0.0
    %1378 = vmatpush1.msra.mxu0 0.0
    %1379 = vmatprep.subr.mxu0 0.0
    %1380 = vmatpush1.msra.mxu0 0.0
    %1381 = vmatprep.subr.mxu0 0.0
    %1382 = vmatpush1.msra.mxu0 0.0
    %1383 = vmatprep.subr.mxu0 0.0
    %1384 = vmatpush1.msra.mxu0 0.0
    %1385 = vmatprep.subr.mxu0 0.0
    %1386 = vmatpush1.msra.mxu0 0.0
    %1387 = vmatprep.subr.mxu0 0.0
    %1388 = vmatpush1.msra.mxu0 0.0
    %1389 = vmatprep.subr.mxu0 0.0
    %1390 = vmatpush1.msra.mxu0 0.0
    %1391 = vmatprep.subr.mxu0 0.0
    %1392 = vmatpush1.msra.mxu0 0.0
    %1393 = vmatprep.mubr.f32.mxu0 0.0
    %1394 = vmatmul.mubr.f32.gmra.mrb[0].mxu0 %v1327
    %v1395 = vpop.f32.mrb[0].mxu0
    %v1396 = vadd.f32 %v1321, %v1395
    %v1397 = vpop.f32.mrb[0].mxu0
    %1398 = vdwg.mxu0
    %v1399 = vadd.f32 %v1396, %v593
    %v1400 = vmul.f32 %v1399, 0.5
    %v1401 = vsel %vm182, %v1399, %v1400
    %v1402 = vtanh.pop %v1401
    %v1403 = vmul.f32 %v1402, 0.5
    %v1404 = vadd.f32 %v1403, 0.5
    %v1405 = vsel %vm182, %v1402, %v1404
    %v1406 = vmul.f32 %v1405, %v1148
    %1408 = vrot.lane.b32.xlu0 %v1405, 64
    %v1409 = vpop.permute.xlu0 %1408
    %v1411 = vmul.f32 %v1405, %v1409
    %1413 = vrot.lane.b32.xlu0 %v1411, 32
    %v1414 = vpop.permute.xlu0 %1413
    %v1416 = vadd.f32 %v1406, %v1414
    %v1417 = vtanh.pop %v1416
    %1419 = vrot.lane.b32.xlu0 %v1417, 64
    %v1420 = vpop.permute.xlu0 %1419
    %v1422 = vmul.f32 %v1405, %v1420
    %1423 = vmatprep.subr.mxu0 0.0
    %1424 = vmatpush1.msra.mxu0 %v188
    %1425 = vmatprep.subr.mxu0 0.0
    %1426 = vmatpush1.msra.mxu0 %v189
    %1427 = vmatprep.subr.mxu0 0.0
    %1428 = vmatpush1.msra.mxu0 %v190
    %1429 = vmatprep.subr.mxu0 0.0
    %1430 = vmatpush1.msra.mxu0 %v191
    %1431 = vmatprep.subr.mxu0 0.0
    %1432 = vmatpush1.msra.mxu0 0.0
    %1433 = vmatprep.subr.mxu0 0.0
    %1434 = vmatpush1.msra.mxu0 0.0
    %1435 = vmatprep.subr.mxu0 0.0
    %1436 = vmatpush1.msra.mxu0 0.0
    %1437 = vmatprep.subr.mxu0 0.0
    %1438 = vmatpush1.msra.mxu0 0.0
    %1439 = vmatprep.subr.mxu0 0.0
    %1440 = vmatpush1.msra.mxu0 0.0
    %1441 = vmatprep.subr.mxu0 0.0
    %1442 = vmatpush1.msra.mxu0 0.0
    %1443 = vmatprep.subr.mxu0 0.0
    %1444 = vmatpush1.msra.mxu0 0.0
    %1445 = vmatprep.subr.mxu0 0.0
    %1446 = vmatpush1.msra.mxu0 0.0
    %1447 = vmatprep.subr.mxu0 0.0
    %1448 = vmatpush1.msra.mxu0 0.0
    %1449 = vmatprep.subr.mxu0 0.0
    %1450 = vmatpush1.msra.mxu0 0.0
    %1451 = vmatprep.subr.mxu0 0.0
    %1452 = vmatpush1.msra.mxu0 0.0
    %1453 = vmatprep.subr.mxu0 0.0
    %1454 = vmatpush1.msra.mxu0 0.0
    %1455 = vmatprep.subr.mxu0 0.0
    %1456 = vmatpush1.msra.mxu0 0.0
    %1457 = vmatprep.subr.mxu0 0.0
    %1458 = vmatpush1.msra.mxu0 0.0
    %1459 = vmatprep.subr.mxu0 0.0
    %1460 = vmatpush1.msra.mxu0 0.0
    %1461 = vmatprep.subr.mxu0 0.0
    %1462 = vmatpush1.msra.mxu0 0.0
    %1463 = vmatprep.subr.mxu0 0.0
    %1464 = vmatpush1.msra.mxu0 0.0
    %1465 = vmatprep.subr.mxu0 0.0
    %1466 = vmatpush1.msra.mxu0 0.0
    %1467 = vmatprep.subr.mxu0 0.0
    %1468 = vmatpush1.msra.mxu0 0.0
    %1469 = vmatprep.subr.mxu0 0.0
    %1470 = vmatpush1.msra.mxu0 0.0
    %1471 = vmatprep.subr.mxu0 0.0
    %1472 = vmatpush1.msra.mxu0 0.0
    %1473 = vmatprep.subr.mxu0 0.0
    %1474 = vmatpush1.msra.mxu0 0.0
    %1475 = vmatprep.subr.mxu0 0.0
    %1476 = vmatpush1.msra.mxu0 0.0
    %1477 = vmatprep.subr.mxu0 0.0
    %1478 = vmatpush1.msra.mxu0 0.0
    %1479 = vmatprep.subr.mxu0 0.0
    %1480 = vmatpush1.msra.mxu0 0.0
    %1481 = vmatprep.subr.mxu0 0.0
    %1482 = vmatpush1.msra.mxu0 0.0
    %1483 = vmatprep.subr.mxu0 0.0
    %1484 = vmatpush1.msra.mxu0 0.0
    %1485 = vmatprep.subr.mxu0 0.0
    %1486 = vmatpush1.msra.mxu0 0.0
    %1487 = vmatprep.mubr.f32.mxu0 0.0
    %1488 = vmatmul.mubr.f32.gmra.mrb[0].mxu0 %v1327
    %v1489 = vpop.f32.mrb[0].mxu0
    %v1490 = vadd.f32 0.0, %v1489
    %v1491 = vpop.f32.mrb[0].mxu0
    %1492 = vdwg.mxu0
    %v1493 = vadd.f32 %v328, %v1490
    %v1494 = vmul.f32 %v1493, 0.5
    %v1495 = vsel %vm182, %v1493, %v1494
    %v1496 = vtanh.pop %v1495
    %v1497 = vmul.f32 %v1496, 0.5
    %v1498 = vadd.f32 %v1497, 0.5
    %v1499 = vsel %vm182, %v1496, %v1498
    %v1500 = vmul.f32 %v1499, %v1242
    %1502 = vrot.lane.b32.xlu0 %v1499, 64
    %v1503 = vpop.permute.xlu0 %1502
    %v1505 = vmul.f32 %v1499, %v1503
    %1507 = vrot.lane.b32.xlu0 %v1505, 32
    %v1508 = vpop.permute.xlu0 %1507
    %v1510 = vadd.f32 %v1500, %v1508
    %v1511 = vtanh.pop %v1510
    %1513 = vrot.lane.b32.xlu0 %v1511, 64
    %v1514 = vpop.permute.xlu0 %1513
    %v1516 = vmul.f32 %v1499, %v1514
    %1518 = vrot.lane.b32.xlu0 %v1422, 32
    %v1519 = vpop.permute.xlu0 %1518
    %v1520 = vsel %vm346, %v1519, 0
    %1522 = vmatprep.subr.mxu0 0.0
    %1523 = vmatpush1.msra.mxu0 %v192
    %1524 = vmatprep.subr.mxu0 0.0
    %1525 = vmatpush1.msra.mxu0 %v193
    %1526 = vmatprep.subr.mxu0 0.0
    %1527 = vmatpush1.msra.mxu0 %v194
    %1528 = vmatprep.subr.mxu0 0.0
    %1529 = vmatpush1.msra.mxu0 %v195
    %1530 = vmatprep.subr.mxu0 0.0
    %1531 = vmatpush1.msra.mxu0 0.0
    %1532 = vmatprep.subr.mxu0 0.0
    %1533 = vmatpush1.msra.mxu0 0.0
    %1534 = vmatprep.subr.mxu0 0.0
    %1535 = vmatpush1.msra.mxu0 0.0
    %1536 = vmatprep.subr.mxu0 0.0
    %1537 = vmatpush1.msra.mxu0 0.0
    %1538 = vmatprep.subr.mxu0 0.0
    %1539 = vmatpush1.msra.mxu0 0.0
    %1540 = vmatprep.subr.mxu0 0.0
    %1541 = vmatpush1.msra.mxu0 0.0
    %1542 = vmatprep.subr.mxu0 0.0
    %1543 = vmatpush1.msra.mxu0 0.0
    %1544 = vmatprep.subr.mxu0 0.0
    %1545 = vmatpush1.msra.mxu0 0.0
    %1546 = vmatprep.subr.mxu0 0.0
    %1547 = vmatpush1.msra.mxu0 0.0
    %1548 = vmatprep.subr.mxu0 0.0
    %1549 = vmatpush1.msra.mxu0 0.0
    %1550 = vmatprep.subr.mxu0 0.0
    %1551 = vmatpush1.msra.mxu0 0.0
    %1552 = vmatprep.subr.mxu0 0.0
    %1553 = vmatpush1.msra.mxu0 0.0
    %1554 = vmatprep.subr.mxu0 0.0
    %1555 = vmatpush1.msra.mxu0 0.0
    %1556 = vmatprep.subr.mxu0 0.0
    %1557 = vmatpush1.msra.mxu0 0.0
    %1558 = vmatprep.subr.mxu0 0.0
    %1559 = vmatpush1.msra.mxu0 0.0
    %1560 = vmatprep.subr.mxu0 0.0
    %1561 = vmatpush1.msra.mxu0 0.0
    %1562 = vmatprep.subr.mxu0 0.0
    %1563 = vmatpush1.msra.mxu0 0.0
    %1564 = vmatprep.subr.mxu0 0.0
    %1565 = vmatpush1.msra.mxu0 0.0
    %1566 = vmatprep.subr.mxu0 0.0
    %1567 = vmatpush1.msra.mxu0 0.0
    %1568 = vmatprep.subr.mxu0 0.0
    %1569 = vmatpush1.msra.mxu0 0.0
    %1570 = vmatprep.subr.mxu0 0.0
    %1571 = vmatpush1.msra.mxu0 0.0
    %1572 = vmatprep.subr.mxu0 0.0
    %1573 = vmatpush1.msra.mxu0 0.0
    %1574 = vmatprep.subr.mxu0 0.0
    %1575 = vmatpush1.msra.mxu0 0.0
    %1576 = vmatprep.subr.mxu0 0.0
    %1577 = vmatpush1.msra.mxu0 0.0
    %1578 = vmatprep.subr.mxu0 0.0
    %1579 = vmatpush1.msra.mxu0 0.0
    %1580 = vmatprep.subr.mxu0 0.0
    %1581 = vmatpush1.msra.mxu0 0.0
    %1582 = vmatprep.subr.mxu0 0.0
    %1583 = vmatpush1.msra.mxu0 0.0
    %1584 = vmatprep.subr.mxu0 0.0
    %1585 = vmatpush1.msra.mxu0 0.0
    %1586 = vmatprep.mubr.f32.mxu0 0.0
    %1587 = vmatmul.mubr.f32.gmra.mrb[0].mxu0 %v1520
    %v1588 = vpop.f32.mrb[0].mxu0
    %v1589 = vadd.f32 0.0, %v1588
    %v1590 = vpop.f32.mrb[0].mxu0
    %1591 = vdwg.mxu0
    %1593 = vrot.lane.b32.xlu0 %v1516, 32
    %v1594 = vpop.permute.xlu0 %1593
    %v1595 = vsel %vm346, %v1594, 0
    %1597 = vmatprep.subr.mxu0 0.0
    %1598 = vmatpush1.msra.mxu0 %v184
    %1599 = vmatprep.subr.mxu0 0.0
    %1600 = vmatpush1.msra.mxu0 %v185
    %1601 = vmatprep.subr.mxu0 0.0
    %1602 = vmatpush1.msra.mxu0 %v186
    %1603 = vmatprep.subr.mxu0 0.0
    %1604 = vmatpush1.msra.mxu0 %v187
    %1605 = vmatprep.subr.mxu0 0.0
    %1606 = vmatpush1.msra.mxu0 0.0
    %1607 = vmatprep.subr.mxu0 0.0
    %1608 = vmatpush1.msra.mxu0 0.0
    %1609 = vmatprep.subr.mxu0 0.0
    %1610 = vmatpush1.msra.mxu0 0.0
    %1611 = vmatprep.subr.mxu0 0.0
    %1612 = vmatpush1.msra.mxu0 0.0
    %1613 = vmatprep.subr.mxu0 0.0
    %1614 = vmatpush1.msra.mxu0 0.0
    %1615 = vmatprep.subr.mxu0 0.0
    %1616 = vmatpush1.msra.mxu0 0.0
    %1617 = vmatprep.subr.mxu0 0.0
    %1618 = vmatpush1.msra.mxu0 0.0
    %1619 = vmatprep.subr.mxu0 0.0
    %1620 = vmatpush1.msra.mxu0 0.0
    %1621 = vmatprep.subr.mxu0 0.0
    %1622 = vmatpush1.msra.mxu0 0.0
    %1623 = vmatprep.subr.mxu0 0.0
    %1624 = vmatpush1.msra.mxu0 0.0
    %1625 = vmatprep.subr.mxu0 0.0
    %1626 = vmatpush1.msra.mxu0 0.0
    %1627 = vmatprep.subr.mxu0 0.0
    %1628 = vmatpush1.msra.mxu0 0.0
    %1629 = vmatprep.subr.mxu0 0.0
    %1630 = vmatpush1.msra.mxu0 0.0
    %1631 = vmatprep.subr.mxu0 0.0
    %1632 = vmatpush1.msra.mxu0 0.0
    %1633 = vmatprep.subr.mxu0 0.0
    %1634 = vmatpush1.msra.mxu0 0.0
    %1635 = vmatprep.subr.mxu0 0.0
    %1636 = vmatpush1.msra.mxu0 0.0
    %1637 = vmatprep.subr.mxu0 0.0
    %1638 = vmatpush1.msra.mxu0 0.0
    %1639 = vmatprep.subr.mxu0 0.0
    %1640 = vmatpush1.msra.mxu0 0.0
    %1641 = vmatprep.subr.mxu0 0.0
    %1642 = vmatpush1.msra.mxu0 0.0
    %1643 = vmatprep.subr.mxu0 0.0
    %1644 = vmatpush1.msra.mxu0 0.0
    %1645 = vmatprep.subr.mxu0 0.0
    %1646 = vmatpush1.msra.mxu0 0.0
    %1647 = vmatprep.subr.mxu0 0.0
    %1648 = vmatpush1.msra.mxu0 0.0
    %1649 = vmatprep.subr.mxu0 0.0
    %1650 = vmatpush1.msra.mxu0 0.0
    %1651 = vmatprep.subr.mxu0 0.0
    %1652 = vmatpush1.msra.mxu0 0.0
    %1653 = vmatprep.subr.mxu0 0.0
    %1654 = vmatpush1.msra.mxu0 0.0
    %1655 = vmatprep.subr.mxu0 0.0
    %1656 = vmatpush1.msra.mxu0 0.0
    %1657 = vmatprep.subr.mxu0 0.0
    %1658 = vmatpush1.msra.mxu0 0.0
    %1659 = vmatprep.subr.mxu0 0.0
    %1660 = vmatpush1.msra.mxu0 0.0
    %1661 = vmatprep.mubr.f32.mxu0 0.0
    %1662 = vmatmul.mubr.f32.gmra.mrb[0].mxu0 %v1595
    %v1663 = vpop.f32.mrb[0].mxu0
    %v1664 = vadd.f32 %v1589, %v1663
    %v1665 = vpop.f32.mrb[0].mxu0
    %1666 = vdwg.mxu0
    %v1667 = vadd.f32 %v1664, %v593
    %v1668 = vmul.f32 %v1667, 0.5
    %v1669 = vsel %vm182, %v1667, %v1668
    %v1670 = vtanh.pop %v1669
    %v1671 = vmul.f32 %v1670, 0.5
    %v1672 = vadd.f32 %v1671, 0.5
    %v1673 = vsel %vm182, %v1670, %v1672
    %v1674 = vmul.f32 %v1673, %v1416
    %1676 = vrot.lane.b32.xlu0 %v1673, 64
    %v1677 = vpop.permute.xlu0 %1676
    %v1679 = vmul.f32 %v1673, %v1677
    %1681 = vrot.lane.b32.xlu0 %v1679, 32
    %v1682 = vpop.permute.xlu0 %1681
    %v1684 = vadd.f32 %v1674, %v1682
    %v1685 = vtanh.pop %v1684
    %1687 = vrot.lane.b32.xlu0 %v1685, 64
    %v1688 = vpop.permute.xlu0 %1687
    %v1690 = vmul.f32 %v1673, %v1688
    %1691 = vmatprep.subr.mxu0 0.0
    %1692 = vmatpush1.msra.mxu0 %v188
    %1693 = vmatprep.subr.mxu0 0.0
    %1694 = vmatpush1.msra.mxu0 %v189
    %1695 = vmatprep.subr.mxu0 0.0
    %1696 = vmatpush1.msra.mxu0 %v190
    %1697 = vmatprep.subr.mxu0 0.0
    %1698 = vmatpush1.msra.mxu0 %v191
    %1699 = vmatprep.subr.mxu0 0.0
    %1700 = vmatpush1.msra.mxu0 0.0
    %1701 = vmatprep.subr.mxu0 0.0
    %1702 = vmatpush1.msra.mxu0 0.0
    %1703 = vmatprep.subr.mxu0 0.0
    %1704 = vmatpush1.msra.mxu0 0.0
    %1705 = vmatprep.subr.mxu0 0.0
    %1706 = vmatpush1.msra.mxu0 0.0
    %1707 = vmatprep.subr.mxu0 0.0
    %1708 = vmatpush1.msra.mxu0 0.0
    %1709 = vmatprep.subr.mxu0 0.0
    %1710 = vmatpush1.msra.mxu0 0.0
    %1711 = vmatprep.subr.mxu0 0.0
    %1712 = vmatpush1.msra.mxu0 0.0
    %1713 = vmatprep.subr.mxu0 0.0
    %1714 = vmatpush1.msra.mxu0 0.0
    %1715 = vmatprep.subr.mxu0 0.0
    %1716 = vmatpush1.msra.mxu0 0.0
    %1717 = vmatprep.subr.mxu0 0.0
    %1718 = vmatpush1.msra.mxu0 0.0
    %1719 = vmatprep.subr.mxu0 0.0
    %1720 = vmatpush1.msra.mxu0 0.0
    %1721 = vmatprep.subr.mxu0 0.0
    %1722 = vmatpush1.msra.mxu0 0.0
    %1723 = vmatprep.subr.mxu0 0.0
    %1724 = vmatpush1.msra.mxu0 0.0
    %1725 = vmatprep.subr.mxu0 0.0
    %1726 = vmatpush1.msra.mxu0 0.0
    %1727 = vmatprep.subr.mxu0 0.0
    %1728 = vmatpush1.msra.mxu0 0.0
    %1729 = vmatprep.subr.mxu0 0.0
    %1730 = vmatpush1.msra.mxu0 0.0
    %1731 = vmatprep.subr.mxu0 0.0
    %1732 = vmatpush1.msra.mxu0 0.0
    %1733 = vmatprep.subr.mxu0 0.0
    %1734 = vmatpush1.msra.mxu0 0.0
    %1735 = vmatprep.subr.mxu0 0.0
    %1736 = vmatpush1.msra.mxu0 0.0
    %1737 = vmatprep.subr.mxu0 0.0
    %1738 = vmatpush1.msra.mxu0 0.0
    %1739 = vmatprep.subr.mxu0 0.0
    %1740 = vmatpush1.msra.mxu0 0.0
    %1741 = vmatprep.subr.mxu0 0.0
    %1742 = vmatpush1.msra.mxu0 0.0
    %1743 = vmatprep.subr.mxu0 0.0
    %1744 = vmatpush1.msra.mxu0 0.0
    %1745 = vmatprep.subr.mxu0 0.0
    %1746 = vmatpush1.msra.mxu0 0.0
    %1747 = vmatprep.subr.mxu0 0.0
    %1748 = vmatpush1.msra.mxu0 0.0
    %1749 = vmatprep.subr.mxu0 0.0
    %1750 = vmatpush1.msra.mxu0 0.0
    %1751 = vmatprep.subr.mxu0 0.0
    %1752 = vmatpush1.msra.mxu0 0.0
    %1753 = vmatprep.subr.mxu0 0.0
    %1754 = vmatpush1.msra.mxu0 0.0
    %1755 = vmatprep.mubr.f32.mxu0 0.0
    %1756 = vmatmul.mubr.f32.gmra.mrb[0].mxu0 %v1595
    %v1757 = vpop.f32.mrb[0].mxu0
    %v1758 = vadd.f32 0.0, %v1757
    %v1759 = vpop.f32.mrb[0].mxu0
    %1760 = vdwg.mxu0
    %v1761 = vadd.f32 %v333, %v1758
    %v1762 = vmul.f32 %v1761, 0.5
    %v1763 = vsel %vm182, %v1761, %v1762
    %v1764 = vtanh.pop %v1763
    %v1765 = vmul.f32 %v1764, 0.5
    %v1766 = vadd.f32 %v1765, 0.5
    %v1767 = vsel %vm182, %v1764, %v1766
    %v1768 = vmul.f32 %v1767, %v1510
    %1770 = vrot.lane.b32.xlu0 %v1767, 64
    %v1771 = vpop.permute.xlu0 %1770
    %v1773 = vmul.f32 %v1767, %v1771
    %1775 = vrot.lane.b32.xlu0 %v1773, 32
    %v1776 = vpop.permute.xlu0 %1775
    %v1778 = vadd.f32 %v1768, %v1776
    %v1779 = vtanh.pop %v1778
    %1781 = vrot.lane.b32.xlu0 %v1779, 64
    %v1782 = vpop.permute.xlu0 %1781
    %v1784 = vmul.f32 %v1767, %v1782
    %1786 = vrot.lane.b32.xlu0 %v1690, 32
    %v1787 = vpop.permute.xlu0 %1786
    %v1788 = vsel %vm346, %v1787, 0
    %1790 = vmatprep.subr.mxu0 0.0
    %1791 = vmatpush1.msra.mxu0 %v192
    %1792 = vmatprep.subr.mxu0 0.0
    %1793 = vmatpush1.msra.mxu0 %v193
    %1794 = vmatprep.subr.mxu0 0.0
    %1795 = vmatpush1.msra.mxu0 %v194
    %1796 = vmatprep.subr.mxu0 0.0
    %1797 = vmatpush1.msra.mxu0 %v195
    %1798 = vmatprep.subr.mxu0 0.0
    %1799 = vmatpush1.msra.mxu0 0.0
    %1800 = vmatprep.subr.mxu0 0.0
    %1801 = vmatpush1.msra.mxu0 0.0
    %1802 = vmatprep.subr.mxu0 0.0
    %1803 = vmatpush1.msra.mxu0 0.0
    %1804 = vmatprep.subr.mxu0 0.0
    %1805 = vmatpush1.msra.mxu0 0.0
    %1806 = vmatprep.subr.mxu0 0.0
    %1807 = vmatpush1.msra.mxu0 0.0
    %1808 = vmatprep.subr.mxu0 0.0
    %1809 = vmatpush1.msra.mxu0 0.0
    %1810 = vmatprep.subr.mxu0 0.0
    %1811 = vmatpush1.msra.mxu0 0.0
    %1812 = vmatprep.subr.mxu0 0.0
    %1813 = vmatpush1.msra.mxu0 0.0
    %1814 = vmatprep.subr.mxu0 0.0
    %1815 = vmatpush1.msra.mxu0 0.0
    %1816 = vmatprep.subr.mxu0 0.0
    %1817 = vmatpush1.msra.mxu0 0.0
    %1818 = vmatprep.subr.mxu0 0.0
    %1819 = vmatpush1.msra.mxu0 0.0
    %1820 = vmatprep.subr.mxu0 0.0
    %1821 = vmatpush1.msra.mxu0 0.0
    %1822 = vmatprep.subr.mxu0 0.0
    %1823 = vmatpush1.msra.mxu0 0.0
    %1824 = vmatprep.subr.mxu0 0.0
    %1825 = vmatpush1.msra.mxu0 0.0
    %1826 = vmatprep.subr.mxu0 0.0
    %1827 = vmatpush1.msra.mxu0 0.0
    %1828 = vmatprep.subr.mxu0 0.0
    %1829 = vmatpush1.msra.mxu0 0.0
    %1830 = vmatprep.subr.mxu0 0.0
    %1831 = vmatpush1.msra.mxu0 0.0
    %1832 = vmatprep.subr.mxu0 0.0
    %1833 = vmatpush1.msra.mxu0 0.0
    %1834 = vmatprep.subr.mxu0 0.0
    %1835 = vmatpush1.msra.mxu0 0.0
    %1836 = vmatprep.subr.mxu0 0.0
    %1837 = vmatpush1.msra.mxu0 0.0
    %1838 = vmatprep.subr.mxu0 0.0
    %1839 = vmatpush1.msra.mxu0 0.0
    %1840 = vmatprep.subr.mxu0 0.0
    %1841 = vmatpush1.msra.mxu0 0.0
    %1842 = vmatprep.subr.mxu0 0.0
    %1843 = vmatpush1.msra.mxu0 0.0
    %1844 = vmatprep.subr.mxu0 0.0
    %1845 = vmatpush1.msra.mxu0 0.0
    %1846 = vmatprep.subr.mxu0 0.0
    %1847 = vmatpush1.msra.mxu0 0.0
    %1848 = vmatprep.subr.mxu0 0.0
    %1849 = vmatpush1.msra.mxu0 0.0
    %1850 = vmatprep.subr.mxu0 0.0
    %1851 = vmatpush1.msra.mxu0 0.0
    %1852 = vmatprep.subr.mxu0 0.0
    %1853 = vmatpush1.msra.mxu0 0.0
    %1854 = vmatprep.mubr.f32.mxu0 0.0
    %1855 = vmatmul.mubr.f32.gmra.mrb[0].mxu0 %v1788
    %v1856 = vpop.f32.mrb[0].mxu0
    %v1857 = vadd.f32 0.0, %v1856
    %v1858 = vpop.f32.mrb[0].mxu0
    %1859 = vdwg.mxu0
    %1861 = vrot.lane.b32.xlu0 %v1784, 32
    %v1862 = vpop.permute.xlu0 %1861
    %v1863 = vsel %vm346, %v1862, 0
    %1865 = vmatprep.subr.mxu0 0.0
    %1866 = vmatpush1.msra.mxu0 %v184
    %1867 = vmatprep.subr.mxu0 0.0
    %1868 = vmatpush1.msra.mxu0 %v185
    %1869 = vmatprep.subr.mxu0 0.0
    %1870 = vmatpush1.msra.mxu0 %v186
    %1871 = vmatprep.subr.mxu0 0.0
    %1872 = vmatpush1.msra.mxu0 %v187
    %1873 = vmatprep.subr.mxu0 0.0
    %1874 = vmatpush1.msra.mxu0 0.0
    %1875 = vmatprep.subr.mxu0 0.0
    %1876 = vmatpush1.msra.mxu0 0.0
    %1877 = vmatprep.subr.mxu0 0.0
    %1878 = vmatpush1.msra.mxu0 0.0
    %1879 = vmatprep.subr.mxu0 0.0
    %1880 = vmatpush1.msra.mxu0 0.0
    %1881 = vmatprep.subr.mxu0 0.0
    %1882 = vmatpush1.msra.mxu0 0.0
    %1883 = vmatprep.subr.mxu0 0.0
    %1884 = vmatpush1.msra.mxu0 0.0
    %1885 = vmatprep.subr.mxu0 0.0
    %1886 = vmatpush1.msra.mxu0 0.0
    %1887 = vmatprep.subr.mxu0 0.0
    %1888 = vmatpush1.msra.mxu0 0.0
    %1889 = vmatprep.subr.mxu0 0.0
    %1890 = vmatpush1.msra.mxu0 0.0
    %1891 = vmatprep.subr.mxu0 0.0
    %1892 = vmatpush1.msra.mxu0 0.0
    %1893 = vmatprep.subr.mxu0 0.0
    %1894 = vmatpush1.msra.mxu0 0.0
    %1895 = vmatprep.subr.mxu0 0.0
    %1896 = vmatpush1.msra.mxu0 0.0
    %1897 = vmatprep.subr.mxu0 0.0
    %1898 = vmatpush1.msra.mxu0 0.0
    %1899 = vmatprep.subr.mxu0 0.0
    %1900 = vmatpush1.msra.mxu0 0.0
    %1901 = vmatprep.subr.mxu0 0.0
    %1902 = vmatpush1.msra.mxu0 0.0
    %1903 = vmatprep.subr.mxu0 0.0
    %1904 = vmatpush1.msra.mxu0 0.0
    %1905 = vmatprep.subr.mxu0 0.0
    %1906 = vmatpush1.msra.mxu0 0.0
    %1907 = vmatprep.subr.mxu0 0.0
    %1908 = vmatpush1.msra.mxu0 0.0
    %1909 = vmatprep.subr.mxu0 0.0
    %1910 = vmatpush1.msra.mxu0 0.0
    %1911 = vmatprep.subr.mxu0 0.0
    %1912 = vmatpush1.msra.mxu0 0.0
    %1913 = vmatprep.subr.mxu0 0.0
    %1914 = vmatpush1.msra.mxu0 0.0
    %1915 = vmatprep.subr.mxu0 0.0
    %1916 = vmatpush1.msra.mxu0 0.0
    %1917 = vmatprep.subr.mxu0 0.0
    %1918 = vmatpush1.msra.mxu0 0.0
    %1919 = vmatprep.subr.mxu0 0.0
    %1920 = vmatpush1.msra.mxu0 0.0
    %1921 = vmatprep.subr.mxu0 0.0
    %1922 = vmatpush1.msra.mxu0 0.0
    %1923 = vmatprep.subr.mxu0 0.0
    %1924 = vmatpush1.msra.mxu0 0.0
    %1925 = vmatprep.subr.mxu0 0.0
    %1926 = vmatpush1.msra.mxu0 0.0
    %1927 = vmatprep.subr.mxu0 0.0
    %1928 = vmatpush1.msra.mxu0 0.0
    %1929 = vmatprep.mubr.f32.mxu0 0.0
    %1930 = vmatmul.mubr.f32.gmra.mrb[0].mxu0 %v1863
    %v1931 = vpop.f32.mrb[0].mxu0
    %v1932 = vadd.f32 %v1857, %v1931
    %v1933 = vpop.f32.mrb[0].mxu0
    %1934 = vdwg.mxu0
    %v1935 = vadd.f32 %v1932, %v593
    %v1936 = vmul.f32 %v1935, 0.5
    %v1937 = vsel %vm182, %v1935, %v1936
    %v1938 = vtanh.pop %v1937
    %v1939 = vmul.f32 %v1938, 0.5
    %v1940 = vadd.f32 %v1939, 0.5
    %v1941 = vsel %vm182, %v1938, %v1940
    %v1942 = vmul.f32 %v1941, %v1684
    %1944 = vrot.lane.b32.xlu0 %v1941, 64
    %v1945 = vpop.permute.xlu0 %1944
    %v1947 = vmul.f32 %v1941, %v1945
    %1949 = vrot.lane.b32.xlu0 %v1947, 32
    %v1950 = vpop.permute.xlu0 %1949
    %v1952 = vadd.f32 %v1942, %v1950
    %v1953 = vtanh.pop %v1952
    %1955 = vrot.lane.b32.xlu0 %v1953, 64
    %v1956 = vpop.permute.xlu0 %1955
    %v1958 = vmul.f32 %v1941, %v1956
    %1959 = vmatprep.subr.mxu0 0.0
    %1960 = vmatpush1.msra.mxu0 %v188
    %1961 = vmatprep.subr.mxu0 0.0
    %1962 = vmatpush1.msra.mxu0 %v189
    %1963 = vmatprep.subr.mxu0 0.0
    %1964 = vmatpush1.msra.mxu0 %v190
    %1965 = vmatprep.subr.mxu0 0.0
    %1966 = vmatpush1.msra.mxu0 %v191
    %1967 = vmatprep.subr.mxu0 0.0
    %1968 = vmatpush1.msra.mxu0 0.0
    %1969 = vmatprep.subr.mxu0 0.0
    %1970 = vmatpush1.msra.mxu0 0.0
    %1971 = vmatprep.subr.mxu0 0.0
    %1972 = vmatpush1.msra.mxu0 0.0
    %1973 = vmatprep.subr.mxu0 0.0
    %1974 = vmatpush1.msra.mxu0 0.0
    %1975 = vmatprep.subr.mxu0 0.0
    %1976 = vmatpush1.msra.mxu0 0.0
    %1977 = vmatprep.subr.mxu0 0.0
    %1978 = vmatpush1.msra.mxu0 0.0
    %1979 = vmatprep.subr.mxu0 0.0
    %1980 = vmatpush1.msra.mxu0 0.0
    %1981 = vmatprep.subr.mxu0 0.0
    %1982 = vmatpush1.msra.mxu0 0.0
    %1983 = vmatprep.subr.mxu0 0.0
    %1984 = vmatpush1.msra.mxu0 0.0
    %1985 = vmatprep.subr.mxu0 0.0
    %1986 = vmatpush1.msra.mxu0 0.0
    %1987 = vmatprep.subr.mxu0 0.0
    %1988 = vmatpush1.msra.mxu0 0.0
    %1989 = vmatprep.subr.mxu0 0.0
    %1990 = vmatpush1.msra.mxu0 0.0
    %1991 = vmatprep.subr.mxu0 0.0
    %1992 = vmatpush1.msra.mxu0 0.0
    %1993 = vmatprep.subr.mxu0 0.0
    %1994 = vmatpush1.msra.mxu0 0.0
    %1995 = vmatprep.subr.mxu0 0.0
    %1996 = vmatpush1.msra.mxu0 0.0
    %1997 = vmatprep.subr.mxu0 0.0
    %1998 = vmatpush1.msra.mxu0 0.0
    %1999 = vmatprep.subr.mxu0 0.0
    %2000 = vmatpush1.msra.mxu0 0.0
    %2001 = vmatprep.subr.mxu0 0.0
    %2002 = vmatpush1.msra.mxu0 0.0
    %2003 = vmatprep.subr.mxu0 0.0
    %2004 = vmatpush1.msra.mxu0 0.0
    %2005 = vmatprep.subr.mxu0 0.0
    %2006 = vmatpush1.msra.mxu0 0.0
    %2007 = vmatprep.subr.mxu0 0.0
    %2008 = vmatpush1.msra.mxu0 0.0
    %2009 = vmatprep.subr.mxu0 0.0
    %2010 = vmatpush1.msra.mxu0 0.0
    %2011 = vmatprep.subr.mxu0 0.0
    %2012 = vmatpush1.msra.mxu0 0.0
    %2013 = vmatprep.subr.mxu0 0.0
    %2014 = vmatpush1.msra.mxu0 0.0
    %2015 = vmatprep.subr.mxu0 0.0
    %2016 = vmatpush1.msra.mxu0 0.0
    %2017 = vmatprep.subr.mxu0 0.0
    %2018 = vmatpush1.msra.mxu0 0.0
    %2019 = vmatprep.subr.mxu0 0.0
    %2020 = vmatpush1.msra.mxu0 0.0
    %2021 = vmatprep.subr.mxu0 0.0
    %2022 = vmatpush1.msra.mxu0 0.0
    %2023 = vmatprep.mubr.f32.mxu0 0.0
    %2024 = vmatmul.mubr.f32.gmra.mrb[0].mxu0 %v1863
    %v2025 = vpop.f32.mrb[0].mxu0
    %v2026 = vadd.f32 0.0, %v2025
    %v2027 = vpop.f32.mrb[0].mxu0
    %2028 = vdwg.mxu0
    %v2029 = vadd.f32 %v338, %v2026
    %v2030 = vmul.f32 %v2029, 0.5
    %v2031 = vsel %vm182, %v2029, %v2030
    %v2032 = vtanh.pop %v2031
    %v2033 = vmul.f32 %v2032, 0.5
    %v2034 = vadd.f32 %v2033, 0.5
    %v2035 = vsel %vm182, %v2032, %v2034
    %v2036 = vmul.f32 %v2035, %v1778
    %2038 = vrot.lane.b32.xlu0 %v2035, 64
    %v2039 = vpop.permute.xlu0 %2038
    %v2041 = vmul.f32 %v2035, %v2039
    %2043 = vrot.lane.b32.xlu0 %v2041, 32
    %v2044 = vpop.permute.xlu0 %2043
    %v2046 = vadd.f32 %v2036, %v2044
    %v2047 = vtanh.pop %v2046
    %2049 = vrot.lane.b32.xlu0 %v2047, 64
    %v2050 = vpop.permute.xlu0 %2049
    %v2052 = vmul.f32 %v2035, %v2050
    %2054 = vrot.lane.b32.xlu0 %v1958, 32
    %v2055 = vpop.permute.xlu0 %2054
    %v2056 = vsel %vm346, %v2055, 0
    %2058 = vmatprep.subr.mxu0 0.0
    %2059 = vmatpush1.msra.mxu0 %v192
    %2060 = vmatprep.subr.mxu0 0.0
    %2061 = vmatpush1.msra.mxu0 %v193
    %2062 = vmatprep.subr.mxu0 0.0
    %2063 = vmatpush1.msra.mxu0 %v194
    %2064 = vmatprep.subr.mxu0 0.0
    %2065 = vmatpush1.msra.mxu0 %v195
    %2066 = vmatprep.subr.mxu0 0.0
    %2067 = vmatpush1.msra.mxu0 0.0
    %2068 = vmatprep.subr.mxu0 0.0
    %2069 = vmatpush1.msra.mxu0 0.0
    %2070 = vmatprep.subr.mxu0 0.0
    %2071 = vmatpush1.msra.mxu0 0.0
    %2072 = vmatprep.subr.mxu0 0.0
    %2073 = vmatpush1.msra.mxu0 0.0
    %2074 = vmatprep.subr.mxu0 0.0
    %2075 = vmatpush1.msra.mxu0 0.0
    %2076 = vmatprep.subr.mxu0 0.0
    %2077 = vmatpush1.msra.mxu0 0.0
    %2078 = vmatprep.subr.mxu0 0.0
    %2079 = vmatpush1.msra.mxu0 0.0
    %2080 = vmatprep.subr.mxu0 0.0
    %2081 = vmatpush1.msra.mxu0 0.0
    %2082 = vmatprep.subr.mxu0 0.0
    %2083 = vmatpush1.msra.mxu0 0.0
    %2084 = vmatprep.subr.mxu0 0.0
    %2085 = vmatpush1.msra.mxu0 0.0
    %2086 = vmatprep.subr.mxu0 0.0
    %2087 = vmatpush1.msra.mxu0 0.0
    %2088 = vmatprep.subr.mxu0 0.0
    %2089 = vmatpush1.msra.mxu0 0.0
    %2090 = vmatprep.subr.mxu0 0.0
    %2091 = vmatpush1.msra.mxu0 0.0
    %2092 = vmatprep.subr.mxu0 0.0
    %2093 = vmatpush1.msra.mxu0 0.0
    %2094 = vmatprep.subr.mxu0 0.0
    %2095 = vmatpush1.msra.mxu0 0.0
    %2096 = vmatprep.subr.mxu0 0.0
    %2097 = vmatpush1.msra.mxu0 0.0
    %2098 = vmatprep.subr.mxu0 0.0
    %2099 = vmatpush1.msra.mxu0 0.0
    %2100 = vmatprep.subr.mxu0 0.0
    %2101 = vmatpush1.msra.mxu0 0.0
    %2102 = vmatprep.subr.mxu0 0.0
    %2103 = vmatpush1.msra.mxu0 0.0
    %2104 = vmatprep.subr.mxu0 0.0
    %2105 = vmatpush1.msra.mxu0 0.0
    %2106 = vmatprep.subr.mxu0 0.0
    %2107 = vmatpush1.msra.mxu0 0.0
    %2108 = vmatprep.subr.mxu0 0.0
    %2109 = vmatpush1.msra.mxu0 0.0
    %2110 = vmatprep.subr.mxu0 0.0
    %2111 = vmatpush1.msra.mxu0 0.0
    %2112 = vmatprep.subr.mxu0 0.0
    %2113 = vmatpush1.msra.mxu0 0.0
    %2114 = vmatprep.subr.mxu0 0.0
    %2115 = vmatpush1.msra.mxu0 0.0
    %2116 = vmatprep.subr.mxu0 0.0
    %2117 = vmatpush1.msra.mxu0 0.0
    %2118 = vmatprep.subr.mxu0 0.0
    %2119 = vmatpush1.msra.mxu0 0.0
    %2120 = vmatprep.subr.mxu0 0.0
    %2121 = vmatpush1.msra.mxu0 0.0
    %2122 = vmatprep.mubr.f32.mxu0 0.0
    %2123 = vmatmul.mubr.f32.gmra.mrb[0].mxu0 %v2056
    %v2124 = vpop.f32.mrb[0].mxu0
    %v2125 = vadd.f32 0.0, %v2124
    %v2126 = vpop.f32.mrb[0].mxu0
    %2127 = vdwg.mxu0
    %2129 = vrot.lane.b32.xlu0 %v2052, 32
    %v2130 = vpop.permute.xlu0 %2129
    %v2131 = vsel %vm346, %v2130, 0
    %2133 = vmatprep.subr.mxu0 0.0
    %2134 = vmatpush1.msra.mxu0 %v184
    %2135 = vmatprep.subr.mxu0 0.0
    %2136 = vmatpush1.msra.mxu0 %v185
    %2137 = vmatprep.subr.mxu0 0.0
    %2138 = vmatpush1.msra.mxu0 %v186
    %2139 = vmatprep.subr.mxu0 0.0
    %2140 = vmatpush1.msra.mxu0 %v187
    %2141 = vmatprep.subr.mxu0 0.0
    %2142 = vmatpush1.msra.mxu0 0.0
    %2143 = vmatprep.subr.mxu0 0.0
    %2144 = vmatpush1.msra.mxu0 0.0
    %2145 = vmatprep.subr.mxu0 0.0
    %2146 = vmatpush1.msra.mxu0 0.0
    %2147 = vmatprep.subr.mxu0 0.0
    %2148 = vmatpush1.msra.mxu0 0.0
    %2149 = vmatprep.subr.mxu0 0.0
    %2150 = vmatpush1.msra.mxu0 0.0
    %2151 = vmatprep.subr.mxu0 0.0
    %2152 = vmatpush1.msra.mxu0 0.0
    %2153 = vmatprep.subr.mxu0 0.0
    %2154 = vmatpush1.msra.mxu0 0.0
    %2155 = vmatprep.subr.mxu0 0.0
    %2156 = vmatpush1.msra.mxu0 0.0
    %2157 = vmatprep.subr.mxu0 0.0
    %2158 = vmatpush1.msra.mxu0 0.0
    %2159 = vmatprep.subr.mxu0 0.0
    %2160 = vmatpush1.msra.mxu0 0.0
    %2161 = vmatprep.subr.mxu0 0.0
    %2162 = vmatpush1.msra.mxu0 0.0
    %2163 = vmatprep.subr.mxu0 0.0
    %2164 = vmatpush1.msra.mxu0 0.0
    %2165 = vmatprep.subr.mxu0 0.0
    %2166 = vmatpush1.msra.mxu0 0.0
    %2167 = vmatprep.subr.mxu0 0.0
    %2168 = vmatpush1.msra.mxu0 0.0
    %2169 = vmatprep.subr.mxu0 0.0
    %2170 = vmatpush1.msra.mxu0 0.0
    %2171 = vmatprep.subr.mxu0 0.0
    %2172 = vmatpush1.msra.mxu0 0.0
    %2173 = vmatprep.subr.mxu0 0.0
    %2174 = vmatpush1.msra.mxu0 0.0
    %2175 = vmatprep.subr.mxu0 0.0
    %2176 = vmatpush1.msra.mxu0 0.0
    %2177 = vmatprep.subr.mxu0 0.0
    %2178 = vmatpush1.msra.mxu0 0.0
    %2179 = vmatprep.subr.mxu0 0.0
    %2180 = vmatpush1.msra.mxu0 0.0
    %2181 = vmatprep.subr.mxu0 0.0
    %2182 = vmatpush1.msra.mxu0 0.0
    %2183 = vmatprep.subr.mxu0 0.0
    %2184 = vmatpush1.msra.mxu0 0.0
    %2185 = vmatprep.subr.mxu0 0.0
    %2186 = vmatpush1.msra.mxu0 0.0
    %2187 = vmatprep.subr.mxu0 0.0
    %2188 = vmatpush1.msra.mxu0 0.0
    %2189 = vmatprep.subr.mxu0 0.0
    %2190 = vmatpush1.msra.mxu0 0.0
    %2191 = vmatprep.subr.mxu0 0.0
    %2192 = vmatpush1.msra.mxu0 0.0
    %2193 = vmatprep.subr.mxu0 0.0
    %2194 = vmatpush1.msra.mxu0 0.0
    %2195 = vmatprep.subr.mxu0 0.0
    %2196 = vmatpush1.msra.mxu0 0.0
    %2197 = vmatprep.mubr.f32.mxu0 0.0
    %2198 = vmatmul.mubr.f32.gmra.mrb[0].mxu0 %v2131
    %v2199 = vpop.f32.mrb[0].mxu0
    %v2200 = vadd.f32 %v2125, %v2199
    %v2201 = vpop.f32.mrb[0].mxu0
    %2202 = vdwg.mxu0
    %v2203 = vadd.f32 %v2200, %v593
    %v2204 = vmul.f32 %v2203, 0.5
    %v2205 = vsel %vm182, %v2203, %v2204
    %v2206 = vtanh.pop %v2205
    %v2207 = vmul.f32 %v2206, 0.5
    %v2208 = vadd.f32 %v2207, 0.5
    %v2209 = vsel %vm182, %v2206, %v2208
    %v2210 = vmul.f32 %v2209, %v1952
    %2212 = vrot.lane.b32.xlu0 %v2209, 64
    %v2213 = vpop.permute.xlu0 %2212
    %v2215 = vmul.f32 %v2209, %v2213
    %2217 = vrot.lane.b32.xlu0 %v2215, 32
    %v2218 = vpop.permute.xlu0 %2217
    %v2220 = vadd.f32 %v2210, %v2218
    %v2221 = vtanh.pop %v2220
    %2223 = vrot.lane.b32.xlu0 %v2221, 64
    %v2224 = vpop.permute.xlu0 %2223
    %v2226 = vmul.f32 %v2209, %v2224
    %2227 = vmatprep.subr.mxu0 0.0
    %2228 = vmatpush1.msra.mxu0 %v188
    %2229 = vmatprep.subr.mxu0 0.0
    %2230 = vmatpush1.msra.mxu0 %v189
    %2231 = vmatprep.subr.mxu0 0.0
    %2232 = vmatpush1.msra.mxu0 %v190
    %2233 = vmatprep.subr.mxu0 0.0
    %2234 = vmatpush1.msra.mxu0 %v191
    %2235 = vmatprep.subr.mxu0 0.0
    %2236 = vmatpush1.msra.mxu0 0.0
    %2237 = vmatprep.subr.mxu0 0.0
    %2238 = vmatpush1.msra.mxu0 0.0
    %2239 = vmatprep.subr.mxu0 0.0
    %2240 = vmatpush1.msra.mxu0 0.0
    %2241 = vmatprep.subr.mxu0 0.0
    %2242 = vmatpush1.msra.mxu0 0.0
    %2243 = vmatprep.subr.mxu0 0.0
    %2244 = vmatpush1.msra.mxu0 0.0
    %2245 = vmatprep.subr.mxu0 0.0
    %2246 = vmatpush1.msra.mxu0 0.0
    %2247 = vmatprep.subr.mxu0 0.0
    %2248 = vmatpush1.msra.mxu0 0.0
    %2249 = vmatprep.subr.mxu0 0.0
    %2250 = vmatpush1.msra.mxu0 0.0
    %2251 = vmatprep.subr.mxu0 0.0
    %2252 = vmatpush1.msra.mxu0 0.0
    %2253 = vmatprep.subr.mxu0 0.0
    %2254 = vmatpush1.msra.mxu0 0.0
    %2255 = vmatprep.subr.mxu0 0.0
    %2256 = vmatpush1.msra.mxu0 0.0
    %2257 = vmatprep.subr.mxu0 0.0
    %2258 = vmatpush1.msra.mxu0 0.0
    %2259 = vmatprep.subr.mxu0 0.0
    %2260 = vmatpush1.msra.mxu0 0.0
    %2261 = vmatprep.subr.mxu0 0.0
    %2262 = vmatpush1.msra.mxu0 0.0
    %2263 = vmatprep.subr.mxu0 0.0
    %2264 = vmatpush1.msra.mxu0 0.0
    %2265 = vmatprep.subr.mxu0 0.0
    %2266 = vmatpush1.msra.mxu0 0.0
    %2267 = vmatprep.subr.mxu0 0.0
    %2268 = vmatpush1.msra.mxu0 0.0
    %2269 = vmatprep.subr.mxu0 0.0
    %2270 = vmatpush1.msra.mxu0 0.0
    %2271 = vmatprep.subr.mxu0 0.0
    %2272 = vmatpush1.msra.mxu0 0.0
    %2273 = vmatprep.subr.mxu0 0.0
    %2274 = vmatpush1.msra.mxu0 0.0
    %2275 = vmatprep.subr.mxu0 0.0
    %2276 = vmatpush1.msra.mxu0 0.0
    %2277 = vmatprep.subr.mxu0 0.0
    %2278 = vmatpush1.msra.mxu0 0.0
    %2279 = vmatprep.subr.mxu0 0.0
    %2280 = vmatpush1.msra.mxu0 0.0
    %2281 = vmatprep.subr.mxu0 0.0
    %2282 = vmatpush1.msra.mxu0 0.0
    %2283 = vmatprep.subr.mxu0 0.0
    %2284 = vmatpush1.msra.mxu0 0.0
    %2285 = vmatprep.subr.mxu0 0.0
    %2286 = vmatpush1.msra.mxu0 0.0
    %2287 = vmatprep.subr.mxu0 0.0
    %2288 = vmatpush1.msra.mxu0 0.0
    %2289 = vmatprep.subr.mxu0 0.0
    %2290 = vmatpush1.msra.mxu0 0.0
    %2291 = vmatprep.mubr.f32.mxu0 0.0
    %2292 = vmatmul.mubr.f32.gmra.mrb[0].mxu0 %v2131
    %v2293 = vpop.f32.mrb[0].mxu0
    %v2294 = vadd.f32 0.0, %v2293
    %v2295 = vpop.f32.mrb[0].mxu0
    %2296 = vdwg.mxu0
    %v2297 = vadd.f32 %v343, %v2294
    %v2298 = vmul.f32 %v2297, 0.5
    %v2299 = vsel %vm182, %v2297, %v2298
    %v2300 = vtanh.pop %v2299
    %v2301 = vmul.f32 %v2300, 0.5
    %v2302 = vadd.f32 %v2301, 0.5
    %v2303 = vsel %vm182, %v2300, %v2302
    %v2304 = vmul.f32 %v2303, %v2046
    %2306 = vrot.lane.b32.xlu0 %v2303, 64
    %v2307 = vpop.permute.xlu0 %2306
    %v2309 = vmul.f32 %v2303, %v2307
    %2311 = vrot.lane.b32.xlu0 %v2309, 32
    %v2312 = vpop.permute.xlu0 %2311
    %v2314 = vadd.f32 %v2304, %v2312
    %v2315 = vtanh.pop %v2314
    %2317 = vrot.lane.b32.xlu0 %v2315, 64
    %v2318 = vpop.permute.xlu0 %2317
    %v2320 = vmul.f32 %v2303, %v2318
    %2322 = vrot.lane.b32.xlu0 %v2226, 32
    %v2323 = vpop.permute.xlu0 %2322
    %v2324 = vsel %vm346, %v2323, 0
    %2326 = vmatprep.subr.mxu0 0.0
    %2327 = vmatpush1.msra.mxu0 %v192
    %2328 = vmatprep.subr.mxu0 0.0
    %2329 = vmatpush1.msra.mxu0 %v193
    %2330 = vmatprep.subr.mxu0 0.0
    %2331 = vmatpush1.msra.mxu0 %v194
    %2332 = vmatprep.subr.mxu0 0.0
    %2333 = vmatpush1.msra.mxu0 %v195
    %2334 = vmatprep.subr.mxu0 0.0
    %2335 = vmatpush1.msra.mxu0 0.0
    %2336 = vmatprep.subr.mxu0 0.0
    %2337 = vmatpush1.msra.mxu0 0.0
    %2338 = vmatprep.subr.mxu0 0.0
    %2339 = vmatpush1.msra.mxu0 0.0
    %2340 = vmatprep.subr.mxu0 0.0
    %2341 = vmatpush1.msra.mxu0 0.0
    %2342 = vmatprep.subr.mxu0 0.0
    %2343 = vmatpush1.msra.mxu0 0.0
    %2344 = vmatprep.subr.mxu0 0.0
    %2345 = vmatpush1.msra.mxu0 0.0
    %2346 = vmatprep.subr.mxu0 0.0
    %2347 = vmatpush1.msra.mxu0 0.0
    %2348 = vmatprep.subr.mxu0 0.0
    %2349 = vmatpush1.msra.mxu0 0.0
    %2350 = vmatprep.subr.mxu0 0.0
    %2351 = vmatpush1.msra.mxu0 0.0
    %2352 = vmatprep.subr.mxu0 0.0
    %2353 = vmatpush1.msra.mxu0 0.0
    %2354 = vmatprep.subr.mxu0 0.0
    %2355 = vmatpush1.msra.mxu0 0.0
    %2356 = vmatprep.subr.mxu0 0.0
    %2357 = vmatpush1.msra.mxu0 0.0
    %2358 = vmatprep.subr.mxu0 0.0
    %2359 = vmatpush1.msra.mxu0 0.0
    %2360 = vmatprep.subr.mxu0 0.0
    %2361 = vmatpush1.msra.mxu0 0.0
    %2362 = vmatprep.subr.mxu0 0.0
    %2363 = vmatpush1.msra.mxu0 0.0
    %2364 = vmatprep.subr.mxu0 0.0
    %2365 = vmatpush1.msra.mxu0 0.0
    %2366 = vmatprep.subr.mxu0 0.0
    %2367 = vmatpush1.msra.mxu0 0.0
    %2368 = vmatprep.subr.mxu0 0.0
    %2369 = vmatpush1.msra.mxu0 0.0
    %2370 = vmatprep.subr.mxu0 0.0
    %2371 = vmatpush1.msra.mxu0 0.0
    %2372 = vmatprep.subr.mxu0 0.0
    %2373 = vmatpush1.msra.mxu0 0.0
    %2374 = vmatprep.subr.mxu0 0.0
    %2375 = vmatpush1.msra.mxu0 0.0
    %2376 = vmatprep.subr.mxu0 0.0
    %2377 = vmatpush1.msra.mxu0 0.0
    %2378 = vmatprep.subr.mxu0 0.0
    %2379 = vmatpush1.msra.mxu0 0.0
    %2380 = vmatprep.subr.mxu0 0.0
    %2381 = vmatpush1.msra.mxu0 0.0
    %2382 = vmatprep.subr.mxu0 0.0
    %2383 = vmatpush1.msra.mxu0 0.0
    %2384 = vmatprep.subr.mxu0 0.0
    %2385 = vmatpush1.msra.mxu0 0.0
    %2386 = vmatprep.subr.mxu0 0.0
    %2387 = vmatpush1.msra.mxu0 0.0
    %2388 = vmatprep.subr.mxu0 0.0
    %2389 = vmatpush1.msra.mxu0 0.0
    %2390 = vmatprep.mubr.f32.mxu0 0.0
    %2391 = vmatmul.mubr.f32.gmra.mrb[0].mxu0 %v2324
    %v2392 = vpop.f32.mrb[0].mxu0
    %v2393 = vadd.f32 0.0, %v2392
    %v2394 = vpop.f32.mrb[0].mxu0
    %2395 = vdwg.mxu0
    %2397 = vrot.lane.b32.xlu0 %v2320, 32
    %v2398 = vpop.permute.xlu0 %2397
    %v2399 = vsel %vm346, %v2398, 0
    %2401 = vmatprep.subr.mxu0 0.0
    %2402 = vmatpush1.msra.mxu0 %v184
    %2403 = vmatprep.subr.mxu0 0.0
    %2404 = vmatpush1.msra.mxu0 %v185
    %2405 = vmatprep.subr.mxu0 0.0
    %2406 = vmatpush1.msra.mxu0 %v186
    %2407 = vmatprep.subr.mxu0 0.0
    %2408 = vmatpush1.msra.mxu0 %v187
    %2409 = vmatprep.subr.mxu0 0.0
    %2410 = vmatpush1.msra.mxu0 0.0
    %2411 = vmatprep.subr.mxu0 0.0
    %2412 = vmatpush1.msra.mxu0 0.0
    %2413 = vmatprep.subr.mxu0 0.0
    %2414 = vmatpush1.msra.mxu0 0.0
    %2415 = vmatprep.subr.mxu0 0.0
    %2416 = vmatpush1.msra.mxu0 0.0
    %2417 = vmatprep.subr.mxu0 0.0
    %2418 = vmatpush1.msra.mxu0 0.0
    %2419 = vmatprep.subr.mxu0 0.0
    %2420 = vmatpush1.msra.mxu0 0.0
    %2421 = vmatprep.subr.mxu0 0.0
    %2422 = vmatpush1.msra.mxu0 0.0
    %2423 = vmatprep.subr.mxu0 0.0
    %2424 = vmatpush1.msra.mxu0 0.0
    %2425 = vmatprep.subr.mxu0 0.0
    %2426 = vmatpush1.msra.mxu0 0.0
    %2427 = vmatprep.subr.mxu0 0.0
    %2428 = vmatpush1.msra.mxu0 0.0
    %2429 = vmatprep.subr.mxu0 0.0
    %2430 = vmatpush1.msra.mxu0 0.0
    %2431 = vmatprep.subr.mxu0 0.0
    %2432 = vmatpush1.msra.mxu0 0.0
    %2433 = vmatprep.subr.mxu0 0.0
    %2434 = vmatpush1.msra.mxu0 0.0
    %2435 = vmatprep.subr.mxu0 0.0
    %2436 = vmatpush1.msra.mxu0 0.0
    %2437 = vmatprep.subr.mxu0 0.0
    %2438 = vmatpush1.msra.mxu0 0.0
    %2439 = vmatprep.subr.mxu0 0.0
    %2440 = vmatpush1.msra.mxu0 0.0
    %2441 = vmatprep.subr.mxu0 0.0
    %2442 = vmatpush1.msra.mxu0 0.0
    %2443 = vmatprep.subr.mxu0 0.0
    %2444 = vmatpush1.msra.mxu0 0.0
    %2445 = vmatprep.subr.mxu0 0.0
    %2446 = vmatpush1.msra.mxu0 0.0
    %2447 = vmatprep.subr.mxu0 0.0
    %2448 = vmatpush1.msra.mxu0 0.0
    %2449 = vmatprep.subr.mxu0 0.0
    %2450 = vmatpush1.msra.mxu0 0.0
    %2451 = vmatprep.subr.mxu0 0.0
    %2452 = vmatpush1.msra.mxu0 0.0
    %2453 = vmatprep.subr.mxu0 0.0
    %2454 = vmatpush1.msra.mxu0 0.0
    %2455 = vmatprep.subr.mxu0 0.0
    %2456 = vmatpush1.msra.mxu0 0.0
    %2457 = vmatprep.subr.mxu0 0.0
    %2458 = vmatpush1.msra.mxu0 0.0
    %2459 = vmatprep.subr.mxu0 0.0
    %2460 = vmatpush1.msra.mxu0 0.0
    %2461 = vmatprep.subr.mxu0 0.0
    %2462 = vmatpush1.msra.mxu0 0.0
    %2463 = vmatprep.subr.mxu0 0.0
    %2464 = vmatpush1.msra.mxu0 0.0
    %2465 = vmatprep.mubr.f32.mxu0 0.0
    %2466 = vmatmul.mubr.f32.gmra.mrb[0].mxu0 %v2399
    %v2467 = vpop.f32.mrb[0].mxu0
    %v2468 = vadd.f32 %v2393, %v2467
    %v2469 = vpop.f32.mrb[0].mxu0
    %2470 = vdwg.mxu0
    %v2471 = vadd.f32 %v2468, %v593
    %v2472 = vmul.f32 %v2471, 0.5
    %v2473 = vsel %vm182, %v2471, %v2472
    %v2474 = vtanh.pop %v2473
    %v2475 = vmul.f32 %v2474, 0.5
    %v2476 = vadd.f32 %v2475, 0.5
    %v2477 = vsel %vm182, %v2474, %v2476
    %v2478 = vmul.f32 %v2477, %v2220
    %2480 = vrot.lane.b32.xlu0 %v2477, 64
    %v2481 = vpop.permute.xlu0 %2480
    %v2483 = vmul.f32 %v2477, %v2481
    %2485 = vrot.lane.b32.xlu0 %v2483, 32
    %v2486 = vpop.permute.xlu0 %2485
    %v2488 = vadd.f32 %v2478, %v2486
    %v2489 = vtanh.pop %v2488
    %2491 = vrot.lane.b32.xlu0 %v2489, 64
    %v2492 = vpop.permute.xlu0 %2491
    %v2494 = vmul.f32 %v2477, %v2492
    %v2495 = vld [vmem:[#allocation14] sm:$0xff]
    %v2496 = vld [vmem:[#allocation14 + $0x8] sm:$0xff]
    %v2497 = vld [vmem:[#allocation14 + $0x10] sm:$0xff]
    %v2498 = vld [vmem:[#allocation14 + $0x18] sm:$0xff]
    %v2499 = vld [vmem:[#allocation16] sm:$0x1]
    %v2501 = vlaneseq
    %v2502 = vshrl.u32 %v2501, 7
    %v2503 = vsub.s32 0, %v2502
    %v2504 = vrot.slane %v2499, %v2503
    %2507 = vrot.lane.b32.xlu0 %v2494, 32
    %v2508 = vpop.permute.xlu0 %2507
    %v2509 = vsel %vm346, %v2508, 0
    %2511 = vmatprep.subr.mxu0 0.0
    %2512 = vmatpush1.msra.mxu0 %v2495
    %2513 = vmatprep.subr.mxu0 0.0
    %2514 = vmatpush1.msra.mxu0 %v2496
    %2515 = vmatprep.subr.mxu0 0.0
    %2516 = vmatpush1.msra.mxu0 %v2497
    %2517 = vmatprep.subr.mxu0 0.0
    %2518 = vmatpush1.msra.mxu0 %v2498
    %2519 = vmatprep.subr.mxu0 0.0
    %2520 = vmatpush1.msra.mxu0 0.0
    %2521 = vmatprep.subr.mxu0 0.0
    %2522 = vmatpush1.msra.mxu0 0.0
    %2523 = vmatprep.subr.mxu0 0.0
    %2524 = vmatpush1.msra.mxu0 0.0
    %2525 = vmatprep.subr.mxu0 0.0
    %2526 = vmatpush1.msra.mxu0 0.0
    %2527 = vmatprep.subr.mxu0 0.0
    %2528 = vmatpush1.msra.mxu0 0.0
    %2529 = vmatprep.subr.mxu0 0.0
    %2530 = vmatpush1.msra.mxu0 0.0
    %2531 = vmatprep.subr.mxu0 0.0
    %2532 = vmatpush1.msra.mxu0 0.0
    %2533 = vmatprep.subr.mxu0 0.0
    %2534 = vmatpush1.msra.mxu0 0.0
    %2535 = vmatprep.subr.mxu0 0.0
    %2536 = vmatpush1.msra.mxu0 0.0
    %2537 = vmatprep.subr.mxu0 0.0
    %2538 = vmatpush1.msra.mxu0 0.0
    %2539 = vmatprep.subr.mxu0 0.0
    %2540 = vmatpush1.msra.mxu0 0.0
    %2541 = vmatprep.subr.mxu0 0.0
    %2542 = vmatpush1.msra.mxu0 0.0
    %2543 = vmatprep.subr.mxu0 0.0
    %2544 = vmatpush1.msra.mxu0 0.0
    %2545 = vmatprep.subr.mxu0 0.0
    %2546 = vmatpush1.msra.mxu0 0.0
    %2547 = vmatprep.subr.mxu0 0.0
    %2548 = vmatpush1.msra.mxu0 0.0
    %2549 = vmatprep.subr.mxu0 0.0
    %2550 = vmatpush1.msra.mxu0 0.0
    %2551 = vmatprep.subr.mxu0 0.0
    %2552 = vmatpush1.msra.mxu0 0.0
    %2553 = vmatprep.subr.mxu0 0.0
    %2554 = vmatpush1.msra.mxu0 0.0
    %2555 = vmatprep.subr.mxu0 0.0
    %2556 = vmatpush1.msra.mxu0 0.0
    %2557 = vmatprep.subr.mxu0 0.0
    %2558 = vmatpush1.msra.mxu0 0.0
    %2559 = vmatprep.subr.mxu0 0.0
    %2560 = vmatpush1.msra.mxu0 0.0
    %2561 = vmatprep.subr.mxu0 0.0
    %2562 = vmatpush1.msra.mxu0 0.0
    %2563 = vmatprep.subr.mxu0 0.0
    %2564 = vmatpush1.msra.mxu0 0.0
    %2565 = vmatprep.subr.mxu0 0.0
    %2566 = vmatpush1.msra.mxu0 0.0
    %2567 = vmatprep.subr.mxu0 0.0
    %2568 = vmatpush1.msra.mxu0 0.0
    %2569 = vmatprep.subr.mxu0 0.0
    %2570 = vmatpush1.msra.mxu0 0.0
    %2571 = vmatprep.subr.mxu0 0.0
    %2572 = vmatpush1.msra.mxu0 0.0
    %2573 = vmatprep.subr.mxu0 0.0
    %2574 = vmatpush1.msra.mxu0 0.0
    %2575 = vmatprep.mubr.f32.mxu0 0.0
    %2576 = vmatmul.mubr.f32.gmra.mrb[0].mxu0 %v2509
    %v2577 = vpop.f32.mrb[0].mxu0
    %v2578 = vadd.f32 %v2504, %v2577
    %v2579 = vpop.f32.mrb[0].mxu0
    %2580 = vdwg.mxu0
    %v2581 = vmax.f32 %v2578, 0.0
    %v2582 = vld [vmem:[#allocation17] sm:$0xff]
    %v2583 = vld [vmem:[#allocation17 + $0x8] sm:$0xff]
    %v2584 = vld [vmem:[#allocation17 + $0x10] sm:$0xff]
    %v2585 = vld [vmem:[#allocation17 + $0x18] sm:$0xff]
    %v2586 = vld [vmem:[#allocation17 + $0x20] sm:$0xff]
    %v2587 = vld [vmem:[#allocation17 + $0x28] sm:$0xff]
    %v2588 = vld [vmem:[#allocation17 + $0x30] sm:$0xff]
    %v2589 = vld [vmem:[#allocation17 + $0x38] sm:$0xff]
    %v2590 = vld [vmem:[#allocation19] sm:$0x1]
    %v2592 = vlaneseq
    %v2593 = vshrl.u32 %v2592, 7
    %v2594 = vsub.s32 0, %v2593
    %v2595 = vrot.slane %v2590, %v2594
    %vm2597 = vcmask 523264
    %v2599 = vsel %vm2597, %v2581, 0
    %2601 = vmatprep.subr.mxu0 0.0
    %2602 = vmatpush1.msra.mxu0 %v2582
    %2603 = vmatprep.subr.mxu0 0.0
    %2604 = vmatpush1.msra.mxu0 %v2583
    %2605 = vmatprep.subr.mxu0 0.0
    %2606 = vmatpush1.msra.mxu0 %v2584
    %2607 = vmatprep.subr.mxu0 0.0
    %2608 = vmatpush1.msra.mxu0 %v2585
    %2609 = vmatprep.subr.mxu0 0.0
    %2610 = vmatpush1.msra.mxu0 %v2586
    %2611 = vmatprep.subr.mxu0 0.0
    %2612 = vmatpush1.msra.mxu0 %v2587
    %2613 = vmatprep.subr.mxu0 0.0
    %2614 = vmatpush1.msra.mxu0 %v2588
    %2615 = vmatprep.subr.mxu0 0.0
    %2616 = vmatpush1.msra.mxu0 %v2589
    %2617 = vmatprep.subr.mxu0 0.0
    %2618 = vmatpush1.msra.mxu0 0.0
    %2619 = vmatprep.subr.mxu0 0.0
    %2620 = vmatpush1.msra.mxu0 0.0
    %2621 = vmatprep.subr.mxu0 0.0
    %2622 = vmatpush1.msra.mxu0 0.0
    %2623 = vmatprep.subr.mxu0 0.0
    %2624 = vmatpush1.msra.mxu0 0.0
    %2625 = vmatprep.subr.mxu0 0.0
    %2626 = vmatpush1.msra.mxu0 0.0
    %2627 = vmatprep.subr.mxu0 0.0
    %2628 = vmatpush1.msra.mxu0 0.0
    %2629 = vmatprep.subr.mxu0 0.0
    %2630 = vmatpush1.msra.mxu0 0.0
    %2631 = vmatprep.subr.mxu0 0.0
    %2632 = vmatpush1.msra.mxu0 0.0
    %2633 = vmatprep.subr.mxu0 0.0
    %2634 = vmatpush1.msra.mxu0 0.0
    %2635 = vmatprep.subr.mxu0 0.0
    %2636 = vmatpush1.msra.mxu0 0.0
    %2637 = vmatprep.subr.mxu0 0.0
    %2638 = vmatpush1.msra.mxu0 0.0
    %2639 = vmatprep.subr.mxu0 0.0
    %2640 = vmatpush1.msra.mxu0 0.0
    %2641 = vmatprep.subr.mxu0 0.0
    %2642 = vmatpush1.msra.mxu0 0.0
    %2643 = vmatprep.subr.mxu0 0.0
    %2644 = vmatpush1.msra.mxu0 0.0
    %2645 = vmatprep.subr.mxu0 0.0
    %2646 = vmatpush1.msra.mxu0 0.0
    %2647 = vmatprep.subr.mxu0 0.0
    %2648 = vmatpush1.msra.mxu0 0.0
    %2649 = vmatprep.subr.mxu0 0.0
    %2650 = vmatpush1.msra.mxu0 0.0
    %2651 = vmatprep.subr.mxu0 0.0
    %2652 = vmatpush1.msra.mxu0 0.0
    %2653 = vmatprep.subr.mxu0 0.0
    %2654 = vmatpush1.msra.mxu0 0.0
    %2655 = vmatprep.subr.mxu0 0.0
    %2656 = vmatpush1.msra.mxu0 0.0
    %2657 = vmatprep.subr.mxu0 0.0
    %2658 = vmatpush1.msra.mxu0 0.0
    %2659 = vmatprep.subr.mxu0 0.0
    %2660 = vmatpush1.msra.mxu0 0.0
    %2661 = vmatprep.subr.mxu0 0.0
    %2662 = vmatpush1.msra.mxu0 0.0
    %2663 = vmatprep.subr.mxu0 0.0
    %2664 = vmatpush1.msra.mxu0 0.0
    %2665 = vmatprep.mubr.f32.mxu0 0.0
    %2666 = vmatmul.mubr.f32.gmra.mrb[0].mxu0 %v2599
    %v2667 = vpop.f32.mrb[0].mxu0
    %v2668 = vadd.f32 %v2595, %v2667
    %v2669 = vpop.f32.mrb[0].mxu0
    %2670 = vdwg.mxu0
    %2671 = vst [vmem:[#allocation20] sm:$0xff] %v2668
    // Predicated region
    $region90: #{net_forward.1} parent=1 // pred_check
      _
    $region91: #{net_forward.1} parent=1 // pred_check_branch
      %2673 = sbr.rel (0) target = $region93
    $region92: #{net_forward.1} parent=1 // pred_region
      %s2675 = ssub.s32 128, 128
      %2676 = vsyncadd [#allocation4], %s2675
      %s2678 = sshll.u32 [#allocation20], 4
      %s2679 = int_to_ptr.vmem [resolvable:$true] %s2678
      %2681 = dma.vmem_to_hbm [thread:$0]  %s2679, 128, %s11, [#allocation4]
    $region93: #{net_forward.1} parent=1 // pred_fallthru
      _
    // Predicated region
    $region94: #{net_forward.1} parent=1 // pred_check
      _
    $region95: #{net_forward.1} parent=1 // pred_check_branch
      %2683 = sbr.rel (0) target = $region97
    $region96: #{net_forward.1} parent=1 // pred_region
      %2684 = dma.done [#allocation4], 128
    $region97: #{net_forward.1} parent=1 // pred_fallthru
      _
    %2685 = vsyncpa [#allocation3], 1
    %2686 = vsyncpa [#allocation6], 1
    %2687 = vsyncpa [#allocation9], 1
    %2688 = vsyncpa [#allocation12], 1
    %2689 = vsyncpa [#allocation15], 1
    %2690 = vsyncpa [#allocation18], 1
    %2691 = vsyncpa [#allocation4], 1

</llo_original>
